<compile_context>
chip_gen: v7x
topology: tpu7x:2x2x1
jax: 0.10.0
libtpu: 0.0.40
codegen_flags: <defaults>
</compile_context>

<pallas_src>
import functools
import math

import jax
import jax.numpy as jnp
from jax.experimental import pallas as pl
from jax.experimental.pallas import tpu as pltpu

# ---- module hyper-parameters (net_type contains both 'sa' and 'ca') --------
NUM_BLOCKS = 2      # num_transformer_blocks
NUM_HEADS = 1       # num_heads
USE_SA = True       # 'sa' in net_type
USE_CA = True       # 'ca' in net_type
LN_EPS = 1e-5       # torch.nn.LayerNorm default
# MXU operand dtype: bf16 halves operand bytes / vreg footprint and hits the
# MXU bf16 peak on v5e/v6e/v7x; accumulation stays f32 via
# preferred_element_type.  Set to jnp.float32 for exact-parity debugging.
DOT_DTYPE = jnp.bfloat16


# ---------------- shared math (used inside the kernel AND as reference) -----
def _dot(a, w):
    """[R, K] activation (any float) x pre-cast bf16 weight -> f32."""
    return jnp.dot(a.astype(DOT_DTYPE), w, preferred_element_type=jnp.float32)


def _layer_norm(y, g, b):
    mu = jnp.mean(y, axis=-1, keepdims=True)
    var = jnp.mean(jnp.square(y - mu), axis=-1, keepdims=True)
    return (y - mu) * jax.lax.rsqrt(var + LN_EPS) * g + b


def _softmax(s, approx_recip):
    m = jnp.max(s, axis=-1, keepdims=True)
    p = jnp.exp(s - m)
    denom = jnp.sum(p, axis=-1, keepdims=True)
    if approx_recip:
        # EUP reciprocal: separate VLIW slot, frees VALU (kernel path only).
        return p * pl.reciprocal(denom, approx=True)
    return p / denom


def _gelu(x):
    # TODO(synk): PyTorch 'gelu' activation uses the exact erf form; we use the
    # tanh approximation for robust Mosaic lowering (differs at ~1e-3 level).
    c = math.sqrt(2.0 / math.pi)
    return 0.5 * x * (1.0 + jnp.tanh(c * (x + 0.044715 * x * x * x)))


def _attention(q3, k3, v3, num_heads, approx_recip):
    """q3,k3,v3: [BB, T, D] f32; batched einsum over the batch (no python loop).

    The 1/sqrt(dh) scale is already folded into the Q projection weights.
    """
    BB, T, D = q3.shape
    if num_heads == 1:
        s = jnp.einsum('bqd,bkd->bqk', q3.astype(DOT_DTYPE), k3.astype(DOT_DTYPE),
                       preferred_element_type=jnp.float32)
        p = _softmax(s, approx_recip)
        return jnp.einsum('bqk,bkd->bqd', p.astype(DOT_DTYPE), v3.astype(DOT_DTYPE),
                          preferred_element_type=jnp.float32)
    # num_heads > 1: batched head contraction — no per-head lane slices/concat.
    dh = D // num_heads
    q4 = q3.reshape(BB, T, num_heads, dh)
    k4 = k3.reshape(BB, T, num_heads, dh)
    v4 = v3.reshape(BB, T, num_heads, dh)
    s = jnp.einsum('bqhd,bkhd->bhqk', q4.astype(DOT_DTYPE), k4.astype(DOT_DTYPE),
                   preferred_element_type=jnp.float32)
    p = _softmax(s, approx_recip)
    o4 = jnp.einsum('bhqk,bkhd->bqhd', p.astype(DOT_DTYPE), v4.astype(DOT_DTYPE),
                    preferred_element_type=jnp.float32)
    return o4.reshape(BB, T, D)


# ------------- packing of the small f32 parameters into one array -----------
def _pack_small(d, pad_w):
    """Pack dict of small f32 arrays into one lane-dense [rows, pad_w] array.

    Returns (packed, layout) where layout[name] = (row_start, original_shape)
    and the last dim of each item is zero-padded to pad_w lanes.
    """
    layout = {}
    rows = []
    r = 0
    for name, arr in d.items():
        arr = jnp.asarray(arr, jnp.float32)
        a2 = arr.reshape(-1, arr.shape[-1])
        layout[name] = (r, tuple(arr.shape))
        rows.append(jnp.pad(a2, ((0, 0), (0, pad_w - a2.shape[1]))))
        r += a2.shape[0]
    packed = jnp.concatenate(rows, axis=0)
    pad_r = (-packed.shape[0]) % 8                     # f32 sublane multiple
    if pad_r:
        packed = jnp.pad(packed, ((0, pad_r), (0, 0)))
    return packed, layout


def _unpack_small(sp, layout):
    """Static slices of the loaded packed array -> dict of original shapes."""
    out = {}
    for name, (r0, shape) in layout.items():
        nrows = 1
        for s in shape[:-1]:
            nrows *= s
        out[name] = sp[r0:r0 + nrows, :shape[-1]].reshape(shape)
    return out


# ---------------------------- whole-batch forward ----------------------------
def _forward_batch(x, temb, cond, small, layout,
                   w_qkv_sa, w_o_sa, w_q_ca, w_kv_ca, w_o_ca, fw1, fw2, w_out,
                   *, approx_recip):
    """Whole-batch-block forward.  x/cond: [BB,T,D], temb: [BB,1,D].

    All linear projections run on B-folded rows [BB*T, D]; attention is a
    batched einsum over BB.  Weights are bf16 (f32 accumulation); small
    params come from the packed f32 array.  Returns lane-padded [BB*T, CPAD].
    """
    BB, T, D = x.shape
    R = BB * T
    p = _unpack_small(small, layout)

    emb32 = (temb + cond).astype(jnp.float32).reshape(R, D)   # time_emb.unsqueeze(1)+cond
    emb_lp = emb32.astype(DOT_DTYPE)          # hoisted bf16 cast, reused every block
    h = (x + p["pe"]).astype(jnp.float32).reshape(R, D)       # PositionalEncoding (dropout=0)

    for blk in range(NUM_BLOCKS):
        if USE_SA:
            y = _layer_norm(h, p["ln_g"][blk, 0], p["ln_b"][blk, 0])
            qkv = _dot(y, w_qkv_sa[blk]) + p["b_qkv_sa"][blk]  # fused QKV: one MXU push
            q, k, v = qkv[:, :D], qkv[:, D:2 * D], qkv[:, 2 * D:]
            o = _attention(q.reshape(BB, T, D), k.reshape(BB, T, D),
                           v.reshape(BB, T, D), NUM_HEADS, approx_recip).reshape(R, D)
            h = h + _dot(o, w_o_sa[blk]) + p["b_o_sa"][blk]
        if USE_CA:
            y = _layer_norm(h, p["ln_g"][blk, 1], p["ln_b"][blk, 1])
            q = _dot(y, w_q_ca[blk]) + p["b_q_ca"][blk]
            kv = jnp.dot(emb_lp, w_kv_ca[blk],                 # fused KV: one MXU push
                         preferred_element_type=jnp.float32) + p["b_kv_ca"][blk]
            k, v = kv[:, :D], kv[:, D:]
            o = _attention(q.reshape(BB, T, D), k.reshape(BB, T, D),
                           v.reshape(BB, T, D), NUM_HEADS, approx_recip).reshape(R, D)
            h = h + _dot(o, w_o_ca[blk]) + p["b_o_ca"][blk]
        y = _layer_norm(h, p["ln_g"][blk, 2], p["ln_b"][blk, 2])
        ff = _gelu(_dot(y, fw1[blk]) + p["fb1"][blk])
        h = h + _dot(ff, fw2[blk]) + p["fb2"][blk]

    h = h.astype(x.dtype)                                      # h.type(x.dtype)
    y = _layer_norm(h.astype(jnp.float32), p["lnf"][0], p["lnf"][1])
    return _dot(y, w_out) + p["b_out"]                         # [R, CPAD] lane-dense


# ------------------------------- Pallas kernel -------------------------------
def _transformer_kernel(x_ref, temb_ref, cond_ref, small_ref,
                        w_qkv_sa_ref, w_o_sa_ref, w_q_ca_ref, w_kv_ca_ref,
                        w_o_ca_ref, fw1_ref, fw2_ref, w_out_ref,
                        out_ref, *, layout):
    out = _forward_batch(
        x_ref[...], temb_ref[...], cond_ref[...], small_ref[...], layout,
        w_qkv_sa_ref[...], w_o_sa_ref[...], w_q_ca_ref[...], w_kv_ca_ref[...],
        w_o_ca_ref[...], fw1_ref[...], fw2_ref[...], w_out_ref[...],
        approx_recip=True)
    out_ref[...] = out.astype(out_ref.dtype)


_BIG_KEYS = ("w_qkv_sa", "w_o_sa", "w_q_ca", "w_kv_ca", "w_o_ca",
             "fw1", "fw2", "w_out")


def prepare_params(params, T):
    """One-time static transforms: scale folding, bf16 cast, lane padding, packing."""
    D = params["w_qkv_sa"].shape[1]
    C = params["w_out"].shape[-1]
    cpad = 128 * pl.cdiv(C, 128)
    scale = 1.0 / math.sqrt(D // NUM_HEADS)

    # Fold the 1/sqrt(dh) attention scale into the Q weights/biases.
    w_qkv_sa = params["w_qkv_sa"].at[:, :, :D].multiply(scale)
    b_qkv_sa = params["b_qkv_sa"].at[:, :D].multiply(scale)
    w_q_ca = params["w_q_ca"] * scale
    b_q_ca = params["b_q_ca"] * scale

    # Pad the final projection to a 128-wide lane-dense output (sliced outside).
    w_out_pad = jnp.zeros((D, cpad), jnp.float32).at[:, :C].set(params["w_out"])
    b_out_pad = jnp.zeros((1, cpad), jnp.float32).at[:, :C].set(
        params["b_out"].reshape(1, C))

    # Big matmul weights -> bf16 once (halved DMA bytes / VMEM residency).
    big = dict(
        w_qkv_sa=w_qkv_sa, w_o_sa=params["w_o_sa"], w_q_ca=w_q_ca,
        w_kv_ca=params["w_kv_ca"], w_o_ca=params["w_o_ca"],
        fw1=params["fw1"], fw2=params["fw2"], w_out=w_out_pad)
    big = {k: jnp.asarray(v, jnp.float32).astype(DOT_DTYPE) for k, v in big.items()}

    # Pack every small f32 parameter (+ the PE slice) into ONE array / ONE DMA.
    small_dict = dict(
        pe=params["pe"][:T],
        ln_g=params["ln_g"], ln_b=params["ln_b"],
        b_qkv_sa=b_qkv_sa, b_o_sa=params["b_o_sa"],
        b_q_ca=b_q_ca, b_kv_ca=params["b_kv_ca"], b_o_ca=params["b_o_ca"],
        fb1=params["fb1"], fb2=params["fb2"],
        lnf=params["lnf"], b_out=b_out_pad)
    pad_w = 128 * pl.cdiv(max(a.shape[-1] for a in small_dict.values()), 128)
    small, layout = _pack_small(small_dict, pad_w)
    return big, small, layout, cpad


def transformer_forward(x, time_emb, cond, params, *, batch_block=None,
                        out_dtype=jnp.float32):
    """Pallas forward.  Returns [B, T*C] (same as the PyTorch .view(B, -1)).

    batch_block: rows per grid step (default: whole batch in one step).  On
    v7x only pass B//2 when (B//2)*T >= ~256 rows per core; otherwise the
    2-TC split just adds grid-step overhead and halves MXU fill.
    """
    B, T, D = x.shape
    C = params["w_out"].shape[-1]
    BB = B if batch_block is None else batch_block
    assert B % BB == 0 and (BB * T) % 8 == 0
    temb3 = time_emb.reshape(B, 1, D)
    big, small, layout, cpad = prepare_params(params, T)

    def _full(a):
        # Grid-invariant (weights / packed params): single tile = whole array.
        # TODO(synk): mark these pipeline_mode=pl.Buffered(1) once single-
        # buffering of grid-invariant inputs is available in the installed
        # JAX; with the default 1-step grid here it is a no-op anyway.
        nd = a.ndim
        return pl.BlockSpec(a.shape, lambda b, nd=nd: (0,) * nd)

    weight_list = [big[k] for k in _BIG_KEYS]
    # TODO(synk): at real MDM sizes (D~512, more blocks) stream one block's
    # weights at a time (grid axis over NUM_BLOCKS, or memory_space=pl.ANY +
    # manual double-buffered DMA) instead of keeping all blocks resident —
    # required on v7x (64 MiB VMEM) and v5e (16 MiB default scoped limit).
    in_specs = [
        pl.BlockSpec((BB, T, D), lambda b: (b, 0, 0)),   # x
        pl.BlockSpec((BB, 1, D), lambda b: (b, 0, 0)),   # time_emb [B,1,D]
        pl.BlockSpec((BB, T, D), lambda b: (b, 0, 0)),   # cond
        _full(small),                                    # packed small params
    ] + [_full(w) for w in weight_list]                  # bf16 weights
    out_spec = pl.BlockSpec((BB * T, cpad), lambda b: (b, 0))   # lane-dense stores

    kernel = functools.partial(_transformer_kernel, layout=layout)

    out_pad = pl.pallas_call(
        kernel,
        grid=(B // BB,),
        in_specs=in_specs,
        out_specs=out_spec,
        out_shape=jax.ShapeDtypeStruct((B * T, cpad), out_dtype),
        compiler_params=pltpu.CompilerParams(
            dimension_semantics=("parallel",),
            vmem_limit_bytes=48 * 1024 * 1024,
        ),
    )(x, temb3, cond, small, *weight_list)

    return out_pad[:, :C].astype(jnp.float32).reshape(B, T * C)


def reference_forward(x, time_emb, cond, params):
    """Pure-JAX reference of the same math (exact softmax reciprocal)."""
    B, T, D = x.shape
    C = params["w_out"].shape[-1]
    big, small, layout, _ = prepare_params(params, T)
    out_pad = _forward_batch(
        x, time_emb.reshape(B, 1, D), cond, small, layout,
        *[big[k] for k in _BIG_KEYS],
        approx_recip=False)
    return out_pad[:, :C].reshape(B, T * C)


# ------------------------------ parameter init --------------------------------
def init_params(key, D, C, T_max, nb=NUM_BLOCKS, zero_out=True):
    ks = jax.random.split(key, 14)
    s = 0.02
    n = jax.random.normal
    p = dict(
        w_qkv_sa=s * n(ks[0], (nb, D, 3 * D), jnp.float32),   # fused Q|K|V (self-attn)
        b_qkv_sa=s * n(ks[1], (nb, 3 * D), jnp.float32),
        w_o_sa=s * n(ks[2], (nb, D, D), jnp.float32),
        b_o_sa=s * n(ks[3], (nb, D), jnp.float32),
        w_q_ca=s * n(ks[4], (nb, D, D), jnp.float32),
        b_q_ca=s * n(ks[5], (nb, D), jnp.float32),
        w_kv_ca=s * n(ks[6], (nb, D, 2 * D), jnp.float32),    # fused K|V (cross-attn)
        b_kv_ca=s * n(ks[7], (nb, 2 * D), jnp.float32),
        w_o_ca=s * n(ks[8], (nb, D, D), jnp.float32),
        b_o_ca=s * n(ks[9], (nb, D), jnp.float32),
        fw1=s * n(ks[10], (nb, D, 2 * D), jnp.float32),       # ff_size = 2*D
        fb1=s * n(ks[11], (nb, 2 * D), jnp.float32),
        fw2=s * n(ks[12], (nb, 2 * D, D), jnp.float32),
        fb2=s * n(ks[13], (nb, D), jnp.float32),
        ln_g=jnp.ones((nb, 3, D), jnp.float32),               # (sa, ca, ff) LayerNorms
        ln_b=jnp.zeros((nb, 3, D), jnp.float32),
        lnf=jnp.stack([jnp.ones((D,), jnp.float32), jnp.zeros((D,), jnp.float32)]),
    )
    # zero_module(linear(D, C)) -> zero-initialized in the real module; use
    # zero_out=False for a non-trivial numerical check.
    if zero_out:
        p["w_out"] = jnp.zeros((D, C), jnp.float32)
        p["b_out"] = jnp.zeros((1, C), jnp.float32)
    else:
        kw, kb = jax.random.split(jax.random.fold_in(key, 99))
        p["w_out"] = s * n(kw, (D, C), jnp.float32)
        p["b_out"] = s * n(kb, (1, C), jnp.float32)
    # sinusoidal positional encoding table
    pos = jnp.arange(T_max, dtype=jnp.float32)[:, None]
    div = jnp.exp(jnp.arange(0, D, 2, dtype=jnp.float32) * (-math.log(10000.0) / D))
    pe = jnp.zeros((T_max, D), jnp.float32)
    pe = pe.at[:, 0::2].set(jnp.sin(pos * div))
    pe = pe.at[:, 1::2].set(jnp.cos(pos * div))
    p["pe"] = pe
    return p


# ----------------------------------- main --------------------------------------
if __name__ == "__main__":
    B, T, D, C = 2, 8, 32, 4   # batch, seq, time_embed_dim, out_channels
    key = jax.random.PRNGKey(0)
    kx, kt, kc, kp = jax.random.split(key, 4)
    x = jax.random.normal(kx, (B, T, D), jnp.float32)
    time_emb = jax.random.normal(kt, (B, D), jnp.float32)
    cond = jax.random.normal(kc, (B, T, D), jnp.float32)
    # zero_out=False: the real module zero-initializes the output projection,
    # which would make the numerical check trivially pass.
    params = init_params(kp, D, C, T_max=64, zero_out=False)

    out = transformer_forward(x, time_emb, cond, params)
    out = jax.block_until_ready(out)
    assert out.shape == (B, T * C)
    assert bool(jnp.all(jnp.isfinite(out)))

    # pure-JAX reference of the same math (kernel differs only by the EUP
    # approximate reciprocal in softmax -> sub-1e-3 deviation).
    ref = reference_forward(x, time_emb, cond, params)
    err = float(jnp.max(jnp.abs(out - ref)))
    assert jnp.allclose(out, ref, atol=1e-3), f"output mismatch, max abs err {err}"

    print("KERNEL_OK")
</pallas_src>

<mosaic_0001>
module attributes {stable_mosaic.version = 11 : i64} {
  func.func @_transformer_kernel(%arg0: i32, %arg1: memref<2x8x32xf32, #tpu.memory_space<vmem>>, %arg2: memref<2x1x32xf32, #tpu.memory_space<vmem>>, %arg3: memref<2x8x32xf32, #tpu.memory_space<vmem>>, %arg4: memref<40x128xf32, #tpu.memory_space<vmem>>, %arg5: memref<2x32x96xbf16, #tpu.memory_space<vmem>>, %arg6: memref<2x32x32xbf16, #tpu.memory_space<vmem>>, %arg7: memref<2x32x32xbf16, #tpu.memory_space<vmem>>, %arg8: memref<2x32x64xbf16, #tpu.memory_space<vmem>>, %arg9: memref<2x32x32xbf16, #tpu.memory_space<vmem>>, %arg10: memref<2x32x64xbf16, #tpu.memory_space<vmem>>, %arg11: memref<2x64x32xbf16, #tpu.memory_space<vmem>>, %arg12: memref<32x128xbf16, #tpu.memory_space<vmem>>, %arg13: memref<16x128xf32, #tpu.memory_space<vmem>>) attributes {dimension_semantics = [#tpu.dimension_semantics<parallel>], iteration_bounds = array<i64: 1>, scalar_prefetch = 0 : i64, scratch_operands = 0 : i64, tpu.core_type = #tpu.core_type<tc>, window_params = [{transform_indices = @transform_0, window_bounds = array<i64: 2, 8, 32>}, {transform_indices = @transform_1, window_bounds = array<i64: 2, 1, 32>}, {transform_indices = @transform_2, window_bounds = array<i64: 2, 8, 32>}, {pipeline_mode = #tpu.pipeline_mode<synchronous>, transform_indices = @transform_3, window_bounds = array<i64: 40, 128>}, {pipeline_mode = #tpu.pipeline_mode<synchronous>, transform_indices = @transform_4, window_bounds = array<i64: 2, 32, 96>}, {pipeline_mode = #tpu.pipeline_mode<synchronous>, transform_indices = @transform_5, window_bounds = array<i64: 2, 32, 32>}, {pipeline_mode = #tpu.pipeline_mode<synchronous>, transform_indices = @transform_6, window_bounds = array<i64: 2, 32, 32>}, {pipeline_mode = #tpu.pipeline_mode<synchronous>, transform_indices = @transform_7, window_bounds = array<i64: 2, 32, 64>}, {pipeline_mode = #tpu.pipeline_mode<synchronous>, transform_indices = @transform_8, window_bounds = array<i64: 2, 32, 32>}, {pipeline_mode = #tpu.pipeline_mode<synchronous>, transform_indices = @transform_9, window_bounds = array<i64: 2, 32, 64>}, {pipeline_mode = #tpu.pipeline_mode<synchronous>, transform_indices = @transform_10, window_bounds = array<i64: 2, 64, 32>}, {pipeline_mode = #tpu.pipeline_mode<synchronous>, transform_indices = @transform_11, window_bounds = array<i64: 32, 128>}, {transform_indices = @transform_12, window_bounds = array<i64: 16, 128>}]} {
    %c0 = arith.constant 0 : index
    %c0_0 = arith.constant 0 : index
    %c0_1 = arith.constant 0 : index
    %0 = vector.load %arg1[%c0, %c0_0, %c0_1] : memref<2x8x32xf32, #tpu.memory_space<vmem>>, vector<2x8x32xf32>
    %c0_2 = arith.constant 0 : index
    %c0_3 = arith.constant 0 : index
    %c0_4 = arith.constant 0 : index
    %1 = vector.load %arg2[%c0_2, %c0_3, %c0_4] : memref<2x1x32xf32, #tpu.memory_space<vmem>>, vector<2x1x32xf32>
    %c0_5 = arith.constant 0 : index
    %c0_6 = arith.constant 0 : index
    %c0_7 = arith.constant 0 : index
    %2 = vector.load %arg3[%c0_5, %c0_6, %c0_7] : memref<2x8x32xf32, #tpu.memory_space<vmem>>, vector<2x8x32xf32>
    %c0_8 = arith.constant 0 : index
    %c0_9 = arith.constant 0 : index
    %3 = vector.load %arg4[%c0_8, %c0_9] : memref<40x128xf32, #tpu.memory_space<vmem>>, vector<40x128xf32>
    %c0_10 = arith.constant 0 : index
    %c0_11 = arith.constant 0 : index
    %c0_12 = arith.constant 0 : index
    %4 = vector.load %arg5[%c0_10, %c0_11, %c0_12] : memref<2x32x96xbf16, #tpu.memory_space<vmem>>, vector<2x32x96xbf16>
    %c0_13 = arith.constant 0 : index
    %c0_14 = arith.constant 0 : index
    %c0_15 = arith.constant 0 : index
    %5 = vector.load %arg6[%c0_13, %c0_14, %c0_15] : memref<2x32x32xbf16, #tpu.memory_space<vmem>>, vector<2x32x32xbf16>
    %c0_16 = arith.constant 0 : index
    %c0_17 = arith.constant 0 : index
    %c0_18 = arith.constant 0 : index
    %6 = vector.load %arg7[%c0_16, %c0_17, %c0_18] : memref<2x32x32xbf16, #tpu.memory_space<vmem>>, vector<2x32x32xbf16>
    %c0_19 = arith.constant 0 : index
    %c0_20 = arith.constant 0 : index
    %c0_21 = arith.constant 0 : index
    %7 = vector.load %arg8[%c0_19, %c0_20, %c0_21] : memref<2x32x64xbf16, #tpu.memory_space<vmem>>, vector<2x32x64xbf16>
    %c0_22 = arith.constant 0 : index
    %c0_23 = arith.constant 0 : index
    %c0_24 = arith.constant 0 : index
    %8 = vector.load %arg9[%c0_22, %c0_23, %c0_24] : memref<2x32x32xbf16, #tpu.memory_space<vmem>>, vector<2x32x32xbf16>
    %c0_25 = arith.constant 0 : index
    %c0_26 = arith.constant 0 : index
    %c0_27 = arith.constant 0 : index
    %9 = vector.load %arg10[%c0_25, %c0_26, %c0_27] : memref<2x32x64xbf16, #tpu.memory_space<vmem>>, vector<2x32x64xbf16>
    %c0_28 = arith.constant 0 : index
    %c0_29 = arith.constant 0 : index
    %c0_30 = arith.constant 0 : index
    %10 = vector.load %arg11[%c0_28, %c0_29, %c0_30] : memref<2x64x32xbf16, #tpu.memory_space<vmem>>, vector<2x64x32xbf16>
    %c0_31 = arith.constant 0 : index
    %c0_32 = arith.constant 0 : index
    %11 = vector.load %arg12[%c0_31, %c0_32] : memref<32x128xbf16, #tpu.memory_space<vmem>>, vector<32x128xbf16>
    %12 = vector.extract_strided_slice %3 {offsets = [0, 0], sizes = [8, 32], strides = [1, 1]} : vector<40x128xf32> to vector<8x32xf32>
    %13 = vector.extract_strided_slice %3 {offsets = [8, 0], sizes = [6, 32], strides = [1, 1]} : vector<40x128xf32> to vector<6x32xf32>
    %14 = vector.shape_cast %13 : vector<6x32xf32> to vector<2x3x32xf32>
    %15 = vector.extract_strided_slice %3 {offsets = [14, 0], sizes = [6, 32], strides = [1, 1]} : vector<40x128xf32> to vector<6x32xf32>
    %16 = vector.shape_cast %15 : vector<6x32xf32> to vector<2x3x32xf32>
    %17 = vector.extract_strided_slice %3 {offsets = [20, 0], sizes = [2, 96], strides = [1, 1]} : vector<40x128xf32> to vector<2x96xf32>
    %18 = vector.extract_strided_slice %3 {offsets = [22, 0], sizes = [2, 32], strides = [1, 1]} : vector<40x128xf32> to vector<2x32xf32>
    %19 = vector.extract_strided_slice %3 {offsets = [24, 0], sizes = [2, 32], strides = [1, 1]} : vector<40x128xf32> to vector<2x32xf32>
    %20 = vector.extract_strided_slice %3 {offsets = [26, 0], sizes = [2, 64], strides = [1, 1]} : vector<40x128xf32> to vector<2x64xf32>
    %21 = vector.extract_strided_slice %3 {offsets = [28, 0], sizes = [2, 32], strides = [1, 1]} : vector<40x128xf32> to vector<2x32xf32>
    %22 = vector.extract_strided_slice %3 {offsets = [30, 0], sizes = [2, 64], strides = [1, 1]} : vector<40x128xf32> to vector<2x64xf32>
    %23 = vector.extract_strided_slice %3 {offsets = [32, 0], sizes = [2, 32], strides = [1, 1]} : vector<40x128xf32> to vector<2x32xf32>
    %24 = vector.extract_strided_slice %3 {offsets = [34, 0], sizes = [2, 32], strides = [1, 1]} : vector<40x128xf32> to vector<2x32xf32>
    %25 = vector.extract_strided_slice %3 {offsets = [36, 0], sizes = [1, 128], strides = [1, 1]} : vector<40x128xf32> to vector<1x128xf32>
    %26 = vector.broadcast %1 : vector<2x1x32xf32> to vector<2x8x32xf32>
    %27 = arith.addf %26, %2 : vector<2x8x32xf32>
    %28 = vector.shape_cast %27 : vector<2x8x32xf32> to vector<16x32xf32>
    %29 = arith.truncf %28 : vector<16x32xf32> to vector<16x32xbf16>
    %30 = vector.shape_cast %12 : vector<8x32xf32> to vector<1x8x32xf32>
    %31 = vector.broadcast %30 : vector<1x8x32xf32> to vector<2x8x32xf32>
    %32 = arith.addf %0, %31 : vector<2x8x32xf32>
    %33 = vector.shape_cast %32 : vector<2x8x32xf32> to vector<16x32xf32>
    %34 = vector.extract_strided_slice %14 {offsets = [0, 0, 0], sizes = [1, 1, 32], strides = [1, 1, 1]} : vector<2x3x32xf32> to vector<1x1x32xf32>
    %35 = vector.shape_cast %34 : vector<1x1x32xf32> to vector<32xf32>
    %36 = vector.extract_strided_slice %16 {offsets = [0, 0, 0], sizes = [1, 1, 32], strides = [1, 1, 1]} : vector<2x3x32xf32> to vector<1x1x32xf32>
    %37 = vector.shape_cast %36 : vector<1x1x32xf32> to vector<32xf32>
    %cst = arith.constant dense<0.000000e+00> : vector<16xf32>
    %38 = vector.multi_reduction <add>, %33, %cst [1] : vector<16x32xf32> to vector<16xf32>
    %39 = vector.shape_cast %38 : vector<16xf32> to vector<16x1xf32>
    %cst_33 = arith.constant 3.200000e+01 : f32
    %40 = vector.broadcast %cst_33 : f32 to vector<16x1xf32>
    %41 = arith.divf %39, %40 : vector<16x1xf32>
    %42 = vector.broadcast %41 : vector<16x1xf32> to vector<16x32xf32>
    %43 = arith.subf %33, %42 : vector<16x32xf32>
    %44 = arith.mulf %43, %43 : vector<16x32xf32>
    %cst_34 = arith.constant dense<0.000000e+00> : vector<16xf32>
    %45 = vector.multi_reduction <add>, %44, %cst_34 [1] : vector<16x32xf32> to vector<16xf32>
    %46 = vector.shape_cast %45 : vector<16xf32> to vector<16x1xf32>
    %cst_35 = arith.constant 3.200000e+01 : f32
    %47 = vector.broadcast %cst_35 : f32 to vector<16x1xf32>
    %48 = arith.divf %46, %47 : vector<16x1xf32>
    %49 = vector.broadcast %41 : vector<16x1xf32> to vector<16x32xf32>
    %50 = arith.subf %33, %49 : vector<16x32xf32>
    %cst_36 = arith.constant 9.99999974E-6 : f32
    %51 = vector.broadcast %cst_36 : f32 to vector<16x1xf32>
    %52 = arith.addf %48, %51 : vector<16x1xf32>
    %53 = math.rsqrt %52 : vector<16x1xf32>
    %54 = vector.broadcast %53 : vector<16x1xf32> to vector<16x32xf32>
    %55 = arith.mulf %50, %54 : vector<16x32xf32>
    %56 = vector.shape_cast %35 : vector<32xf32> to vector<1x32xf32>
    %57 = vector.broadcast %56 : vector<1x32xf32> to vector<16x32xf32>
    %58 = arith.mulf %55, %57 : vector<16x32xf32>
    %59 = vector.shape_cast %37 : vector<32xf32> to vector<1x32xf32>
    %60 = vector.broadcast %59 : vector<1x32xf32> to vector<16x32xf32>
    %61 = arith.addf %58, %60 : vector<16x32xf32>
    %62 = vector.extract_strided_slice %4 {offsets = [0, 0, 0], sizes = [1, 32, 96], strides = [1, 1, 1]} : vector<2x32x96xbf16> to vector<1x32x96xbf16>
    %63 = vector.shape_cast %62 : vector<1x32x96xbf16> to vector<32x96xbf16>
    %64 = arith.truncf %61 : vector<16x32xf32> to vector<16x32xbf16>
    %cst_37 = arith.constant dense<0.000000e+00> : vector<16x96xf32>
    %65 = tpu.matmul %64, %63, %cst_37 {dimension_numbers = #tpu.dot_dimension_numbers<[1], [0], [0], [1], [0, 0, 1, 1], [], []>} : vector<16x32xbf16>, vector<32x96xbf16>, vector<16x96xf32> -> vector<16x96xf32>
    %66 = vector.extract_strided_slice %17 {offsets = [0, 0], sizes = [1, 96], strides = [1, 1]} : vector<2x96xf32> to vector<1x96xf32>
    %67 = vector.shape_cast %66 : vector<1x96xf32> to vector<96xf32>
    %68 = vector.shape_cast %67 : vector<96xf32> to vector<1x96xf32>
    %69 = vector.broadcast %68 : vector<1x96xf32> to vector<16x96xf32>
    %70 = arith.addf %65, %69 : vector<16x96xf32>
    %71 = vector.extract_strided_slice %70 {offsets = [0, 0], sizes = [16, 32], strides = [1, 1]} : vector<16x96xf32> to vector<16x32xf32>
    %72 = vector.extract_strided_slice %70 {offsets = [0, 32], sizes = [16, 32], strides = [1, 1]} : vector<16x96xf32> to vector<16x32xf32>
    %73 = vector.extract_strided_slice %70 {offsets = [0, 64], sizes = [16, 32], strides = [1, 1]} : vector<16x96xf32> to vector<16x32xf32>
    %74 = vector.shape_cast %71 : vector<16x32xf32> to vector<2x8x32xf32>
    %75 = vector.shape_cast %72 : vector<16x32xf32> to vector<2x8x32xf32>
    %76 = vector.shape_cast %73 : vector<16x32xf32> to vector<2x8x32xf32>
    %77 = arith.truncf %74 : vector<2x8x32xf32> to vector<2x8x32xbf16>
    %78 = arith.truncf %75 : vector<2x8x32xf32> to vector<2x8x32xbf16>
    "tpu.trace_start"() <{level = 10 : i32, message = "bqd,bkd->bqk"}> : () -> ()
    %cst_38 = arith.constant dense<0.000000e+00> : vector<2x8x8xf32>
    %79 = tpu.matmul %77, %78, %cst_38 {dimension_numbers = #tpu.dot_dimension_numbers<[2], [2], [1], [1], [0, 0, 0, 1, 1, 1], [0], [0]>} : vector<2x8x32xbf16>, vector<2x8x32xbf16>, vector<2x8x8xf32> -> vector<2x8x8xf32>
    "tpu.trace_stop"() : () -> ()
    %cst_39 = arith.constant dense<0xFF800000> : vector<2x8xf32>
    %80 = vector.multi_reduction <maximumf>, %79, %cst_39 [2] : vector<2x8x8xf32> to vector<2x8xf32>
    %81 = vector.shape_cast %80 : vector<2x8xf32> to vector<2x8x1xf32>
    %82 = vector.broadcast %81 : vector<2x8x1xf32> to vector<2x8x8xf32>
    %83 = arith.subf %79, %82 : vector<2x8x8xf32>
    %84 = math.exp %83 : vector<2x8x8xf32>
    %cst_40 = arith.constant dense<0.000000e+00> : vector<2x8xf32>
    %85 = vector.multi_reduction <add>, %84, %cst_40 [2] : vector<2x8x8xf32> to vector<2x8xf32>
    %86 = vector.shape_cast %85 : vector<2x8xf32> to vector<2x8x1xf32>
    %87 = tpu.reciprocal %86 {approx = true} : vector<2x8x1xf32> -> vector<2x8x1xf32>
    %88 = vector.broadcast %87 : vector<2x8x1xf32> to vector<2x8x8xf32>
    %89 = arith.mulf %84, %88 : vector<2x8x8xf32>
    %90 = arith.truncf %89 : vector<2x8x8xf32> to vector<2x8x8xbf16>
    %91 = arith.truncf %76 : vector<2x8x32xf32> to vector<2x8x32xbf16>
    "tpu.trace_start"() <{level = 10 : i32, message = "bqk,bkd->bqd"}> : () -> ()
    %cst_41 = arith.constant dense<0.000000e+00> : vector<2x8x32xf32>
    %92 = tpu.matmul %90, %91, %cst_41 {dimension_numbers = #tpu.dot_dimension_numbers<[2], [1], [1], [2], [0, 0, 0, 1, 1, 2], [0], [0]>} : vector<2x8x8xbf16>, vector<2x8x32xbf16>, vector<2x8x32xf32> -> vector<2x8x32xf32>
    "tpu.trace_stop"() : () -> ()
    %93 = vector.shape_cast %92 : vector<2x8x32xf32> to vector<16x32xf32>
    %94 = vector.extract_strided_slice %5 {offsets = [0, 0, 0], sizes = [1, 32, 32], strides = [1, 1, 1]} : vector<2x32x32xbf16> to vector<1x32x32xbf16>
    %95 = vector.shape_cast %94 : vector<1x32x32xbf16> to vector<32x32xbf16>
    %96 = arith.truncf %93 : vector<16x32xf32> to vector<16x32xbf16>
    %cst_42 = arith.constant dense<0.000000e+00> : vector<16x32xf32>
    %97 = tpu.matmul %96, %95, %cst_42 {dimension_numbers = #tpu.dot_dimension_numbers<[1], [0], [0], [1], [0, 0, 1, 1], [], []>} : vector<16x32xbf16>, vector<32x32xbf16>, vector<16x32xf32> -> vector<16x32xf32>
    %98 = arith.addf %33, %97 : vector<16x32xf32>
    %99 = vector.extract_strided_slice %18 {offsets = [0, 0], sizes = [1, 32], strides = [1, 1]} : vector<2x32xf32> to vector<1x32xf32>
    %100 = vector.shape_cast %99 : vector<1x32xf32> to vector<32xf32>
    %101 = vector.shape_cast %100 : vector<32xf32> to vector<1x32xf32>
    %102 = vector.broadcast %101 : vector<1x32xf32> to vector<16x32xf32>
    %103 = arith.addf %98, %102 : vector<16x32xf32>
    %104 = vector.extract_strided_slice %14 {offsets = [0, 1, 0], sizes = [1, 1, 32], strides = [1, 1, 1]} : vector<2x3x32xf32> to vector<1x1x32xf32>
    %105 = vector.shape_cast %104 : vector<1x1x32xf32> to vector<32xf32>
    %106 = vector.extract_strided_slice %16 {offsets = [0, 1, 0], sizes = [1, 1, 32], strides = [1, 1, 1]} : vector<2x3x32xf32> to vector<1x1x32xf32>
    %107 = vector.shape_cast %106 : vector<1x1x32xf32> to vector<32xf32>
    %cst_43 = arith.constant dense<0.000000e+00> : vector<16xf32>
    %108 = vector.multi_reduction <add>, %103, %cst_43 [1] : vector<16x32xf32> to vector<16xf32>
    %109 = vector.shape_cast %108 : vector<16xf32> to vector<16x1xf32>
    %cst_44 = arith.constant 3.200000e+01 : f32
    %110 = vector.broadcast %cst_44 : f32 to vector<16x1xf32>
    %111 = arith.divf %109, %110 : vector<16x1xf32>
    %112 = vector.broadcast %111 : vector<16x1xf32> to vector<16x32xf32>
    %113 = arith.subf %103, %112 : vector<16x32xf32>
    %114 = arith.mulf %113, %113 : vector<16x32xf32>
    %cst_45 = arith.constant dense<0.000000e+00> : vector<16xf32>
    %115 = vector.multi_reduction <add>, %114, %cst_45 [1] : vector<16x32xf32> to vector<16xf32>
    %116 = vector.shape_cast %115 : vector<16xf32> to vector<16x1xf32>
    %cst_46 = arith.constant 3.200000e+01 : f32
    %117 = vector.broadcast %cst_46 : f32 to vector<16x1xf32>
    %118 = arith.divf %116, %117 : vector<16x1xf32>
    %119 = vector.broadcast %111 : vector<16x1xf32> to vector<16x32xf32>
    %120 = arith.subf %103, %119 : vector<16x32xf32>
    %cst_47 = arith.constant 9.99999974E-6 : f32
    %121 = vector.broadcast %cst_47 : f32 to vector<16x1xf32>
    %122 = arith.addf %118, %121 : vector<16x1xf32>
    %123 = math.rsqrt %122 : vector<16x1xf32>
    %124 = vector.broadcast %123 : vector<16x1xf32> to vector<16x32xf32>
    %125 = arith.mulf %120, %124 : vector<16x32xf32>
    %126 = vector.shape_cast %105 : vector<32xf32> to vector<1x32xf32>
    %127 = vector.broadcast %126 : vector<1x32xf32> to vector<16x32xf32>
    %128 = arith.mulf %125, %127 : vector<16x32xf32>
    %129 = vector.shape_cast %107 : vector<32xf32> to vector<1x32xf32>
    %130 = vector.broadcast %129 : vector<1x32xf32> to vector<16x32xf32>
    %131 = arith.addf %128, %130 : vector<16x32xf32>
    %132 = vector.extract_strided_slice %6 {offsets = [0, 0, 0], sizes = [1, 32, 32], strides = [1, 1, 1]} : vector<2x32x32xbf16> to vector<1x32x32xbf16>
    %133 = vector.shape_cast %132 : vector<1x32x32xbf16> to vector<32x32xbf16>
    %134 = arith.truncf %131 : vector<16x32xf32> to vector<16x32xbf16>
    %cst_48 = arith.constant dense<0.000000e+00> : vector<16x32xf32>
    %135 = tpu.matmul %134, %133, %cst_48 {dimension_numbers = #tpu.dot_dimension_numbers<[1], [0], [0], [1], [0, 0, 1, 1], [], []>} : vector<16x32xbf16>, vector<32x32xbf16>, vector<16x32xf32> -> vector<16x32xf32>
    %136 = vector.extract_strided_slice %19 {offsets = [0, 0], sizes = [1, 32], strides = [1, 1]} : vector<2x32xf32> to vector<1x32xf32>
    %137 = vector.shape_cast %136 : vector<1x32xf32> to vector<32xf32>
    %138 = vector.shape_cast %137 : vector<32xf32> to vector<1x32xf32>
    %139 = vector.broadcast %138 : vector<1x32xf32> to vector<16x32xf32>
    %140 = arith.addf %135, %139 : vector<16x32xf32>
    %141 = vector.extract_strided_slice %7 {offsets = [0, 0, 0], sizes = [1, 32, 64], strides = [1, 1, 1]} : vector<2x32x64xbf16> to vector<1x32x64xbf16>
    %142 = vector.shape_cast %141 : vector<1x32x64xbf16> to vector<32x64xbf16>
    %cst_49 = arith.constant dense<0.000000e+00> : vector<16x64xf32>
    %143 = tpu.matmul %29, %142, %cst_49 {dimension_numbers = #tpu.dot_dimension_numbers<[1], [0], [0], [1], [0, 0, 1, 1], [], []>} : vector<16x32xbf16>, vector<32x64xbf16>, vector<16x64xf32> -> vector<16x64xf32>
    %144 = vector.extract_strided_slice %20 {offsets = [0, 0], sizes = [1, 64], strides = [1, 1]} : vector<2x64xf32> to vector<1x64xf32>
    %145 = vector.shape_cast %144 : vector<1x64xf32> to vector<64xf32>
    %146 = vector.shape_cast %145 : vector<64xf32> to vector<1x64xf32>
    %147 = vector.broadcast %146 : vector<1x64xf32> to vector<16x64xf32>
    %148 = arith.addf %143, %147 : vector<16x64xf32>
    %149 = vector.extract_strided_slice %148 {offsets = [0, 0], sizes = [16, 32], strides = [1, 1]} : vector<16x64xf32> to vector<16x32xf32>
    %150 = vector.extract_strided_slice %148 {offsets = [0, 32], sizes = [16, 32], strides = [1, 1]} : vector<16x64xf32> to vector<16x32xf32>
    %151 = vector.shape_cast %140 : vector<16x32xf32> to vector<2x8x32xf32>
    %152 = vector.shape_cast %149 : vector<16x32xf32> to vector<2x8x32xf32>
    %153 = vector.shape_cast %150 : vector<16x32xf32> to vector<2x8x32xf32>
    %154 = arith.truncf %151 : vector<2x8x32xf32> to vector<2x8x32xbf16>
    %155 = arith.truncf %152 : vector<2x8x32xf32> to vector<2x8x32xbf16>
    "tpu.trace_start"() <{level = 10 : i32, message = "bqd,bkd->bqk"}> : () -> ()
    %cst_50 = arith.constant dense<0.000000e+00> : vector<2x8x8xf32>
    %156 = tpu.matmul %154, %155, %cst_50 {dimension_numbers = #tpu.dot_dimension_numbers<[2], [2], [1], [1], [0, 0, 0, 1, 1, 1], [0], [0]>} : vector<2x8x32xbf16>, vector<2x8x32xbf16>, vector<2x8x8xf32> -> vector<2x8x8xf32>
    "tpu.trace_stop"() : () -> ()
    %cst_51 = arith.constant dense<0xFF800000> : vector<2x8xf32>
    %157 = vector.multi_reduction <maximumf>, %156, %cst_51 [2] : vector<2x8x8xf32> to vector<2x8xf32>
    %158 = vector.shape_cast %157 : vector<2x8xf32> to vector<2x8x1xf32>
    %159 = vector.broadcast %158 : vector<2x8x1xf32> to vector<2x8x8xf32>
    %160 = arith.subf %156, %159 : vector<2x8x8xf32>
    %161 = math.exp %160 : vector<2x8x8xf32>
    %cst_52 = arith.constant dense<0.000000e+00> : vector<2x8xf32>
    %162 = vector.multi_reduction <add>, %161, %cst_52 [2] : vector<2x8x8xf32> to vector<2x8xf32>
    %163 = vector.shape_cast %162 : vector<2x8xf32> to vector<2x8x1xf32>
    %164 = tpu.reciprocal %163 {approx = true} : vector<2x8x1xf32> -> vector<2x8x1xf32>
    %165 = vector.broadcast %164 : vector<2x8x1xf32> to vector<2x8x8xf32>
    %166 = arith.mulf %161, %165 : vector<2x8x8xf32>
    %167 = arith.truncf %166 : vector<2x8x8xf32> to vector<2x8x8xbf16>
    %168 = arith.truncf %153 : vector<2x8x32xf32> to vector<2x8x32xbf16>
    "tpu.trace_start"() <{level = 10 : i32, message = "bqk,bkd->bqd"}> : () -> ()
    %cst_53 = arith.constant dense<0.000000e+00> : vector<2x8x32xf32>
    %169 = tpu.matmul %167, %168, %cst_53 {dimension_numbers = #tpu.dot_dimension_numbers<[2], [1], [1], [2], [0, 0, 0, 1, 1, 2], [0], [0]>} : vector<2x8x8xbf16>, vector<2x8x32xbf16>, vector<2x8x32xf32> -> vector<2x8x32xf32>
    "tpu.trace_stop"() : () -> ()
    %170 = vector.shape_cast %169 : vector<2x8x32xf32> to vector<16x32xf32>
    %171 = vector.extract_strided_slice %8 {offsets = [0, 0, 0], sizes = [1, 32, 32], strides = [1, 1, 1]} : vector<2x32x32xbf16> to vector<1x32x32xbf16>
    %172 = vector.shape_cast %171 : vector<1x32x32xbf16> to vector<32x32xbf16>
    %173 = arith.truncf %170 : vector<16x32xf32> to vector<16x32xbf16>
    %cst_54 = arith.constant dense<0.000000e+00> : vector<16x32xf32>
    %174 = tpu.matmul %173, %172, %cst_54 {dimension_numbers = #tpu.dot_dimension_numbers<[1], [0], [0], [1], [0, 0, 1, 1], [], []>} : vector<16x32xbf16>, vector<32x32xbf16>, vector<16x32xf32> -> vector<16x32xf32>
    %175 = arith.addf %103, %174 : vector<16x32xf32>
    %176 = vector.extract_strided_slice %21 {offsets = [0, 0], sizes = [1, 32], strides = [1, 1]} : vector<2x32xf32> to vector<1x32xf32>
    %177 = vector.shape_cast %176 : vector<1x32xf32> to vector<32xf32>
    %178 = vector.shape_cast %177 : vector<32xf32> to vector<1x32xf32>
    %179 = vector.broadcast %178 : vector<1x32xf32> to vector<16x32xf32>
    %180 = arith.addf %175, %179 : vector<16x32xf32>
    %181 = vector.extract_strided_slice %14 {offsets = [0, 2, 0], sizes = [1, 1, 32], strides = [1, 1, 1]} : vector<2x3x32xf32> to vector<1x1x32xf32>
    %182 = vector.shape_cast %181 : vector<1x1x32xf32> to vector<32xf32>
    %183 = vector.extract_strided_slice %16 {offsets = [0, 2, 0], sizes = [1, 1, 32], strides = [1, 1, 1]} : vector<2x3x32xf32> to vector<1x1x32xf32>
    %184 = vector.shape_cast %183 : vector<1x1x32xf32> to vector<32xf32>
    %cst_55 = arith.constant dense<0.000000e+00> : vector<16xf32>
    %185 = vector.multi_reduction <add>, %180, %cst_55 [1] : vector<16x32xf32> to vector<16xf32>
    %186 = vector.shape_cast %185 : vector<16xf32> to vector<16x1xf32>
    %cst_56 = arith.constant 3.200000e+01 : f32
    %187 = vector.broadcast %cst_56 : f32 to vector<16x1xf32>
    %188 = arith.divf %186, %187 : vector<16x1xf32>
    %189 = vector.broadcast %188 : vector<16x1xf32> to vector<16x32xf32>
    %190 = arith.subf %180, %189 : vector<16x32xf32>
    %191 = arith.mulf %190, %190 : vector<16x32xf32>
    %cst_57 = arith.constant dense<0.000000e+00> : vector<16xf32>
    %192 = vector.multi_reduction <add>, %191, %cst_57 [1] : vector<16x32xf32> to vector<16xf32>
    %193 = vector.shape_cast %192 : vector<16xf32> to vector<16x1xf32>
    %cst_58 = arith.constant 3.200000e+01 : f32
    %194 = vector.broadcast %cst_58 : f32 to vector<16x1xf32>
    %195 = arith.divf %193, %194 : vector<16x1xf32>
    %196 = vector.broadcast %188 : vector<16x1xf32> to vector<16x32xf32>
    %197 = arith.subf %180, %196 : vector<16x32xf32>
    %cst_59 = arith.constant 9.99999974E-6 : f32
    %198 = vector.broadcast %cst_59 : f32 to vector<16x1xf32>
    %199 = arith.addf %195, %198 : vector<16x1xf32>
    %200 = math.rsqrt %199 : vector<16x1xf32>
    %201 = vector.broadcast %200 : vector<16x1xf32> to vector<16x32xf32>
    %202 = arith.mulf %197, %201 : vector<16x32xf32>
    %203 = vector.shape_cast %182 : vector<32xf32> to vector<1x32xf32>
    %204 = vector.broadcast %203 : vector<1x32xf32> to vector<16x32xf32>
    %205 = arith.mulf %202, %204 : vector<16x32xf32>
    %206 = vector.shape_cast %184 : vector<32xf32> to vector<1x32xf32>
    %207 = vector.broadcast %206 : vector<1x32xf32> to vector<16x32xf32>
    %208 = arith.addf %205, %207 : vector<16x32xf32>
    %209 = vector.extract_strided_slice %9 {offsets = [0, 0, 0], sizes = [1, 32, 64], strides = [1, 1, 1]} : vector<2x32x64xbf16> to vector<1x32x64xbf16>
    %210 = vector.shape_cast %209 : vector<1x32x64xbf16> to vector<32x64xbf16>
    %211 = arith.truncf %208 : vector<16x32xf32> to vector<16x32xbf16>
    %cst_60 = arith.constant dense<0.000000e+00> : vector<16x64xf32>
    %212 = tpu.matmul %211, %210, %cst_60 {dimension_numbers = #tpu.dot_dimension_numbers<[1], [0], [0], [1], [0, 0, 1, 1], [], []>} : vector<16x32xbf16>, vector<32x64xbf16>, vector<16x64xf32> -> vector<16x64xf32>
    %213 = vector.extract_strided_slice %22 {offsets = [0, 0], sizes = [1, 64], strides = [1, 1]} : vector<2x64xf32> to vector<1x64xf32>
    %214 = vector.shape_cast %213 : vector<1x64xf32> to vector<64xf32>
    %215 = vector.shape_cast %214 : vector<64xf32> to vector<1x64xf32>
    %216 = vector.broadcast %215 : vector<1x64xf32> to vector<16x64xf32>
    %217 = arith.addf %212, %216 : vector<16x64xf32>
    %cst_61 = arith.constant 5.000000e-01 : f32
    %218 = vector.broadcast %cst_61 : f32 to vector<16x64xf32>
    %219 = arith.mulf %218, %217 : vector<16x64xf32>
    %cst_62 = arith.constant 4.471500e-02 : f32
    %220 = vector.broadcast %cst_62 : f32 to vector<16x64xf32>
    %221 = arith.mulf %220, %217 : vector<16x64xf32>
    %222 = arith.mulf %221, %217 : vector<16x64xf32>
    %223 = arith.mulf %222, %217 : vector<16x64xf32>
    %224 = arith.addf %217, %223 : vector<16x64xf32>
    %cst_63 = arith.constant 0.797884583 : f32
    %225 = vector.broadcast %cst_63 : f32 to vector<16x64xf32>
    %226 = arith.mulf %225, %224 : vector<16x64xf32>
    %227 = math.tanh %226 : vector<16x64xf32>
    %cst_64 = arith.constant 1.000000e+00 : f32
    %228 = vector.broadcast %cst_64 : f32 to vector<16x64xf32>
    %229 = arith.addf %228, %227 : vector<16x64xf32>
    %230 = arith.mulf %219, %229 : vector<16x64xf32>
    %231 = vector.extract_strided_slice %10 {offsets = [0, 0, 0], sizes = [1, 64, 32], strides = [1, 1, 1]} : vector<2x64x32xbf16> to vector<1x64x32xbf16>
    %232 = vector.shape_cast %231 : vector<1x64x32xbf16> to vector<64x32xbf16>
    %233 = arith.truncf %230 : vector<16x64xf32> to vector<16x64xbf16>
    %cst_65 = arith.constant dense<0.000000e+00> : vector<16x32xf32>
    %234 = tpu.matmul %233, %232, %cst_65 {dimension_numbers = #tpu.dot_dimension_numbers<[1], [0], [0], [1], [0, 0, 1, 1], [], []>} : vector<16x64xbf16>, vector<64x32xbf16>, vector<16x32xf32> -> vector<16x32xf32>
    %235 = arith.addf %180, %234 : vector<16x32xf32>
    %236 = vector.extract_strided_slice %23 {offsets = [0, 0], sizes = [1, 32], strides = [1, 1]} : vector<2x32xf32> to vector<1x32xf32>
    %237 = vector.shape_cast %236 : vector<1x32xf32> to vector<32xf32>
    %238 = vector.shape_cast %237 : vector<32xf32> to vector<1x32xf32>
    %239 = vector.broadcast %238 : vector<1x32xf32> to vector<16x32xf32>
    %240 = arith.addf %235, %239 : vector<16x32xf32>
    %241 = vector.extract_strided_slice %14 {offsets = [1, 0, 0], sizes = [1, 1, 32], strides = [1, 1, 1]} : vector<2x3x32xf32> to vector<1x1x32xf32>
    %242 = vector.shape_cast %241 : vector<1x1x32xf32> to vector<32xf32>
    %243 = vector.extract_strided_slice %16 {offsets = [1, 0, 0], sizes = [1, 1, 32], strides = [1, 1, 1]} : vector<2x3x32xf32> to vector<1x1x32xf32>
    %244 = vector.shape_cast %243 : vector<1x1x32xf32> to vector<32xf32>
    %cst_66 = arith.constant dense<0.000000e+00> : vector<16xf32>
    %245 = vector.multi_reduction <add>, %240, %cst_66 [1] : vector<16x32xf32> to vector<16xf32>
    %246 = vector.shape_cast %245 : vector<16xf32> to vector<16x1xf32>
    %cst_67 = arith.constant 3.200000e+01 : f32
    %247 = vector.broadcast %cst_67 : f32 to vector<16x1xf32>
    %248 = arith.divf %246, %247 : vector<16x1xf32>
    %249 = vector.broadcast %248 : vector<16x1xf32> to vector<16x32xf32>
    %250 = arith.subf %240, %249 : vector<16x32xf32>
    %251 = arith.mulf %250, %250 : vector<16x32xf32>
    %cst_68 = arith.constant dense<0.000000e+00> : vector<16xf32>
    %252 = vector.multi_reduction <add>, %251, %cst_68 [1] : vector<16x32xf32> to vector<16xf32>
    %253 = vector.shape_cast %252 : vector<16xf32> to vector<16x1xf32>
    %cst_69 = arith.constant 3.200000e+01 : f32
    %254 = vector.broadcast %cst_69 : f32 to vector<16x1xf32>
    %255 = arith.divf %253, %254 : vector<16x1xf32>
    %256 = vector.broadcast %248 : vector<16x1xf32> to vector<16x32xf32>
    %257 = arith.subf %240, %256 : vector<16x32xf32>
    %cst_70 = arith.constant 9.99999974E-6 : f32
    %258 = vector.broadcast %cst_70 : f32 to vector<16x1xf32>
    %259 = arith.addf %255, %258 : vector<16x1xf32>
    %260 = math.rsqrt %259 : vector<16x1xf32>
    %261 = vector.broadcast %260 : vector<16x1xf32> to vector<16x32xf32>
    %262 = arith.mulf %257, %261 : vector<16x32xf32>
    %263 = vector.shape_cast %242 : vector<32xf32> to vector<1x32xf32>
    %264 = vector.broadcast %263 : vector<1x32xf32> to vector<16x32xf32>
    %265 = arith.mulf %262, %264 : vector<16x32xf32>
    %266 = vector.shape_cast %244 : vector<32xf32> to vector<1x32xf32>
    %267 = vector.broadcast %266 : vector<1x32xf32> to vector<16x32xf32>
    %268 = arith.addf %265, %267 : vector<16x32xf32>
    %269 = vector.extract_strided_slice %4 {offsets = [1, 0, 0], sizes = [1, 32, 96], strides = [1, 1, 1]} : vector<2x32x96xbf16> to vector<1x32x96xbf16>
    %270 = vector.shape_cast %269 : vector<1x32x96xbf16> to vector<32x96xbf16>
    %271 = arith.truncf %268 : vector<16x32xf32> to vector<16x32xbf16>
    %cst_71 = arith.constant dense<0.000000e+00> : vector<16x96xf32>
    %272 = tpu.matmul %271, %270, %cst_71 {dimension_numbers = #tpu.dot_dimension_numbers<[1], [0], [0], [1], [0, 0, 1, 1], [], []>} : vector<16x32xbf16>, vector<32x96xbf16>, vector<16x96xf32> -> vector<16x96xf32>
    %273 = vector.extract_strided_slice %17 {offsets = [1, 0], sizes = [1, 96], strides = [1, 1]} : vector<2x96xf32> to vector<1x96xf32>
    %274 = vector.shape_cast %273 : vector<1x96xf32> to vector<96xf32>
    %275 = vector.shape_cast %274 : vector<96xf32> to vector<1x96xf32>
    %276 = vector.broadcast %275 : vector<1x96xf32> to vector<16x96xf32>
    %277 = arith.addf %272, %276 : vector<16x96xf32>
    %278 = vector.extract_strided_slice %277 {offsets = [0, 0], sizes = [16, 32], strides = [1, 1]} : vector<16x96xf32> to vector<16x32xf32>
    %279 = vector.extract_strided_slice %277 {offsets = [0, 32], sizes = [16, 32], strides = [1, 1]} : vector<16x96xf32> to vector<16x32xf32>
    %280 = vector.extract_strided_slice %277 {offsets = [0, 64], sizes = [16, 32], strides = [1, 1]} : vector<16x96xf32> to vector<16x32xf32>
    %281 = vector.shape_cast %278 : vector<16x32xf32> to vector<2x8x32xf32>
    %282 = vector.shape_cast %279 : vector<16x32xf32> to vector<2x8x32xf32>
    %283 = vector.shape_cast %280 : vector<16x32xf32> to vector<2x8x32xf32>
    %284 = arith.truncf %281 : vector<2x8x32xf32> to vector<2x8x32xbf16>
    %285 = arith.truncf %282 : vector<2x8x32xf32> to vector<2x8x32xbf16>
    "tpu.trace_start"() <{level = 10 : i32, message = "bqd,bkd->bqk"}> : () -> ()
    %cst_72 = arith.constant dense<0.000000e+00> : vector<2x8x8xf32>
    %286 = tpu.matmul %284, %285, %cst_72 {dimension_numbers = #tpu.dot_dimension_numbers<[2], [2], [1], [1], [0, 0, 0, 1, 1, 1], [0], [0]>} : vector<2x8x32xbf16>, vector<2x8x32xbf16>, vector<2x8x8xf32> -> vector<2x8x8xf32>
    "tpu.trace_stop"() : () -> ()
    %cst_73 = arith.constant dense<0xFF800000> : vector<2x8xf32>
    %287 = vector.multi_reduction <maximumf>, %286, %cst_73 [2] : vector<2x8x8xf32> to vector<2x8xf32>
    %288 = vector.shape_cast %287 : vector<2x8xf32> to vector<2x8x1xf32>
    %289 = vector.broadcast %288 : vector<2x8x1xf32> to vector<2x8x8xf32>
    %290 = arith.subf %286, %289 : vector<2x8x8xf32>
    %291 = math.exp %290 : vector<2x8x8xf32>
    %cst_74 = arith.constant dense<0.000000e+00> : vector<2x8xf32>
    %292 = vector.multi_reduction <add>, %291, %cst_74 [2] : vector<2x8x8xf32> to vector<2x8xf32>
    %293 = vector.shape_cast %292 : vector<2x8xf32> to vector<2x8x1xf32>
    %294 = tpu.reciprocal %293 {approx = true} : vector<2x8x1xf32> -> vector<2x8x1xf32>
    %295 = vector.broadcast %294 : vector<2x8x1xf32> to vector<2x8x8xf32>
    %296 = arith.mulf %291, %295 : vector<2x8x8xf32>
    %297 = arith.truncf %296 : vector<2x8x8xf32> to vector<2x8x8xbf16>
    %298 = arith.truncf %283 : vector<2x8x32xf32> to vector<2x8x32xbf16>
    "tpu.trace_start"() <{level = 10 : i32, message = "bqk,bkd->bqd"}> : () -> ()
    %cst_75 = arith.constant dense<0.000000e+00> : vector<2x8x32xf32>
    %299 = tpu.matmul %297, %298, %cst_75 {dimension_numbers = #tpu.dot_dimension_numbers<[2], [1], [1], [2], [0, 0, 0, 1, 1, 2], [0], [0]>} : vector<2x8x8xbf16>, vector<2x8x32xbf16>, vector<2x8x32xf32> -> vector<2x8x32xf32>
    "tpu.trace_stop"() : () -> ()
    %300 = vector.shape_cast %299 : vector<2x8x32xf32> to vector<16x32xf32>
    %301 = vector.extract_strided_slice %5 {offsets = [1, 0, 0], sizes = [1, 32, 32], strides = [1, 1, 1]} : vector<2x32x32xbf16> to vector<1x32x32xbf16>
    %302 = vector.shape_cast %301 : vector<1x32x32xbf16> to vector<32x32xbf16>
    %303 = arith.truncf %300 : vector<16x32xf32> to vector<16x32xbf16>
    %cst_76 = arith.constant dense<0.000000e+00> : vector<16x32xf32>
    %304 = tpu.matmul %303, %302, %cst_76 {dimension_numbers = #tpu.dot_dimension_numbers<[1], [0], [0], [1], [0, 0, 1, 1], [], []>} : vector<16x32xbf16>, vector<32x32xbf16>, vector<16x32xf32> -> vector<16x32xf32>
    %305 = arith.addf %240, %304 : vector<16x32xf32>
    %306 = vector.extract_strided_slice %18 {offsets = [1, 0], sizes = [1, 32], strides = [1, 1]} : vector<2x32xf32> to vector<1x32xf32>
    %307 = vector.shape_cast %306 : vector<1x32xf32> to vector<32xf32>
    %308 = vector.shape_cast %307 : vector<32xf32> to vector<1x32xf32>
    %309 = vector.broadcast %308 : vector<1x32xf32> to vector<16x32xf32>
    %310 = arith.addf %305, %309 : vector<16x32xf32>
    %311 = vector.extract_strided_slice %14 {offsets = [1, 1, 0], sizes = [1, 1, 32], strides = [1, 1, 1]} : vector<2x3x32xf32> to vector<1x1x32xf32>
    %312 = vector.shape_cast %311 : vector<1x1x32xf32> to vector<32xf32>
    %313 = vector.extract_strided_slice %16 {offsets = [1, 1, 0], sizes = [1, 1, 32], strides = [1, 1, 1]} : vector<2x3x32xf32> to vector<1x1x32xf32>
    %314 = vector.shape_cast %313 : vector<1x1x32xf32> to vector<32xf32>
    %cst_77 = arith.constant dense<0.000000e+00> : vector<16xf32>
    %315 = vector.multi_reduction <add>, %310, %cst_77 [1] : vector<16x32xf32> to vector<16xf32>
    %316 = vector.shape_cast %315 : vector<16xf32> to vector<16x1xf32>
    %cst_78 = arith.constant 3.200000e+01 : f32
    %317 = vector.broadcast %cst_78 : f32 to vector<16x1xf32>
    %318 = arith.divf %316, %317 : vector<16x1xf32>
    %319 = vector.broadcast %318 : vector<16x1xf32> to vector<16x32xf32>
    %320 = arith.subf %310, %319 : vector<16x32xf32>
    %321 = arith.mulf %320, %320 : vector<16x32xf32>
    %cst_79 = arith.constant dense<0.000000e+00> : vector<16xf32>
    %322 = vector.multi_reduction <add>, %321, %cst_79 [1] : vector<16x32xf32> to vector<16xf32>
    %323 = vector.shape_cast %322 : vector<16xf32> to vector<16x1xf32>
    %cst_80 = arith.constant 3.200000e+01 : f32
    %324 = vector.broadcast %cst_80 : f32 to vector<16x1xf32>
    %325 = arith.divf %323, %324 : vector<16x1xf32>
    %326 = vector.broadcast %318 : vector<16x1xf32> to vector<16x32xf32>
    %327 = arith.subf %310, %326 : vector<16x32xf32>
    %cst_81 = arith.constant 9.99999974E-6 : f32
    %328 = vector.broadcast %cst_81 : f32 to vector<16x1xf32>
    %329 = arith.addf %325, %328 : vector<16x1xf32>
    %330 = math.rsqrt %329 : vector<16x1xf32>
    %331 = vector.broadcast %330 : vector<16x1xf32> to vector<16x32xf32>
    %332 = arith.mulf %327, %331 : vector<16x32xf32>
    %333 = vector.shape_cast %312 : vector<32xf32> to vector<1x32xf32>
    %334 = vector.broadcast %333 : vector<1x32xf32> to vector<16x32xf32>
    %335 = arith.mulf %332, %334 : vector<16x32xf32>
    %336 = vector.shape_cast %314 : vector<32xf32> to vector<1x32xf32>
    %337 = vector.broadcast %336 : vector<1x32xf32> to vector<16x32xf32>
    %338 = arith.addf %335, %337 : vector<16x32xf32>
    %339 = vector.extract_strided_slice %6 {offsets = [1, 0, 0], sizes = [1, 32, 32], strides = [1, 1, 1]} : vector<2x32x32xbf16> to vector<1x32x32xbf16>
    %340 = vector.shape_cast %339 : vector<1x32x32xbf16> to vector<32x32xbf16>
    %341 = arith.truncf %338 : vector<16x32xf32> to vector<16x32xbf16>
    %cst_82 = arith.constant dense<0.000000e+00> : vector<16x32xf32>
    %342 = tpu.matmul %341, %340, %cst_82 {dimension_numbers = #tpu.dot_dimension_numbers<[1], [0], [0], [1], [0, 0, 1, 1], [], []>} : vector<16x32xbf16>, vector<32x32xbf16>, vector<16x32xf32> -> vector<16x32xf32>
    %343 = vector.extract_strided_slice %19 {offsets = [1, 0], sizes = [1, 32], strides = [1, 1]} : vector<2x32xf32> to vector<1x32xf32>
    %344 = vector.shape_cast %343 : vector<1x32xf32> to vector<32xf32>
    %345 = vector.shape_cast %344 : vector<32xf32> to vector<1x32xf32>
    %346 = vector.broadcast %345 : vector<1x32xf32> to vector<16x32xf32>
    %347 = arith.addf %342, %346 : vector<16x32xf32>
    %348 = vector.extract_strided_slice %7 {offsets = [1, 0, 0], sizes = [1, 32, 64], strides = [1, 1, 1]} : vector<2x32x64xbf16> to vector<1x32x64xbf16>
    %349 = vector.shape_cast %348 : vector<1x32x64xbf16> to vector<32x64xbf16>
    %cst_83 = arith.constant dense<0.000000e+00> : vector<16x64xf32>
    %350 = tpu.matmul %29, %349, %cst_83 {dimension_numbers = #tpu.dot_dimension_numbers<[1], [0], [0], [1], [0, 0, 1, 1], [], []>} : vector<16x32xbf16>, vector<32x64xbf16>, vector<16x64xf32> -> vector<16x64xf32>
    %351 = vector.extract_strided_slice %20 {offsets = [1, 0], sizes = [1, 64], strides = [1, 1]} : vector<2x64xf32> to vector<1x64xf32>
    %352 = vector.shape_cast %351 : vector<1x64xf32> to vector<64xf32>
    %353 = vector.shape_cast %352 : vector<64xf32> to vector<1x64xf32>
    %354 = vector.broadcast %353 : vector<1x64xf32> to vector<16x64xf32>
    %355 = arith.addf %350, %354 : vector<16x64xf32>
    %356 = vector.extract_strided_slice %355 {offsets = [0, 0], sizes = [16, 32], strides = [1, 1]} : vector<16x64xf32> to vector<16x32xf32>
    %357 = vector.extract_strided_slice %355 {offsets = [0, 32], sizes = [16, 32], strides = [1, 1]} : vector<16x64xf32> to vector<16x32xf32>
    %358 = vector.shape_cast %347 : vector<16x32xf32> to vector<2x8x32xf32>
    %359 = vector.shape_cast %356 : vector<16x32xf32> to vector<2x8x32xf32>
    %360 = vector.shape_cast %357 : vector<16x32xf32> to vector<2x8x32xf32>
    %361 = arith.truncf %358 : vector<2x8x32xf32> to vector<2x8x32xbf16>
    %362 = arith.truncf %359 : vector<2x8x32xf32> to vector<2x8x32xbf16>
    "tpu.trace_start"() <{level = 10 : i32, message = "bqd,bkd->bqk"}> : () -> ()
    %cst_84 = arith.constant dense<0.000000e+00> : vector<2x8x8xf32>
    %363 = tpu.matmul %361, %362, %cst_84 {dimension_numbers = #tpu.dot_dimension_numbers<[2], [2], [1], [1], [0, 0, 0, 1, 1, 1], [0], [0]>} : vector<2x8x32xbf16>, vector<2x8x32xbf16>, vector<2x8x8xf32> -> vector<2x8x8xf32>
    "tpu.trace_stop"() : () -> ()
    %cst_85 = arith.constant dense<0xFF800000> : vector<2x8xf32>
    %364 = vector.multi_reduction <maximumf>, %363, %cst_85 [2] : vector<2x8x8xf32> to vector<2x8xf32>
    %365 = vector.shape_cast %364 : vector<2x8xf32> to vector<2x8x1xf32>
    %366 = vector.broadcast %365 : vector<2x8x1xf32> to vector<2x8x8xf32>
    %367 = arith.subf %363, %366 : vector<2x8x8xf32>
    %368 = math.exp %367 : vector<2x8x8xf32>
    %cst_86 = arith.constant dense<0.000000e+00> : vector<2x8xf32>
    %369 = vector.multi_reduction <add>, %368, %cst_86 [2] : vector<2x8x8xf32> to vector<2x8xf32>
    %370 = vector.shape_cast %369 : vector<2x8xf32> to vector<2x8x1xf32>
    %371 = tpu.reciprocal %370 {approx = true} : vector<2x8x1xf32> -> vector<2x8x1xf32>
    %372 = vector.broadcast %371 : vector<2x8x1xf32> to vector<2x8x8xf32>
    %373 = arith.mulf %368, %372 : vector<2x8x8xf32>
    %374 = arith.truncf %373 : vector<2x8x8xf32> to vector<2x8x8xbf16>
    %375 = arith.truncf %360 : vector<2x8x32xf32> to vector<2x8x32xbf16>
    "tpu.trace_start"() <{level = 10 : i32, message = "bqk,bkd->bqd"}> : () -> ()
    %cst_87 = arith.constant dense<0.000000e+00> : vector<2x8x32xf32>
    %376 = tpu.matmul %374, %375, %cst_87 {dimension_numbers = #tpu.dot_dimension_numbers<[2], [1], [1], [2], [0, 0, 0, 1, 1, 2], [0], [0]>} : vector<2x8x8xbf16>, vector<2x8x32xbf16>, vector<2x8x32xf32> -> vector<2x8x32xf32>
    "tpu.trace_stop"() : () -> ()
    %377 = vector.shape_cast %376 : vector<2x8x32xf32> to vector<16x32xf32>
    %378 = vector.extract_strided_slice %8 {offsets = [1, 0, 0], sizes = [1, 32, 32], strides = [1, 1, 1]} : vector<2x32x32xbf16> to vector<1x32x32xbf16>
    %379 = vector.shape_cast %378 : vector<1x32x32xbf16> to vector<32x32xbf16>
    %380 = arith.truncf %377 : vector<16x32xf32> to vector<16x32xbf16>
    %cst_88 = arith.constant dense<0.000000e+00> : vector<16x32xf32>
    %381 = tpu.matmul %380, %379, %cst_88 {dimension_numbers = #tpu.dot_dimension_numbers<[1], [0], [0], [1], [0, 0, 1, 1], [], []>} : vector<16x32xbf16>, vector<32x32xbf16>, vector<16x32xf32> -> vector<16x32xf32>
    %382 = arith.addf %310, %381 : vector<16x32xf32>
    %383 = vector.extract_strided_slice %21 {offsets = [1, 0], sizes = [1, 32], strides = [1, 1]} : vector<2x32xf32> to vector<1x32xf32>
    %384 = vector.shape_cast %383 : vector<1x32xf32> to vector<32xf32>
    %385 = vector.shape_cast %384 : vector<32xf32> to vector<1x32xf32>
    %386 = vector.broadcast %385 : vector<1x32xf32> to vector<16x32xf32>
    %387 = arith.addf %382, %386 : vector<16x32xf32>
    %388 = vector.extract_strided_slice %14 {offsets = [1, 2, 0], sizes = [1, 1, 32], strides = [1, 1, 1]} : vector<2x3x32xf32> to vector<1x1x32xf32>
    %389 = vector.shape_cast %388 : vector<1x1x32xf32> to vector<32xf32>
    %390 = vector.extract_strided_slice %16 {offsets = [1, 2, 0], sizes = [1, 1, 32], strides = [1, 1, 1]} : vector<2x3x32xf32> to vector<1x1x32xf32>
    %391 = vector.shape_cast %390 : vector<1x1x32xf32> to vector<32xf32>
    %cst_89 = arith.constant dense<0.000000e+00> : vector<16xf32>
    %392 = vector.multi_reduction <add>, %387, %cst_89 [1] : vector<16x32xf32> to vector<16xf32>
    %393 = vector.shape_cast %392 : vector<16xf32> to vector<16x1xf32>
    %cst_90 = arith.constant 3.200000e+01 : f32
    %394 = vector.broadcast %cst_90 : f32 to vector<16x1xf32>
    %395 = arith.divf %393, %394 : vector<16x1xf32>
    %396 = vector.broadcast %395 : vector<16x1xf32> to vector<16x32xf32>
    %397 = arith.subf %387, %396 : vector<16x32xf32>
    %398 = arith.mulf %397, %397 : vector<16x32xf32>
    %cst_91 = arith.constant dense<0.000000e+00> : vector<16xf32>
    %399 = vector.multi_reduction <add>, %398, %cst_91 [1] : vector<16x32xf32> to vector<16xf32>
    %400 = vector.shape_cast %399 : vector<16xf32> to vector<16x1xf32>
    %cst_92 = arith.constant 3.200000e+01 : f32
    %401 = vector.broadcast %cst_92 : f32 to vector<16x1xf32>
    %402 = arith.divf %400, %401 : vector<16x1xf32>
    %403 = vector.broadcast %395 : vector<16x1xf32> to vector<16x32xf32>
    %404 = arith.subf %387, %403 : vector<16x32xf32>
    %cst_93 = arith.constant 9.99999974E-6 : f32
    %405 = vector.broadcast %cst_93 : f32 to vector<16x1xf32>
    %406 = arith.addf %402, %405 : vector<16x1xf32>
    %407 = math.rsqrt %406 : vector<16x1xf32>
    %408 = vector.broadcast %407 : vector<16x1xf32> to vector<16x32xf32>
    %409 = arith.mulf %404, %408 : vector<16x32xf32>
    %410 = vector.shape_cast %389 : vector<32xf32> to vector<1x32xf32>
    %411 = vector.broadcast %410 : vector<1x32xf32> to vector<16x32xf32>
    %412 = arith.mulf %409, %411 : vector<16x32xf32>
    %413 = vector.shape_cast %391 : vector<32xf32> to vector<1x32xf32>
    %414 = vector.broadcast %413 : vector<1x32xf32> to vector<16x32xf32>
    %415 = arith.addf %412, %414 : vector<16x32xf32>
    %416 = vector.extract_strided_slice %9 {offsets = [1, 0, 0], sizes = [1, 32, 64], strides = [1, 1, 1]} : vector<2x32x64xbf16> to vector<1x32x64xbf16>
    %417 = vector.shape_cast %416 : vector<1x32x64xbf16> to vector<32x64xbf16>
    %418 = arith.truncf %415 : vector<16x32xf32> to vector<16x32xbf16>
    %cst_94 = arith.constant dense<0.000000e+00> : vector<16x64xf32>
    %419 = tpu.matmul %418, %417, %cst_94 {dimension_numbers = #tpu.dot_dimension_numbers<[1], [0], [0], [1], [0, 0, 1, 1], [], []>} : vector<16x32xbf16>, vector<32x64xbf16>, vector<16x64xf32> -> vector<16x64xf32>
    %420 = vector.extract_strided_slice %22 {offsets = [1, 0], sizes = [1, 64], strides = [1, 1]} : vector<2x64xf32> to vector<1x64xf32>
    %421 = vector.shape_cast %420 : vector<1x64xf32> to vector<64xf32>
    %422 = vector.shape_cast %421 : vector<64xf32> to vector<1x64xf32>
    %423 = vector.broadcast %422 : vector<1x64xf32> to vector<16x64xf32>
    %424 = arith.addf %419, %423 : vector<16x64xf32>
    %cst_95 = arith.constant 5.000000e-01 : f32
    %425 = vector.broadcast %cst_95 : f32 to vector<16x64xf32>
    %426 = arith.mulf %425, %424 : vector<16x64xf32>
    %cst_96 = arith.constant 4.471500e-02 : f32
    %427 = vector.broadcast %cst_96 : f32 to vector<16x64xf32>
    %428 = arith.mulf %427, %424 : vector<16x64xf32>
    %429 = arith.mulf %428, %424 : vector<16x64xf32>
    %430 = arith.mulf %429, %424 : vector<16x64xf32>
    %431 = arith.addf %424, %430 : vector<16x64xf32>
    %cst_97 = arith.constant 0.797884583 : f32
    %432 = vector.broadcast %cst_97 : f32 to vector<16x64xf32>
    %433 = arith.mulf %432, %431 : vector<16x64xf32>
    %434 = math.tanh %433 : vector<16x64xf32>
    %cst_98 = arith.constant 1.000000e+00 : f32
    %435 = vector.broadcast %cst_98 : f32 to vector<16x64xf32>
    %436 = arith.addf %435, %434 : vector<16x64xf32>
    %437 = arith.mulf %426, %436 : vector<16x64xf32>
    %438 = vector.extract_strided_slice %10 {offsets = [1, 0, 0], sizes = [1, 64, 32], strides = [1, 1, 1]} : vector<2x64x32xbf16> to vector<1x64x32xbf16>
    %439 = vector.shape_cast %438 : vector<1x64x32xbf16> to vector<64x32xbf16>
    %440 = arith.truncf %437 : vector<16x64xf32> to vector<16x64xbf16>
    %cst_99 = arith.constant dense<0.000000e+00> : vector<16x32xf32>
    %441 = tpu.matmul %440, %439, %cst_99 {dimension_numbers = #tpu.dot_dimension_numbers<[1], [0], [0], [1], [0, 0, 1, 1], [], []>} : vector<16x64xbf16>, vector<64x32xbf16>, vector<16x32xf32> -> vector<16x32xf32>
    %442 = arith.addf %387, %441 : vector<16x32xf32>
    %443 = vector.extract_strided_slice %23 {offsets = [1, 0], sizes = [1, 32], strides = [1, 1]} : vector<2x32xf32> to vector<1x32xf32>
    %444 = vector.shape_cast %443 : vector<1x32xf32> to vector<32xf32>
    %445 = vector.shape_cast %444 : vector<32xf32> to vector<1x32xf32>
    %446 = vector.broadcast %445 : vector<1x32xf32> to vector<16x32xf32>
    %447 = arith.addf %442, %446 : vector<16x32xf32>
    %448 = vector.extract_strided_slice %24 {offsets = [0, 0], sizes = [1, 32], strides = [1, 1]} : vector<2x32xf32> to vector<1x32xf32>
    %449 = vector.shape_cast %448 : vector<1x32xf32> to vector<32xf32>
    %450 = vector.extract_strided_slice %24 {offsets = [1, 0], sizes = [1, 32], strides = [1, 1]} : vector<2x32xf32> to vector<1x32xf32>
    %451 = vector.shape_cast %450 : vector<1x32xf32> to vector<32xf32>
    %cst_100 = arith.constant dense<0.000000e+00> : vector<16xf32>
    %452 = vector.multi_reduction <add>, %447, %cst_100 [1] : vector<16x32xf32> to vector<16xf32>
    %453 = vector.shape_cast %452 : vector<16xf32> to vector<16x1xf32>
    %cst_101 = arith.constant 3.200000e+01 : f32
    %454 = vector.broadcast %cst_101 : f32 to vector<16x1xf32>
    %455 = arith.divf %453, %454 : vector<16x1xf32>
    %456 = vector.broadcast %455 : vector<16x1xf32> to vector<16x32xf32>
    %457 = arith.subf %447, %456 : vector<16x32xf32>
    %458 = arith.mulf %457, %457 : vector<16x32xf32>
    %cst_102 = arith.constant dense<0.000000e+00> : vector<16xf32>
    %459 = vector.multi_reduction <add>, %458, %cst_102 [1] : vector<16x32xf32> to vector<16xf32>
    %460 = vector.shape_cast %459 : vector<16xf32> to vector<16x1xf32>
    %cst_103 = arith.constant 3.200000e+01 : f32
    %461 = vector.broadcast %cst_103 : f32 to vector<16x1xf32>
    %462 = arith.divf %460, %461 : vector<16x1xf32>
    %463 = vector.broadcast %455 : vector<16x1xf32> to vector<16x32xf32>
    %464 = arith.subf %447, %463 : vector<16x32xf32>
    %cst_104 = arith.constant 9.99999974E-6 : f32
    %465 = vector.broadcast %cst_104 : f32 to vector<16x1xf32>
    %466 = arith.addf %462, %465 : vector<16x1xf32>
    %467 = math.rsqrt %466 : vector<16x1xf32>
    %468 = vector.broadcast %467 : vector<16x1xf32> to vector<16x32xf32>
    %469 = arith.mulf %464, %468 : vector<16x32xf32>
    %470 = vector.shape_cast %449 : vector<32xf32> to vector<1x32xf32>
    %471 = vector.broadcast %470 : vector<1x32xf32> to vector<16x32xf32>
    %472 = arith.mulf %469, %471 : vector<16x32xf32>
    %473 = vector.shape_cast %451 : vector<32xf32> to vector<1x32xf32>
    %474 = vector.broadcast %473 : vector<1x32xf32> to vector<16x32xf32>
    %475 = arith.addf %472, %474 : vector<16x32xf32>
    %476 = arith.truncf %475 : vector<16x32xf32> to vector<16x32xbf16>
    %cst_105 = arith.constant dense<0.000000e+00> : vector<16x128xf32>
    %477 = tpu.matmul %476, %11, %cst_105 {dimension_numbers = #tpu.dot_dimension_numbers<[1], [0], [0], [1], [0, 0, 1, 1], [], []>} : vector<16x32xbf16>, vector<32x128xbf16>, vector<16x128xf32> -> vector<16x128xf32>
    %478 = vector.broadcast %25 : vector<1x128xf32> to vector<16x128xf32>
    %479 = arith.addf %477, %478 : vector<16x128xf32>
    %c0_106 = arith.constant 0 : index
    %c0_107 = arith.constant 0 : index
    %480 = vector.load %arg13[%c0_106, %c0_107] : memref<16x128xf32, #tpu.memory_space<vmem>>, vector<16x128xf32>
    tpu.vector_store %arg13[%c0_106, %c0_107], %479 {strides = array<i32>} : memref<16x128xf32, #tpu.memory_space<vmem>>, vector<16x128xf32>,
    return
  }
  func.func @transform_0(%arg0: i32) -> (i32, i32, i32) {
    %c0_i32 = arith.constant 0 : i32
    %c0_i32_0 = arith.constant 0 : i32
    %c0_i32_1 = arith.constant 0 : i32
    return %arg0, %c0_i32, %c0_i32_0 : i32, i32, i32
  }
  func.func @transform_1(%arg0: i32) -> (i32, i32, i32) {
    %c0_i32 = arith.constant 0 : i32
    %c0_i32_0 = arith.constant 0 : i32
    %c0_i32_1 = arith.constant 0 : i32
    return %arg0, %c0_i32, %c0_i32_0 : i32, i32, i32
  }
  func.func @transform_2(%arg0: i32) -> (i32, i32, i32) {
    %c0_i32 = arith.constant 0 : i32
    %c0_i32_0 = arith.constant 0 : i32
    %c0_i32_1 = arith.constant 0 : i32
    return %arg0, %c0_i32, %c0_i32_0 : i32, i32, i32
  }
  func.func @transform_3(%arg0: i32) -> (i32, i32) {
    %c0_i32 = arith.constant 0 : i32
    %c0_i32_0 = arith.constant 0 : i32
    %c0_i32_1 = arith.constant 0 : i32
    return %c0_i32, %c0_i32_0 : i32, i32
  }
  func.func @transform_4(%arg0: i32) -> (i32, i32, i32) {
    %c0_i32 = arith.constant 0 : i32
    %c0_i32_0 = arith.constant 0 : i32
    %c0_i32_1 = arith.constant 0 : i32
    %c0_i32_2 = arith.constant 0 : i32
    return %c0_i32, %c0_i32_0, %c0_i32_1 : i32, i32, i32
  }
  func.func @transform_5(%arg0: i32) -> (i32, i32, i32) {
    %c0_i32 = arith.constant 0 : i32
    %c0_i32_0 = arith.constant 0 : i32
    %c0_i32_1 = arith.constant 0 : i32
    %c0_i32_2 = arith.constant 0 : i32
    return %c0_i32, %c0_i32_0, %c0_i32_1 : i32, i32, i32
  }
  func.func @transform_6(%arg0: i32) -> (i32, i32, i32) {
    %c0_i32 = arith.constant 0 : i32
    %c0_i32_0 = arith.constant 0 : i32
    %c0_i32_1 = arith.constant 0 : i32
    %c0_i32_2 = arith.constant 0 : i32
    return %c0_i32, %c0_i32_0, %c0_i32_1 : i32, i32, i32
  }
  func.func @transform_7(%arg0: i32) -> (i32, i32, i32) {
    %c0_i32 = arith.constant 0 : i32
    %c0_i32_0 = arith.constant 0 : i32
    %c0_i32_1 = arith.constant 0 : i32
    %c0_i32_2 = arith.constant 0 : i32
    return %c0_i32, %c0_i32_0, %c0_i32_1 : i32, i32, i32
  }
  func.func @transform_8(%arg0: i32) -> (i32, i32, i32) {
    %c0_i32 = arith.constant 0 : i32
    %c0_i32_0 = arith.constant 0 : i32
    %c0_i32_1 = arith.constant 0 : i32
    %c0_i32_2 = arith.constant 0 : i32
    return %c0_i32, %c0_i32_0, %c0_i32_1 : i32, i32, i32
  }
  func.func @transform_9(%arg0: i32) -> (i32, i32, i32) {
    %c0_i32 = arith.constant 0 : i32
    %c0_i32_0 = arith.constant 0 : i32
    %c0_i32_1 = arith.constant 0 : i32
    %c0_i32_2 = arith.constant 0 : i32
    return %c0_i32, %c0_i32_0, %c0_i32_1 : i32, i32, i32
  }
  func.func @transform_10(%arg0: i32) -> (i32, i32, i32) {
    %c0_i32 = arith.constant 0 : i32
    %c0_i32_0 = arith.constant 0 : i32
    %c0_i32_1 = arith.constant 0 : i32
    %c0_i32_2 = arith.constant 0 : i32
    return %c0_i32, %c0_i32_0, %c0_i32_1 : i32, i32, i32
  }
  func.func @transform_11(%arg0: i32) -> (i32, i32) {
    %c0_i32 = arith.constant 0 : i32
    %c0_i32_0 = arith.constant 0 : i32
    %c0_i32_1 = arith.constant 0 : i32
    return %c0_i32, %c0_i32_0 : i32, i32
  }
  func.func @transform_12(%arg0: i32) -> (i32, i32) {
    %c0_i32 = arith.constant 0 : i32
    %c0_i32_0 = arith.constant 0 : i32
    return %arg0, %c0_i32 : i32, i32
  }
}

</mosaic_0001>

<llo_original>
// kernel: tpu_custom_call.1
$region0: #{tpu_custom_call.1}
  #allocation0 [shape = 'u32[]', space=smem, size = 0x4, offset = 0x4, fixed_abs, tag = 'smem constant byte address 0x4 - core index']
  #allocation1 [shape = 'u32[144,128]{1,0:T(1,128)}', space=vmem, size = 0x12000, scoped, tag = 'internal scratch']
  %s0 = inlined_call_operand.vmem [shape: f32[2,8,32], index: 0, kind: input, shape index: {}]
  %s1 = inlined_call_operand.vmem [shape: f32[2,1,32], index: 1, kind: input, shape index: {}]
  %s2 = inlined_call_operand.hbm [shape: f32[2,8,32], index: 2, kind: input, shape index: {}]
  %s3 = inlined_call_operand.vmem [shape: f32[40,128], index: 3, kind: input, shape index: {}]
  %s4 = inlined_call_operand.vmem [shape: bf16[2,32,96], index: 4, kind: input, shape index: {}]
  %s5 = inlined_call_operand.hbm [shape: bf16[2,32,32], index: 5, kind: input, shape index: {}]
  %s6 = inlined_call_operand.hbm [shape: bf16[2,32,32], index: 6, kind: input, shape index: {}]
  %s7 = inlined_call_operand.hbm [shape: bf16[2,32,64], index: 7, kind: input, shape index: {}]
  %s8 = inlined_call_operand.hbm [shape: bf16[2,32,32], index: 8, kind: input, shape index: {}]
  %s9 = inlined_call_operand.hbm [shape: bf16[2,32,64], index: 9, kind: input, shape index: {}]
  %s10 = inlined_call_operand.vmem [shape: bf16[2,64,32], index: 10, kind: input, shape index: {}]
  %s11 = inlined_call_operand.hbm [shape: bf16[32,128], index: 11, kind: input, shape index: {}]
  %s12 = inlined_call_operand.hbm [shape: f32[16,128], index: 12, kind: output, shape index: {}]
  %s13 = sld [smem:[#allocation0]]
  $region86: #{tpu_custom_call.1} parent=0
    _
  %s15 = ssub.s32 1, %s13
  %s16 = scalar_select 0, %s15, %s13
  $region1: #{tpu_custom_call.1} parent=0
    #allocation2 [shape = 'u8[8192]{0}', space=vmem, size = 0x2000, scoped, tag = 'input window, operand 2, single buffered']
    #allocation3 [shape = 's32[1]{0}', space=sflag, size = 0x4, scoped, tag = 'scoped memory for tpu_custom_call.1']
    #allocation4 [shape = 's32[1]{0}', space=sflag, size = 0x4, scoped, tag = 'scoped memory for tpu_custom_call.1']
    #allocation5 [shape = 'u8[16384]{0}', space=vmem, size = 0x4000, scoped, tag = 'input window, operand 5, single buffered']
    #allocation6 [shape = 's32[1]{0}', space=sflag, size = 0x4, scoped, tag = 'scoped memory for tpu_custom_call.1']
    #allocation7 [shape = 'u8[16384]{0}', space=vmem, size = 0x4000, scoped, tag = 'input window, operand 6, single buffered']
    #allocation8 [shape = 'u8[16384]{0}', space=vmem, size = 0x4000, scoped, tag = 'input window, operand 7, single buffered']
    #allocation9 [shape = 's32[1]{0}', space=sflag, size = 0x4, scoped, tag = 'scoped memory for tpu_custom_call.1']
    #allocation10 [shape = 'u8[16384]{0}', space=vmem, size = 0x4000, scoped, tag = 'input window, operand 8, single buffered']
    #allocation11 [shape = 'u8[16384]{0}', space=vmem, size = 0x4000, scoped, tag = 'input window, operand 9, single buffered']
    #allocation12 [shape = 's32[1]{0}', space=sflag, size = 0x4, scoped, tag = 'scoped memory for tpu_custom_call.1']
    #allocation13 [shape = 'u8[8192]{0}', space=vmem, size = 0x2000, scoped, tag = 'input window, operand 11, single buffered']
    #allocation14 [shape = 'u8[8192]{0}', space=vmem, size = 0x2000, scoped, tag = 'output window, operand 0, single buffered']
    %17 = vsyncpa [#allocation3], 0
    %18 = vsyncpa [#allocation6], 0
    %19 = vsyncpa [#allocation9], 0
    %20 = vsyncpa [#allocation12], 0
    %21 = vsyncpa [#allocation4], 0
    // Predicated region
    $region2: #{tpu_custom_call.1} parent=1 // pred_check
      _
    $region3: #{tpu_custom_call.1} parent=1 // pred_check_branch
      %23 = sbr.rel (0) target = $region5
    $region4: #{tpu_custom_call.1} parent=1 // pred_region
      _
    $region5: #{tpu_custom_call.1} parent=1 // pred_fallthru
      _
    // Predicated region
    $region6: #{tpu_custom_call.1} parent=1 // pred_check
      _
    $region7: #{tpu_custom_call.1} parent=1 // pred_check_branch
      %25 = sbr.rel (0) target = $region9
    $region8: #{tpu_custom_call.1} parent=1 // pred_region
      _
    $region9: #{tpu_custom_call.1} parent=1 // pred_fallthru
      _
    // Predicated region
    $region10: #{tpu_custom_call.1} parent=1 // pred_check
      _
    $region11: #{tpu_custom_call.1} parent=1 // pred_check_branch
      %27 = sbr.rel (0) target = $region13
    $region12: #{tpu_custom_call.1} parent=1 // pred_region
      %s29 = ssub.s32 256, 256
      %30 = vsyncadd [#allocation3], %s29
      %s31 = sshll.u32 [#allocation2], 4
      %s32 = int_to_ptr.vmem [resolvable:$true] %s31
      %37 = dma.hbm_to_vmem [thread:$0]  %s2, 256, %s32, [#allocation3], 128, 128, 8
    $region13: #{tpu_custom_call.1} parent=1 // pred_fallthru
      _
    // Predicated region
    $region14: #{tpu_custom_call.1} parent=1 // pred_check
      _
    $region15: #{tpu_custom_call.1} parent=1 // pred_check_branch
      %39 = sbr.rel (0) target = $region17
    $region16: #{tpu_custom_call.1} parent=1 // pred_region
      _
    $region17: #{tpu_custom_call.1} parent=1 // pred_fallthru
      _
    // Predicated region
    $region18: #{tpu_custom_call.1} parent=1 // pred_check
      _
    $region19: #{tpu_custom_call.1} parent=1 // pred_check_branch
      %41 = sbr.rel (0) target = $region21
    $region20: #{tpu_custom_call.1} parent=1 // pred_region
      _
    $region21: #{tpu_custom_call.1} parent=1 // pred_fallthru
      _
    // Predicated region
    $region22: #{tpu_custom_call.1} parent=1 // pred_check
      _
    $region23: #{tpu_custom_call.1} parent=1 // pred_check_branch
      %43 = sbr.rel (0) target = $region25
    $region24: #{tpu_custom_call.1} parent=1 // pred_region
      %s45 = ssub.s32 512, 512
      %46 = vsyncadd [#allocation6], %s45
      %s47 = sshll.u32 [#allocation5], 4
      %s48 = int_to_ptr.vmem [resolvable:$true] %s47
      %53 = dma.hbm_to_vmem [thread:$0]  %s5, 512, %s48, [#allocation6], 64, 64, 4
    $region25: #{tpu_custom_call.1} parent=1 // pred_fallthru
      _
    // Predicated region
    $region26: #{tpu_custom_call.1} parent=1 // pred_check
      _
    $region27: #{tpu_custom_call.1} parent=1 // pred_check_branch
      %55 = sbr.rel (0) target = $region29
    $region28: #{tpu_custom_call.1} parent=1 // pred_region
      %s57 = ssub.s32 512, 512
      %58 = vsyncadd [#allocation6], %s57
      %s59 = sshll.u32 [#allocation7], 4
      %s60 = int_to_ptr.vmem [resolvable:$true] %s59
      %65 = dma.hbm_to_vmem [thread:$0]  %s6, 512, %s60, [#allocation6], 64, 64, 4
    $region29: #{tpu_custom_call.1} parent=1 // pred_fallthru
      _
    // Predicated region
    $region30: #{tpu_custom_call.1} parent=1 // pred_check
      _
    $region31: #{tpu_custom_call.1} parent=1 // pred_check_branch
      %67 = sbr.rel (0) target = $region33
    $region32: #{tpu_custom_call.1} parent=1 // pred_region
      %s69 = ssub.s32 512, 512
      %70 = vsyncadd [#allocation9], %s69
      %s71 = sshll.u32 [#allocation8], 4
      %s72 = int_to_ptr.vmem [resolvable:$true] %s71
      %77 = dma.hbm_to_vmem [thread:$0]  %s7, 512, %s72, [#allocation9], 64, 64, 4
    $region33: #{tpu_custom_call.1} parent=1 // pred_fallthru
      _
    // Predicated region
    $region34: #{tpu_custom_call.1} parent=1 // pred_check
      _
    $region35: #{tpu_custom_call.1} parent=1 // pred_check_branch
      %79 = sbr.rel (0) target = $region37
    $region36: #{tpu_custom_call.1} parent=1 // pred_region
      %s81 = ssub.s32 512, 512
      %82 = vsyncadd [#allocation9], %s81
      %s83 = sshll.u32 [#allocation10], 4
      %s84 = int_to_ptr.vmem [resolvable:$true] %s83
      %89 = dma.hbm_to_vmem [thread:$0]  %s8, 512, %s84, [#allocation9], 64, 64, 4
    $region37: #{tpu_custom_call.1} parent=1 // pred_fallthru
      _
    // Predicated region
    $region38: #{tpu_custom_call.1} parent=1 // pred_check
      _
    $region39: #{tpu_custom_call.1} parent=1 // pred_check_branch
      %91 = sbr.rel (0) target = $region41
    $region40: #{tpu_custom_call.1} parent=1 // pred_region
      %s93 = ssub.s32 512, 512
      %94 = vsyncadd [#allocation12], %s93
      %s95 = sshll.u32 [#allocation11], 4
      %s96 = int_to_ptr.vmem [resolvable:$true] %s95
      %101 = dma.hbm_to_vmem [thread:$0]  %s9, 512, %s96, [#allocation12], 64, 64, 4
    $region41: #{tpu_custom_call.1} parent=1 // pred_fallthru
      _
    // Predicated region
    $region42: #{tpu_custom_call.1} parent=1 // pred_check
      _
    $region43: #{tpu_custom_call.1} parent=1 // pred_check_branch
      %103 = sbr.rel (0) target = $region45
    $region44: #{tpu_custom_call.1} parent=1 // pred_region
      _
    $region45: #{tpu_custom_call.1} parent=1 // pred_fallthru
      _
    // Predicated region
    $region46: #{tpu_custom_call.1} parent=1 // pred_check
      _
    $region47: #{tpu_custom_call.1} parent=1 // pred_check_branch
      %105 = sbr.rel (0) target = $region49
    $region48: #{tpu_custom_call.1} parent=1 // pred_region
      %s107 = ssub.s32 256, 256
      %108 = vsyncadd [#allocation12], %s107
      %s109 = sshll.u32 [#allocation13], 4
      %s110 = int_to_ptr.vmem [resolvable:$true] %s109
      %115 = dma.hbm_to_vmem [thread:$0]  %s11, 256, %s110, [#allocation12], 64, 64, 4
    $region49: #{tpu_custom_call.1} parent=1 // pred_fallthru
      _
    // Predicated region
    $region50: #{tpu_custom_call.1} parent=1 // pred_check
      _
    $region51: #{tpu_custom_call.1} parent=1 // pred_check_branch
      %117 = sbr.rel (0) target = $region53
    $region52: #{tpu_custom_call.1} parent=1 // pred_region
      %118 = dma.done [#allocation3], 256
    $region53: #{tpu_custom_call.1} parent=1 // pred_fallthru
      _
    // Predicated region
    $region54: #{tpu_custom_call.1} parent=1 // pred_check
      _
    $region55: #{tpu_custom_call.1} parent=1 // pred_check_branch
      %120 = sbr.rel (0) target = $region57
    $region56: #{tpu_custom_call.1} parent=1 // pred_region
      %121 = dma.done [#allocation6], 512
    $region57: #{tpu_custom_call.1} parent=1 // pred_fallthru
      _
    // Predicated region
    $region58: #{tpu_custom_call.1} parent=1 // pred_check
      _
    $region59: #{tpu_custom_call.1} parent=1 // pred_check_branch
      %123 = sbr.rel (0) target = $region61
    $region60: #{tpu_custom_call.1} parent=1 // pred_region
      %124 = dma.done [#allocation6], 512
    $region61: #{tpu_custom_call.1} parent=1 // pred_fallthru
      _
    // Predicated region
    $region62: #{tpu_custom_call.1} parent=1 // pred_check
      _
    $region63: #{tpu_custom_call.1} parent=1 // pred_check_branch
      %126 = sbr.rel (0) target = $region65
    $region64: #{tpu_custom_call.1} parent=1 // pred_region
      %127 = dma.done [#allocation9], 512
    $region65: #{tpu_custom_call.1} parent=1 // pred_fallthru
      _
    // Predicated region
    $region66: #{tpu_custom_call.1} parent=1 // pred_check
      _
    $region67: #{tpu_custom_call.1} parent=1 // pred_check_branch
      %129 = sbr.rel (0) target = $region69
    $region68: #{tpu_custom_call.1} parent=1 // pred_region
      %130 = dma.done [#allocation9], 512
    $region69: #{tpu_custom_call.1} parent=1 // pred_fallthru
      _
    // Predicated region
    $region70: #{tpu_custom_call.1} parent=1 // pred_check
      _
    $region71: #{tpu_custom_call.1} parent=1 // pred_check_branch
      %132 = sbr.rel (0) target = $region73
    $region72: #{tpu_custom_call.1} parent=1 // pred_region
      %133 = dma.done [#allocation12], 512
    $region73: #{tpu_custom_call.1} parent=1 // pred_fallthru
      _
    // Predicated region
    $region74: #{tpu_custom_call.1} parent=1 // pred_check
      _
    $region75: #{tpu_custom_call.1} parent=1 // pred_check_branch
      %135 = sbr.rel (0) target = $region77
    $region76: #{tpu_custom_call.1} parent=1 // pred_region
      %136 = dma.done [#allocation12], 256
    $region77: #{tpu_custom_call.1} parent=1 // pred_fallthru
      _
    %v138 = vld [vmem:[%s0] sm:$0xff]
    %v139 = vld [vmem:[%s0 + $0x8] sm:$0xff]
    %v140 = vld [vmem:[%s1] sm:$0x1]
    %v141 = vld [vmem:[%s1 + $0x1] sm:$0x1]
    %v142 = vld [vmem:[#allocation2] sm:$0xff]
    %v143 = vld [vmem:[#allocation2 + $0x8] sm:$0xff]
    %v144 = vld [vmem:[%s3] sm:$0xff]
    %v145 = vld [vmem:[%s3 + $0x8] sm:$0xff]
    %v146 = vld [vmem:[%s3 + $0x10] sm:$0xff]
    %v147 = vld [vmem:[%s3 + $0x18] sm:$0xff]
    %v148 = vld [vmem:[%s3 + $0x20] sm:$0xff]
    %v149 = vld [vmem:[%s4] sm:$0xf]
    %v150 = vld [vmem:[%s4 + $0x4] sm:$0xf]
    %v151 = vld [vmem:[%s4 + $0x8] sm:$0xf]
    %v152 = vld [vmem:[%s4 + $0xc] sm:$0xf]
    %v153 = vld [vmem:[%s4 + $0x10] sm:$0xf]
    %v154 = vld [vmem:[%s4 + $0x14] sm:$0xf]
    %v155 = vld [vmem:[%s4 + $0x18] sm:$0xf]
    %v156 = vld [vmem:[%s4 + $0x1c] sm:$0xf]
    %v157 = vld [vmem:[#allocation5] sm:$0xf]
    %v158 = vld [vmem:[#allocation5 + $0x4] sm:$0xf]
    %v159 = vld [vmem:[#allocation5 + $0x8] sm:$0xf]
    %v160 = vld [vmem:[#allocation5 + $0xc] sm:$0xf]
    %v161 = vld [vmem:[#allocation5 + $0x10] sm:$0xf]
    %v162 = vld [vmem:[#allocation5 + $0x14] sm:$0xf]
    %v163 = vld [vmem:[#allocation5 + $0x18] sm:$0xf]
    %v164 = vld [vmem:[#allocation5 + $0x1c] sm:$0xf]
    %v165 = vld [vmem:[#allocation7] sm:$0xf]
    %v166 = vld [vmem:[#allocation7 + $0x4] sm:$0xf]
    %v167 = vld [vmem:[#allocation7 + $0x8] sm:$0xf]
    %v168 = vld [vmem:[#allocation7 + $0xc] sm:$0xf]
    %v169 = vld [vmem:[#allocation7 + $0x10] sm:$0xf]
    %v170 = vld [vmem:[#allocation7 + $0x14] sm:$0xf]
    %v171 = vld [vmem:[#allocation7 + $0x18] sm:$0xf]
    %v172 = vld [vmem:[#allocation7 + $0x1c] sm:$0xf]
    %v173 = vld [vmem:[#allocation8] sm:$0xf]
    %v174 = vld [vmem:[#allocation8 + $0x4] sm:$0xf]
    %v175 = vld [vmem:[#allocation8 + $0x8] sm:$0xf]
    %v176 = vld [vmem:[#allocation8 + $0xc] sm:$0xf]
    %v177 = vld [vmem:[#allocation8 + $0x10] sm:$0xf]
    %v178 = vld [vmem:[#allocation8 + $0x14] sm:$0xf]
    %v179 = vld [vmem:[#allocation8 + $0x18] sm:$0xf]
    %v180 = vld [vmem:[#allocation8 + $0x1c] sm:$0xf]
    %v181 = vld [vmem:[#allocation10] sm:$0xf]
    %v182 = vld [vmem:[#allocation10 + $0x4] sm:$0xf]
    %v183 = vld [vmem:[#allocation10 + $0x8] sm:$0xf]
    %v184 = vld [vmem:[#allocation10 + $0xc] sm:$0xf]
    %v185 = vld [vmem:[#allocation10 + $0x10] sm:$0xf]
    %v186 = vld [vmem:[#allocation10 + $0x14] sm:$0xf]
    %v187 = vld [vmem:[#allocation10 + $0x18] sm:$0xf]
    %v188 = vld [vmem:[#allocation10 + $0x1c] sm:$0xf]
    %v189 = vld [vmem:[#allocation11] sm:$0xf]
    %v190 = vld [vmem:[#allocation11 + $0x4] sm:$0xf]
    %v191 = vld [vmem:[#allocation11 + $0x8] sm:$0xf]
    %v192 = vld [vmem:[#allocation11 + $0xc] sm:$0xf]
    %v193 = vld [vmem:[#allocation11 + $0x10] sm:$0xf]
    %v194 = vld [vmem:[#allocation11 + $0x14] sm:$0xf]
    %v195 = vld [vmem:[#allocation11 + $0x18] sm:$0xf]
    %v196 = vld [vmem:[#allocation11 + $0x1c] sm:$0xf]
    %v197 = vld [vmem:[%s10] sm:$0xf]
    %v198 = vld [vmem:[%s10 + $0x4] sm:$0xf]
    %v199 = vld [vmem:[%s10 + $0x8] sm:$0xf]
    %v200 = vld [vmem:[%s10 + $0xc] sm:$0xf]
    %v201 = vld [vmem:[%s10 + $0x10] sm:$0xf]
    %v202 = vld [vmem:[%s10 + $0x14] sm:$0xf]
    %v203 = vld [vmem:[%s10 + $0x18] sm:$0xf]
    %v204 = vld [vmem:[%s10 + $0x1c] sm:$0xf]
    %v205 = vld [vmem:[%s10 + $0x20] sm:$0xf]
    %v206 = vld [vmem:[%s10 + $0x24] sm:$0xf]
    %v207 = vld [vmem:[%s10 + $0x28] sm:$0xf]
    %v208 = vld [vmem:[%s10 + $0x2c] sm:$0xf]
    %v209 = vld [vmem:[%s10 + $0x30] sm:$0xf]
    %v210 = vld [vmem:[%s10 + $0x34] sm:$0xf]
    %v211 = vld [vmem:[%s10 + $0x38] sm:$0xf]
    %v212 = vld [vmem:[%s10 + $0x3c] sm:$0xf]
    %v213 = vld [vmem:[#allocation13] sm:$0xf]
    %v214 = vld [vmem:[#allocation13 + $0x4] sm:$0xf]
    %v215 = vld [vmem:[#allocation13 + $0x8] sm:$0xf]
    %v216 = vld [vmem:[#allocation13 + $0xc] sm:$0xf]
    %v219 = vlaneseq
    %v220 = vshrl.u32 %v219, 7
    %v221 = vsub.s32 0, %v220
    %v222 = vrot.slane %v140, %v221
    %v223 = vlaneseq
    %v224 = vshrl.u32 %v223, 7
    %v225 = vsub.s32 0, %v224
    %v226 = vrot.slane %v141, %v225
    %v229 = vadd.f32 %v222, %v142
    %v230 = vadd.f32 %v226, %v143
    %v231 = vpack.c.bf16 %v230, %v229
    %v232 = vadd.f32 %v138, %v144
    %v233 = vadd.f32 %v139, %v144
    %vm234 = vcmask 261120
    %v235 = vsel %vm234, %v232, 0.0
    %236 = vadd.xlane.f32.xlu0 %v235
    %v237 = vpop.xlane.xlu0 %236
    %v238 = vsel %vm234, %v233, 0.0
    %239 = vadd.xlane.f32.xlu0 %v238
    %v240 = vpop.xlane.xlu0 %239
    %v241 = vrcp.pop 32.0
    %v242 = vmul.f32 %v237, %v241
    %v243 = vmul.f32 %v240, %v241
    %v244 = vsub.f32 %v232, %v242
    %v245 = vsub.f32 %v233, %v243
    %v246 = vmul.f32 %v244, %v244
    %v247 = vmul.f32 %v245, %v245
    %v248 = vsel %vm234, %v246, 0.0
    %249 = vadd.xlane.f32.xlu0 %v248
    %v250 = vpop.xlane.xlu0 %249
    %v251 = vsel %vm234, %v247, 0.0
    %252 = vadd.xlane.f32.xlu0 %v251
    %v253 = vpop.xlane.xlu0 %252
    %v254 = vmul.f32 %v250, %v241
    %v255 = vmul.f32 %v253, %v241
    %v256 = vadd.f32 %v254, 1e-05
    %v257 = vadd.f32 %v255, 1e-05
    %v258 = vrsqrt.pop %v256
    %v259 = vrsqrt.pop %v257
    %v260 = vmul.f32 %v244, %v258
    %v261 = vmul.f32 %v245, %v259
    %v262 = vlaneseq
    %v263 = vshrl.u32 %v262, 7
    %v264 = vsub.s32 0, %v263
    %v265 = vrot.slane %v145, %v264
    %v266 = vmul.f32 %v260, %v265
    %v267 = vmul.f32 %v261, %v265
    %v268 = vlaneseq
    %v269 = vshrl.u32 %v268, 7
    %v270 = vsub.s32 6, %v269
    %v271 = vrot.slane %v145, %v270
    %v272 = vadd.f32 %v266, %v271
    %v273 = vadd.f32 %v267, %v271
    %v274 = vpack.c.bf16 %v273, %v272
    %v275 = vlaneseq
    %v276 = vshrl.u32 %v275, 7
    %v277 = vsub.s32 4, %v276
    %v278 = vrot.slane %v146, %v277
    %v283 = vunpack.c.l.b16 %v149
    %v284 = vunpack.c.l.b16 %v150
    %v285 = vunpack.c.l.b16 %v151
    %v286 = vunpack.c.l.b16 %v152
    %v287 = vpack.c.b16 %v284, %v283
    %v288 = vpack.c.b16 %v286, %v285
    %v292 = vsel %vm234, %v274, 0
    %294 = vmatprep.subr.bf16.mxu0 0
    %295 = vmatpush1.bf16.msra.mxu0 %v287
    %296 = vmatprep.subr.bf16.mxu0 0
    %297 = vmatpush1.bf16.msra.mxu0 %v288
    %298 = vmatprep.subr.bf16.mxu0 0
    %299 = vmatpush1.bf16.msra.mxu0 0
    %300 = vmatprep.subr.bf16.mxu0 0
    %301 = vmatpush1.bf16.msra.mxu0 0
    %302 = vmatprep.subr.bf16.mxu0 0
    %303 = vmatpush1.bf16.msra.mxu0 0
    %304 = vmatprep.subr.bf16.mxu0 0
    %305 = vmatpush1.bf16.msra.mxu0 0
    %306 = vmatprep.subr.bf16.mxu0 0
    %307 = vmatpush1.bf16.msra.mxu0 0
    %308 = vmatprep.subr.bf16.mxu0 0
    %309 = vmatpush1.bf16.msra.mxu0 0
    %310 = vmatprep.subr.bf16.mxu0 0
    %311 = vmatpush1.bf16.msra.mxu0 0
    %312 = vmatprep.subr.bf16.mxu0 0
    %313 = vmatpush1.bf16.msra.mxu0 0
    %314 = vmatprep.subr.bf16.mxu0 0
    %315 = vmatpush1.bf16.msra.mxu0 0
    %316 = vmatprep.subr.bf16.mxu0 0
    %317 = vmatpush1.bf16.msra.mxu0 0
    %318 = vmatprep.subr.bf16.mxu0 0
    %319 = vmatpush1.bf16.msra.mxu0 0
    %320 = vmatprep.subr.bf16.mxu0 0
    %321 = vmatpush1.bf16.msra.mxu0 0
    %322 = vmatprep.subr.bf16.mxu0 0
    %323 = vmatpush1.bf16.msra.mxu0 0
    %324 = vmatprep.subr.bf16.mxu0 0
    %325 = vmatpush1.bf16.msra.mxu0 0
    %326 = vmatprep.mubr.bf16.mxu0 0
    %327 = vmatmul.mubr.bf16.gmra.mrb[0].mxu0 %v292
    %v328 = vpop.f32.mrb[0].mxu0
    %v329 = vadd.f32 %v278, %v328
    %v330 = vpop.f32.mrb[0].mxu0
    %v331 = vpop.f32.mrb[0].mxu0
    %v332 = vadd.f32 %v278, %v331
    %v333 = vpop.f32.mrb[0].mxu0
    %334 = vdwg.mxu0
    %v335 = vpack.c.bf16 %v329, %v329
    %v336 = vpack.c.bf16 %v332, %v332
    %338 = vrot.lane.b32.xlu0 %v335, 96
    %v339 = vpop.permute.xlu0 %338
    %v341 = vsel %vm234, %v335, 0
    %v344 = vsel %vm234, %v339, 0
    %346 = vmatprep.subr.bf16.mxu0 0
    %347 = vmatpush1.bf16.xpose.msra.mxu0 %v344
    %348 = vmatprep.subr.bf16.mxu0 0
    %349 = vmatpush1.bf16.xpose.msra.mxu0 0
    %350 = vmatprep.subr.bf16.mxu0 0
    %351 = vmatpush1.bf16.xpose.msra.mxu0 0
    %352 = vmatprep.subr.bf16.mxu0 0
    %353 = vmatpush1.bf16.xpose.msra.mxu0 0
    %354 = vmatprep.subr.bf16.mxu0 0
    %355 = vmatpush1.bf16.xpose.msra.mxu0 0
    %356 = vmatprep.subr.bf16.mxu0 0
    %357 = vmatpush1.bf16.xpose.msra.mxu0 0
    %358 = vmatprep.subr.bf16.mxu0 0
    %359 = vmatpush1.bf16.xpose.msra.mxu0 0
    %360 = vmatprep.subr.bf16.mxu0 0
    %361 = vmatpush1.bf16.xpose.msra.mxu0 0
    %362 = vmatprep.subr.bf16.mxu0 0
    %363 = vmatpush1.bf16.xpose.msra.mxu0 0
    %364 = vmatprep.subr.bf16.mxu0 0
    %365 = vmatpush1.bf16.xpose.msra.mxu0 0
    %366 = vmatprep.subr.bf16.mxu0 0
    %367 = vmatpush1.bf16.xpose.msra.mxu0 0
    %368 = vmatprep.subr.bf16.mxu0 0
    %369 = vmatpush1.bf16.xpose.msra.mxu0 0
    %370 = vmatprep.subr.bf16.mxu0 0
    %371 = vmatpush1.bf16.xpose.msra.mxu0 0
    %372 = vmatprep.subr.bf16.mxu0 0
    %373 = vmatpush1.bf16.xpose.msra.mxu0 0
    %374 = vmatprep.subr.bf16.mxu0 0
    %375 = vmatpush1.bf16.xpose.msra.mxu0 0
    %376 = vmatprep.subr.bf16.mxu0 0
    %377 = vmatpush1.bf16.xpose.msra.mxu0 0
    %378 = vmatprep.mubr.bf16.mxu0 0
    %379 = vmatmul.mubr.bf16.gmra.mrb[0].mxu0 %v341
    %v380 = vpop.f32.mrb[0].mxu0
    %v381 = vadd.f32 0.0, %v380
    %v382 = vpop.f32.mrb[0].mxu0
    %v383 = vpop.f32.mrb[0].mxu0
    %v384 = vpop.f32.mrb[0].mxu0
    %385 = vdwg.mxu0
    %387 = vrot.lane.b32.xlu0 %v336, 96
    %v388 = vpop.permute.xlu0 %387
    %v390 = vsel %vm234, %v336, 0
    %v393 = vsel %vm234, %v388, 0
    %395 = vmatprep.subr.bf16.mxu0 0
    %396 = vmatpush1.bf16.xpose.msra.mxu0 %v393
    %397 = vmatprep.subr.bf16.mxu0 0
    %398 = vmatpush1.bf16.xpose.msra.mxu0 0
    %399 = vmatprep.subr.bf16.mxu0 0
    %400 = vmatpush1.bf16.xpose.msra.mxu0 0
    %401 = vmatprep.subr.bf16.mxu0 0
    %402 = vmatpush1.bf16.xpose.msra.mxu0 0
    %403 = vmatprep.subr.bf16.mxu0 0
    %404 = vmatpush1.bf16.xpose.msra.mxu0 0
    %405 = vmatprep.subr.bf16.mxu0 0
    %406 = vmatpush1.bf16.xpose.msra.mxu0 0
    %407 = vmatprep.subr.bf16.mxu0 0
    %408 = vmatpush1.bf16.xpose.msra.mxu0 0
    %409 = vmatprep.subr.bf16.mxu0 0
    %410 = vmatpush1.bf16.xpose.msra.mxu0 0
    %411 = vmatprep.subr.bf16.mxu0 0
    %412 = vmatpush1.bf16.xpose.msra.mxu0 0
    %413 = vmatprep.subr.bf16.mxu0 0
    %414 = vmatpush1.bf16.xpose.msra.mxu0 0
    %415 = vmatprep.subr.bf16.mxu0 0
    %416 = vmatpush1.bf16.xpose.msra.mxu0 0
    %417 = vmatprep.subr.bf16.mxu0 0
    %418 = vmatpush1.bf16.xpose.msra.mxu0 0
    %419 = vmatprep.subr.bf16.mxu0 0
    %420 = vmatpush1.bf16.xpose.msra.mxu0 0
    %421 = vmatprep.subr.bf16.mxu0 0
    %422 = vmatpush1.bf16.xpose.msra.mxu0 0
    %423 = vmatprep.subr.bf16.mxu0 0
    %424 = vmatpush1.bf16.xpose.msra.mxu0 0
    %425 = vmatprep.subr.bf16.mxu0 0
    %426 = vmatpush1.bf16.xpose.msra.mxu0 0
    %427 = vmatprep.mubr.bf16.mxu0 0
    %428 = vmatmul.mubr.bf16.gmra.mrb[0].mxu0 %v390
    %v429 = vpop.f32.mrb[0].mxu0
    %v430 = vadd.f32 0.0, %v429
    %v431 = vpop.f32.mrb[0].mxu0
    %v432 = vpop.f32.mrb[0].mxu0
    %v433 = vpop.f32.mrb[0].mxu0
    %434 = vdwg.mxu0
    %vm435 = vcmask 64512
    %v436 = vsel %vm435, %v381, -inf
    %437 = vmax.xlane.f32.xlu0 %v436
    %v438 = vpop.xlane.xlu0 %437
    %v439 = vsel %vm435, %v430, -inf
    %440 = vmax.xlane.f32.xlu0 %v439
    %v441 = vpop.xlane.xlu0 %440
    %v442 = vsub.f32 %v381, %v438
    %v443 = vsub.f32 %v430, %v441
    %v444 = vmul.f32 %v442, 1.442695
    %v445 = vpow.pop %v444
    %v446 = vmul.f32 %v443, 1.442695
    %v447 = vpow.pop %v446
    %v448 = vsel %vm435, %v445, 0.0
    %449 = vadd.xlane.f32.xlu0 %v448
    %v450 = vpop.xlane.xlu0 %449
    %v451 = vsel %vm435, %v447, 0.0
    %452 = vadd.xlane.f32.xlu0 %v451
    %v453 = vpop.xlane.xlu0 %452
    %v454 = vrcp.pop %v450
    %v455 = vrcp.pop %v453
    %v456 = vmul.f32 %v445, %v454
    %v457 = vmul.f32 %v447, %v455
    %v458 = vpack.c.bf16 %v456, %v456
    %v459 = vpack.c.bf16 %v457, %v457
    %460 = vrot.lane.b32.xlu0 %v335, 64
    %v461 = vpop.permute.xlu0 %460
    %v463 = vsel %vm435, %v458, 0
    %vm465 = vcmask 1043456
    %v467 = vsel %vm465, %v461, 0
    %469 = vmatprep.subr.bf16.mxu0 0
    %470 = vmatpush1.bf16.msra.mxu0 %v467
    %471 = vmatprep.subr.bf16.mxu0 0
    %472 = vmatpush1.bf16.msra.mxu0 0
    %473 = vmatprep.subr.bf16.mxu0 0
    %474 = vmatpush1.bf16.msra.mxu0 0
    %475 = vmatprep.subr.bf16.mxu0 0
    %476 = vmatpush1.bf16.msra.mxu0 0
    %477 = vmatprep.subr.bf16.mxu0 0
    %478 = vmatpush1.bf16.msra.mxu0 0
    %479 = vmatprep.subr.bf16.mxu0 0
    %480 = vmatpush1.bf16.msra.mxu0 0
    %481 = vmatprep.subr.bf16.mxu0 0
    %482 = vmatpush1.bf16.msra.mxu0 0
    %483 = vmatprep.subr.bf16.mxu0 0
    %484 = vmatpush1.bf16.msra.mxu0 0
    %485 = vmatprep.subr.bf16.mxu0 0
    %486 = vmatpush1.bf16.msra.mxu0 0
    %487 = vmatprep.subr.bf16.mxu0 0
    %488 = vmatpush1.bf16.msra.mxu0 0
    %489 = vmatprep.subr.bf16.mxu0 0
    %490 = vmatpush1.bf16.msra.mxu0 0
    %491 = vmatprep.subr.bf16.mxu0 0
    %492 = vmatpush1.bf16.msra.mxu0 0
    %493 = vmatprep.subr.bf16.mxu0 0
    %494 = vmatpush1.bf16.msra.mxu0 0
    %495 = vmatprep.subr.bf16.mxu0 0
    %496 = vmatpush1.bf16.msra.mxu0 0
    %497 = vmatprep.subr.bf16.mxu0 0
    %498 = vmatpush1.bf16.msra.mxu0 0
    %499 = vmatprep.subr.bf16.mxu0 0
    %500 = vmatpush1.bf16.msra.mxu0 0
    %501 = vmatprep.mubr.bf16.mxu0 0
    %502 = vmatmul.mubr.bf16.gmra.mrb[0].mxu0 %v463
    %v503 = vpop.f32.mrb[0].mxu0
    %v504 = vadd.f32 0.0, %v503
    %v505 = vpop.f32.mrb[0].mxu0
    %v506 = vpop.f32.mrb[0].mxu0
    %v507 = vpop.f32.mrb[0].mxu0
    %508 = vdwg.mxu0
    %509 = vrot.lane.b32.xlu0 %v336, 64
    %v510 = vpop.permute.xlu0 %509
    %v512 = vsel %vm435, %v459, 0
    %v515 = vsel %vm465, %v510, 0
    %517 = vmatprep.subr.bf16.mxu0 0
    %518 = vmatpush1.bf16.msra.mxu0 %v515
    %519 = vmatprep.subr.bf16.mxu0 0
    %520 = vmatpush1.bf16.msra.mxu0 0
    %521 = vmatprep.subr.bf16.mxu0 0
    %522 = vmatpush1.bf16.msra.mxu0 0
    %523 = vmatprep.subr.bf16.mxu0 0
    %524 = vmatpush1.bf16.msra.mxu0 0
    %525 = vmatprep.subr.bf16.mxu0 0
    %526 = vmatpush1.bf16.msra.mxu0 0
    %527 = vmatprep.subr.bf16.mxu0 0
    %528 = vmatpush1.bf16.msra.mxu0 0
    %529 = vmatprep.subr.bf16.mxu0 0
    %530 = vmatpush1.bf16.msra.mxu0 0
    %531 = vmatprep.subr.bf16.mxu0 0
    %532 = vmatpush1.bf16.msra.mxu0 0
    %533 = vmatprep.subr.bf16.mxu0 0
    %534 = vmatpush1.bf16.msra.mxu0 0
    %535 = vmatprep.subr.bf16.mxu0 0
    %536 = vmatpush1.bf16.msra.mxu0 0
    %537 = vmatprep.subr.bf16.mxu0 0
    %538 = vmatpush1.bf16.msra.mxu0 0
    %539 = vmatprep.subr.bf16.mxu0 0
    %540 = vmatpush1.bf16.msra.mxu0 0
    %541 = vmatprep.subr.bf16.mxu0 0
    %542 = vmatpush1.bf16.msra.mxu0 0
    %543 = vmatprep.subr.bf16.mxu0 0
    %544 = vmatpush1.bf16.msra.mxu0 0
    %545 = vmatprep.subr.bf16.mxu0 0
    %546 = vmatpush1.bf16.msra.mxu0 0
    %547 = vmatprep.subr.bf16.mxu0 0
    %548 = vmatpush1.bf16.msra.mxu0 0
    %549 = vmatprep.mubr.bf16.mxu0 0
    %550 = vmatmul.mubr.bf16.gmra.mrb[0].mxu0 %v512
    %v551 = vpop.f32.mrb[0].mxu0
    %v552 = vadd.f32 0.0, %v551
    %v553 = vpop.f32.mrb[0].mxu0
    %v554 = vpop.f32.mrb[0].mxu0
    %v555 = vpop.f32.mrb[0].mxu0
    %556 = vdwg.mxu0
    %v557 = vpack.c.bf16 %v552, %v504
    %v562 = vunpack.c.l.b16 %v157
    %v563 = vunpack.c.l.b16 %v158
    %v564 = vunpack.c.l.b16 %v159
    %v565 = vunpack.c.l.b16 %v160
    %v566 = vpack.c.b16 %v563, %v562
    %v567 = vpack.c.b16 %v565, %v564
    %v571 = vsel %vm234, %v557, 0
    %573 = vmatprep.subr.bf16.mxu0 0
    %574 = vmatpush1.bf16.msra.mxu0 %v566
    %575 = vmatprep.subr.bf16.mxu0 0
    %576 = vmatpush1.bf16.msra.mxu0 %v567
    %577 = vmatprep.subr.bf16.mxu0 0
    %578 = vmatpush1.bf16.msra.mxu0 0
    %579 = vmatprep.subr.bf16.mxu0 0
    %580 = vmatpush1.bf16.msra.mxu0 0
    %581 = vmatprep.subr.bf16.mxu0 0
    %582 = vmatpush1.bf16.msra.mxu0 0
    %583 = vmatprep.subr.bf16.mxu0 0
    %584 = vmatpush1.bf16.msra.mxu0 0
    %585 = vmatprep.subr.bf16.mxu0 0
    %586 = vmatpush1.bf16.msra.mxu0 0
    %587 = vmatprep.subr.bf16.mxu0 0
    %588 = vmatpush1.bf16.msra.mxu0 0
    %589 = vmatprep.subr.bf16.mxu0 0
    %590 = vmatpush1.bf16.msra.mxu0 0
    %591 = vmatprep.subr.bf16.mxu0 0
    %592 = vmatpush1.bf16.msra.mxu0 0
    %593 = vmatprep.subr.bf16.mxu0 0
    %594 = vmatpush1.bf16.msra.mxu0 0
    %595 = vmatprep.subr.bf16.mxu0 0
    %596 = vmatpush1.bf16.msra.mxu0 0
    %597 = vmatprep.subr.bf16.mxu0 0
    %598 = vmatpush1.bf16.msra.mxu0 0
    %599 = vmatprep.subr.bf16.mxu0 0
    %600 = vmatpush1.bf16.msra.mxu0 0
    %601 = vmatprep.subr.bf16.mxu0 0
    %602 = vmatpush1.bf16.msra.mxu0 0
    %603 = vmatprep.subr.bf16.mxu0 0
    %604 = vmatpush1.bf16.msra.mxu0 0
    %605 = vmatprep.mubr.bf16.mxu0 0
    %606 = vmatmul.mubr.bf16.gmra.mrb[0].mxu0 %v571
    %v607 = vpop.f32.mrb[0].mxu0
    %v608 = vadd.f32 0.0, %v607
    %v609 = vpop.f32.mrb[0].mxu0
    %v610 = vpop.f32.mrb[0].mxu0
    %v611 = vadd.f32 0.0, %v610
    %v612 = vpop.f32.mrb[0].mxu0
    %613 = vdwg.mxu0
    %v614 = vadd.f32 %v232, %v608
    %v615 = vadd.f32 %v233, %v611
    %v616 = vlaneseq
    %v617 = vshrl.u32 %v616, 7
    %v618 = vsub.s32 6, %v617
    %v619 = vrot.slane %v146, %v618
    %v620 = vadd.f32 %v614, %v619
    %v621 = vadd.f32 %v615, %v619
    %v622 = vsel %vm234, %v620, 0.0
    %623 = vadd.xlane.f32.xlu0 %v622
    %v624 = vpop.xlane.xlu0 %623
    %v625 = vsel %vm234, %v621, 0.0
    %626 = vadd.xlane.f32.xlu0 %v625
    %v627 = vpop.xlane.xlu0 %626
    %v628 = vmul.f32 %v624, %v241
    %v629 = vmul.f32 %v627, %v241
    %v630 = vsub.f32 %v620, %v628
    %v631 = vsub.f32 %v621, %v629
    %v632 = vmul.f32 %v630, %v630
    %v633 = vmul.f32 %v631, %v631
    %v634 = vsel %vm234, %v632, 0.0
    %635 = vadd.xlane.f32.xlu0 %v634
    %v636 = vpop.xlane.xlu0 %635
    %v637 = vsel %vm234, %v633, 0.0
    %638 = vadd.xlane.f32.xlu0 %v637
    %v639 = vpop.xlane.xlu0 %638
    %v640 = vmul.f32 %v636, %v241
    %v641 = vmul.f32 %v639, %v241
    %v642 = vadd.f32 %v640, 1e-05
    %v643 = vadd.f32 %v641, 1e-05
    %v644 = vrsqrt.pop %v642
    %v645 = vrsqrt.pop %v643
    %v646 = vmul.f32 %v630, %v644
    %v647 = vmul.f32 %v631, %v645
    %v648 = vlaneseq
    %v649 = vshrl.u32 %v648, 7
    %v650 = vsub.s32 1, %v649
    %v651 = vrot.slane %v145, %v650
    %v652 = vmul.f32 %v646, %v651
    %v653 = vmul.f32 %v647, %v651
    %v654 = vlaneseq
    %v655 = vshrl.u32 %v654, 7
    %v656 = vsub.s32 7, %v655
    %v657 = vrot.slane %v145, %v656
    %v658 = vadd.f32 %v652, %v657
    %v659 = vadd.f32 %v653, %v657
    %v660 = vpack.c.bf16 %v659, %v658
    %v661 = vlaneseq
    %v662 = vshrl.u32 %v661, 7
    %v663 = vsub.s32 0, %v662
    %v664 = vrot.slane %v147, %v663
    %v669 = vunpack.c.l.b16 %v165
    %v670 = vunpack.c.l.b16 %v166
    %v671 = vunpack.c.l.b16 %v167
    %v672 = vunpack.c.l.b16 %v168
    %v673 = vpack.c.b16 %v670, %v669
    %v674 = vpack.c.b16 %v672, %v671
    %v678 = vsel %vm234, %v660, 0
    %680 = vmatprep.subr.bf16.mxu0 0
    %681 = vmatpush1.bf16.msra.mxu0 %v673
    %682 = vmatprep.subr.bf16.mxu0 0
    %683 = vmatpush1.bf16.msra.mxu0 %v674
    %684 = vmatprep.subr.bf16.mxu0 0
    %685 = vmatpush1.bf16.msra.mxu0 0
    %686 = vmatprep.subr.bf16.mxu0 0
    %687 = vmatpush1.bf16.msra.mxu0 0
    %688 = vmatprep.subr.bf16.mxu0 0
    %689 = vmatpush1.bf16.msra.mxu0 0
    %690 = vmatprep.subr.bf16.mxu0 0
    %691 = vmatpush1.bf16.msra.mxu0 0
    %692 = vmatprep.subr.bf16.mxu0 0
    %693 = vmatpush1.bf16.msra.mxu0 0
    %694 = vmatprep.subr.bf16.mxu0 0
    %695 = vmatpush1.bf16.msra.mxu0 0
    %696 = vmatprep.subr.bf16.mxu0 0
    %697 = vmatpush1.bf16.msra.mxu0 0
    %698 = vmatprep.subr.bf16.mxu0 0
    %699 = vmatpush1.bf16.msra.mxu0 0
    %700 = vmatprep.subr.bf16.mxu0 0
    %701 = vmatpush1.bf16.msra.mxu0 0
    %702 = vmatprep.subr.bf16.mxu0 0
    %703 = vmatpush1.bf16.msra.mxu0 0
    %704 = vmatprep.subr.bf16.mxu0 0
    %705 = vmatpush1.bf16.msra.mxu0 0
    %706 = vmatprep.subr.bf16.mxu0 0
    %707 = vmatpush1.bf16.msra.mxu0 0
    %708 = vmatprep.subr.bf16.mxu0 0
    %709 = vmatpush1.bf16.msra.mxu0 0
    %710 = vmatprep.subr.bf16.mxu0 0
    %711 = vmatpush1.bf16.msra.mxu0 0
    %712 = vmatprep.mubr.bf16.mxu0 0
    %713 = vmatmul.mubr.bf16.gmra.mrb[0].mxu0 %v678
    %v714 = vpop.f32.mrb[0].mxu0
    %v715 = vadd.f32 %v664, %v714
    %v716 = vpop.f32.mrb[0].mxu0
    %v717 = vpop.f32.mrb[0].mxu0
    %v718 = vadd.f32 %v664, %v717
    %v719 = vpop.f32.mrb[0].mxu0
    %720 = vdwg.mxu0
    %v721 = vlaneseq
    %v722 = vshrl.u32 %v721, 7
    %v723 = vsub.s32 2, %v722
    %v724 = vrot.slane %v147, %v723
    %v729 = vunpack.c.l.b16 %v173
    %v730 = vunpack.c.l.b16 %v174
    %v731 = vunpack.c.l.b16 %v175
    %v732 = vunpack.c.l.b16 %v176
    %v733 = vpack.c.b16 %v730, %v729
    %v734 = vpack.c.b16 %v732, %v731
    %v738 = vsel %vm234, %v231, 0
    %740 = vmatprep.subr.bf16.mxu0 0
    %741 = vmatpush1.bf16.msra.mxu0 %v733
    %742 = vmatprep.subr.bf16.mxu0 0
    %743 = vmatpush1.bf16.msra.mxu0 %v734
    %744 = vmatprep.subr.bf16.mxu0 0
    %745 = vmatpush1.bf16.msra.mxu0 0
    %746 = vmatprep.subr.bf16.mxu0 0
    %747 = vmatpush1.bf16.msra.mxu0 0
    %748 = vmatprep.subr.bf16.mxu0 0
    %749 = vmatpush1.bf16.msra.mxu0 0
    %750 = vmatprep.subr.bf16.mxu0 0
    %751 = vmatpush1.bf16.msra.mxu0 0
    %752 = vmatprep.subr.bf16.mxu0 0
    %753 = vmatpush1.bf16.msra.mxu0 0
    %754 = vmatprep.subr.bf16.mxu0 0
    %755 = vmatpush1.bf16.msra.mxu0 0
    %756 = vmatprep.subr.bf16.mxu0 0
    %757 = vmatpush1.bf16.msra.mxu0 0
    %758 = vmatprep.subr.bf16.mxu0 0
    %759 = vmatpush1.bf16.msra.mxu0 0
    %760 = vmatprep.subr.bf16.mxu0 0
    %761 = vmatpush1.bf16.msra.mxu0 0
    %762 = vmatprep.subr.bf16.mxu0 0
    %763 = vmatpush1.bf16.msra.mxu0 0
    %764 = vmatprep.subr.bf16.mxu0 0
    %765 = vmatpush1.bf16.msra.mxu0 0
    %766 = vmatprep.subr.bf16.mxu0 0
    %767 = vmatpush1.bf16.msra.mxu0 0
    %768 = vmatprep.subr.bf16.mxu0 0
    %769 = vmatpush1.bf16.msra.mxu0 0
    %770 = vmatprep.subr.bf16.mxu0 0
    %771 = vmatpush1.bf16.msra.mxu0 0
    %772 = vmatprep.mubr.bf16.mxu0 0
    %773 = vmatmul.mubr.bf16.gmra.mrb[0].mxu0 %v738
    %v774 = vpop.f32.mrb[0].mxu0
    %v775 = vadd.f32 %v724, %v774
    %v776 = vpop.f32.mrb[0].mxu0
    %v777 = vpop.f32.mrb[0].mxu0
    %v778 = vadd.f32 %v724, %v777
    %v779 = vpop.f32.mrb[0].mxu0
    %780 = vdwg.mxu0
    %v781 = vpack.c.bf16 %v715, %v715
    %v782 = vpack.c.bf16 %v718, %v718
    %v783 = vpack.c.bf16 %v775, %v775
    %v784 = vpack.c.bf16 %v778, %v778
    %v786 = vsel %vm234, %v781, 0
    %v789 = vsel %vm234, %v783, 0
    %791 = vmatprep.subr.bf16.mxu0 0
    %792 = vmatpush1.bf16.xpose.msra.mxu0 %v789
    %793 = vmatprep.subr.bf16.mxu0 0
    %794 = vmatpush1.bf16.xpose.msra.mxu0 0
    %795 = vmatprep.subr.bf16.mxu0 0
    %796 = vmatpush1.bf16.xpose.msra.mxu0 0
    %797 = vmatprep.subr.bf16.mxu0 0
    %798 = vmatpush1.bf16.xpose.msra.mxu0 0
    %799 = vmatprep.subr.bf16.mxu0 0
    %800 = vmatpush1.bf16.xpose.msra.mxu0 0
    %801 = vmatprep.subr.bf16.mxu0 0
    %802 = vmatpush1.bf16.xpose.msra.mxu0 0
    %803 = vmatprep.subr.bf16.mxu0 0
    %804 = vmatpush1.bf16.xpose.msra.mxu0 0
    %805 = vmatprep.subr.bf16.mxu0 0
    %806 = vmatpush1.bf16.xpose.msra.mxu0 0
    %807 = vmatprep.subr.bf16.mxu0 0
    %808 = vmatpush1.bf16.xpose.msra.mxu0 0
    %809 = vmatprep.subr.bf16.mxu0 0
    %810 = vmatpush1.bf16.xpose.msra.mxu0 0
    %811 = vmatprep.subr.bf16.mxu0 0
    %812 = vmatpush1.bf16.xpose.msra.mxu0 0
    %813 = vmatprep.subr.bf16.mxu0 0
    %814 = vmatpush1.bf16.xpose.msra.mxu0 0
    %815 = vmatprep.subr.bf16.mxu0 0
    %816 = vmatpush1.bf16.xpose.msra.mxu0 0
    %817 = vmatprep.subr.bf16.mxu0 0
    %818 = vmatpush1.bf16.xpose.msra.mxu0 0
    %819 = vmatprep.subr.bf16.mxu0 0
    %820 = vmatpush1.bf16.xpose.msra.mxu0 0
    %821 = vmatprep.subr.bf16.mxu0 0
    %822 = vmatpush1.bf16.xpose.msra.mxu0 0
    %823 = vmatprep.mubr.bf16.mxu0 0
    %824 = vmatmul.mubr.bf16.gmra.mrb[0].mxu0 %v786
    %v825 = vpop.f32.mrb[0].mxu0
    %v826 = vadd.f32 0.0, %v825
    %v827 = vpop.f32.mrb[0].mxu0
    %v828 = vpop.f32.mrb[0].mxu0
    %v829 = vpop.f32.mrb[0].mxu0
    %830 = vdwg.mxu0
    %v832 = vsel %vm234, %v782, 0
    %v835 = vsel %vm234, %v784, 0
    %837 = vmatprep.subr.bf16.mxu0 0
    %838 = vmatpush1.bf16.xpose.msra.mxu0 %v835
    %839 = vmatprep.subr.bf16.mxu0 0
    %840 = vmatpush1.bf16.xpose.msra.mxu0 0
    %841 = vmatprep.subr.bf16.mxu0 0
    %842 = vmatpush1.bf16.xpose.msra.mxu0 0
    %843 = vmatprep.subr.bf16.mxu0 0
    %844 = vmatpush1.bf16.xpose.msra.mxu0 0
    %845 = vmatprep.subr.bf16.mxu0 0
    %846 = vmatpush1.bf16.xpose.msra.mxu0 0
    %847 = vmatprep.subr.bf16.mxu0 0
    %848 = vmatpush1.bf16.xpose.msra.mxu0 0
    %849 = vmatprep.subr.bf16.mxu0 0
    %850 = vmatpush1.bf16.xpose.msra.mxu0 0
    %851 = vmatprep.subr.bf16.mxu0 0
    %852 = vmatpush1.bf16.xpose.msra.mxu0 0
    %853 = vmatprep.subr.bf16.mxu0 0
    %854 = vmatpush1.bf16.xpose.msra.mxu0 0
    %855 = vmatprep.subr.bf16.mxu0 0
    %856 = vmatpush1.bf16.xpose.msra.mxu0 0
    %857 = vmatprep.subr.bf16.mxu0 0
    %858 = vmatpush1.bf16.xpose.msra.mxu0 0
    %859 = vmatprep.subr.bf16.mxu0 0
    %860 = vmatpush1.bf16.xpose.msra.mxu0 0
    %861 = vmatprep.subr.bf16.mxu0 0
    %862 = vmatpush1.bf16.xpose.msra.mxu0 0
    %863 = vmatprep.subr.bf16.mxu0 0
    %864 = vmatpush1.bf16.xpose.msra.mxu0 0
    %865 = vmatprep.subr.bf16.mxu0 0
    %866 = vmatpush1.bf16.xpose.msra.mxu0 0
    %867 = vmatprep.subr.bf16.mxu0 0
    %868 = vmatpush1.bf16.xpose.msra.mxu0 0
    %869 = vmatprep.mubr.bf16.mxu0 0
    %870 = vmatmul.mubr.bf16.gmra.mrb[0].mxu0 %v832
    %v871 = vpop.f32.mrb[0].mxu0
    %v872 = vadd.f32 0.0, %v871
    %v873 = vpop.f32.mrb[0].mxu0
    %v874 = vpop.f32.mrb[0].mxu0
    %v875 = vpop.f32.mrb[0].mxu0
    %876 = vdwg.mxu0
    %v877 = vsel %vm435, %v826, -inf
    %878 = vmax.xlane.f32.xlu0 %v877
    %v879 = vpop.xlane.xlu0 %878
    %v880 = vsel %vm435, %v872, -inf
    %881 = vmax.xlane.f32.xlu0 %v880
    %v882 = vpop.xlane.xlu0 %881
    %v883 = vsub.f32 %v826, %v879
    %v884 = vsub.f32 %v872, %v882
    %v885 = vmul.f32 %v883, 1.442695
    %v886 = vpow.pop %v885
    %v887 = vmul.f32 %v884, 1.442695
    %v888 = vpow.pop %v887
    %v889 = vsel %vm435, %v886, 0.0
    %890 = vadd.xlane.f32.xlu0 %v889
    %v891 = vpop.xlane.xlu0 %890
    %v892 = vsel %vm435, %v888, 0.0
    %893 = vadd.xlane.f32.xlu0 %v892
    %v894 = vpop.xlane.xlu0 %893
    %v895 = vrcp.pop %v891
    %v896 = vrcp.pop %v894
    %v897 = vmul.f32 %v886, %v895
    %v898 = vmul.f32 %v888, %v896
    %v899 = vpack.c.bf16 %v897, %v897
    %v900 = vpack.c.bf16 %v898, %v898
    %902 = vrot.lane.b32.xlu0 %v783, 96
    %v903 = vpop.permute.xlu0 %902
    %v905 = vsel %vm435, %v899, 0
    %v908 = vsel %vm465, %v903, 0
    %910 = vmatprep.subr.bf16.mxu0 0
    %911 = vmatpush1.bf16.msra.mxu0 %v908
    %912 = vmatprep.subr.bf16.mxu0 0
    %913 = vmatpush1.bf16.msra.mxu0 0
    %914 = vmatprep.subr.bf16.mxu0 0
    %915 = vmatpush1.bf16.msra.mxu0 0
    %916 = vmatprep.subr.bf16.mxu0 0
    %917 = vmatpush1.bf16.msra.mxu0 0
    %918 = vmatprep.subr.bf16.mxu0 0
    %919 = vmatpush1.bf16.msra.mxu0 0
    %920 = vmatprep.subr.bf16.mxu0 0
    %921 = vmatpush1.bf16.msra.mxu0 0
    %922 = vmatprep.subr.bf16.mxu0 0
    %923 = vmatpush1.bf16.msra.mxu0 0
    %924 = vmatprep.subr.bf16.mxu0 0
    %925 = vmatpush1.bf16.msra.mxu0 0
    %926 = vmatprep.subr.bf16.mxu0 0
    %927 = vmatpush1.bf16.msra.mxu0 0
    %928 = vmatprep.subr.bf16.mxu0 0
    %929 = vmatpush1.bf16.msra.mxu0 0
    %930 = vmatprep.subr.bf16.mxu0 0
    %931 = vmatpush1.bf16.msra.mxu0 0
    %932 = vmatprep.subr.bf16.mxu0 0
    %933 = vmatpush1.bf16.msra.mxu0 0
    %934 = vmatprep.subr.bf16.mxu0 0
    %935 = vmatpush1.bf16.msra.mxu0 0
    %936 = vmatprep.subr.bf16.mxu0 0
    %937 = vmatpush1.bf16.msra.mxu0 0
    %938 = vmatprep.subr.bf16.mxu0 0
    %939 = vmatpush1.bf16.msra.mxu0 0
    %940 = vmatprep.subr.bf16.mxu0 0
    %941 = vmatpush1.bf16.msra.mxu0 0
    %942 = vmatprep.mubr.bf16.mxu0 0
    %943 = vmatmul.mubr.bf16.gmra.mrb[0].mxu0 %v905
    %v944 = vpop.f32.mrb[0].mxu0
    %v945 = vadd.f32 0.0, %v944
    %v946 = vpop.f32.mrb[0].mxu0
    %v947 = vpop.f32.mrb[0].mxu0
    %v948 = vpop.f32.mrb[0].mxu0
    %949 = vdwg.mxu0
    %951 = vrot.lane.b32.xlu0 %v784, 96
    %v952 = vpop.permute.xlu0 %951
    %v954 = vsel %vm435, %v900, 0
    %v957 = vsel %vm465, %v952, 0
    %959 = vmatprep.subr.bf16.mxu0 0
    %960 = vmatpush1.bf16.msra.mxu0 %v957
    %961 = vmatprep.subr.bf16.mxu0 0
    %962 = vmatpush1.bf16.msra.mxu0 0
    %963 = vmatprep.subr.bf16.mxu0 0
    %964 = vmatpush1.bf16.msra.mxu0 0
    %965 = vmatprep.subr.bf16.mxu0 0
    %966 = vmatpush1.bf16.msra.mxu0 0
    %967 = vmatprep.subr.bf16.mxu0 0
    %968 = vmatpush1.bf16.msra.mxu0 0
    %969 = vmatprep.subr.bf16.mxu0 0
    %970 = vmatpush1.bf16.msra.mxu0 0
    %971 = vmatprep.subr.bf16.mxu0 0
    %972 = vmatpush1.bf16.msra.mxu0 0
    %973 = vmatprep.subr.bf16.mxu0 0
    %974 = vmatpush1.bf16.msra.mxu0 0
    %975 = vmatprep.subr.bf16.mxu0 0
    %976 = vmatpush1.bf16.msra.mxu0 0
    %977 = vmatprep.subr.bf16.mxu0 0
    %978 = vmatpush1.bf16.msra.mxu0 0
    %979 = vmatprep.subr.bf16.mxu0 0
    %980 = vmatpush1.bf16.msra.mxu0 0
    %981 = vmatprep.subr.bf16.mxu0 0
    %982 = vmatpush1.bf16.msra.mxu0 0
    %983 = vmatprep.subr.bf16.mxu0 0
    %984 = vmatpush1.bf16.msra.mxu0 0
    %985 = vmatprep.subr.bf16.mxu0 0
    %986 = vmatpush1.bf16.msra.mxu0 0
    %987 = vmatprep.subr.bf16.mxu0 0
    %988 = vmatpush1.bf16.msra.mxu0 0
    %989 = vmatprep.subr.bf16.mxu0 0
    %990 = vmatpush1.bf16.msra.mxu0 0
    %991 = vmatprep.mubr.bf16.mxu0 0
    %992 = vmatmul.mubr.bf16.gmra.mrb[0].mxu0 %v954
    %v993 = vpop.f32.mrb[0].mxu0
    %v994 = vadd.f32 0.0, %v993
    %v995 = vpop.f32.mrb[0].mxu0
    %v996 = vpop.f32.mrb[0].mxu0
    %v997 = vpop.f32.mrb[0].mxu0
    %998 = vdwg.mxu0
    %v999 = vpack.c.bf16 %v994, %v945
    %v1004 = vunpack.c.l.b16 %v181
    %v1005 = vunpack.c.l.b16 %v182
    %v1006 = vunpack.c.l.b16 %v183
    %v1007 = vunpack.c.l.b16 %v184
    %v1008 = vpack.c.b16 %v1005, %v1004
    %v1009 = vpack.c.b16 %v1007, %v1006
    %v1013 = vsel %vm234, %v999, 0
    %1015 = vmatprep.subr.bf16.mxu0 0
    %1016 = vmatpush1.bf16.msra.mxu0 %v1008
    %1017 = vmatprep.subr.bf16.mxu0 0
    %1018 = vmatpush1.bf16.msra.mxu0 %v1009
    %1019 = vmatprep.subr.bf16.mxu0 0
    %1020 = vmatpush1.bf16.msra.mxu0 0
    %1021 = vmatprep.subr.bf16.mxu0 0
    %1022 = vmatpush1.bf16.msra.mxu0 0
    %1023 = vmatprep.subr.bf16.mxu0 0
    %1024 = vmatpush1.bf16.msra.mxu0 0
    %1025 = vmatprep.subr.bf16.mxu0 0
    %1026 = vmatpush1.bf16.msra.mxu0 0
    %1027 = vmatprep.subr.bf16.mxu0 0
    %1028 = vmatpush1.bf16.msra.mxu0 0
    %1029 = vmatprep.subr.bf16.mxu0 0
    %1030 = vmatpush1.bf16.msra.mxu0 0
    %1031 = vmatprep.subr.bf16.mxu0 0
    %1032 = vmatpush1.bf16.msra.mxu0 0
    %1033 = vmatprep.subr.bf16.mxu0 0
    %1034 = vmatpush1.bf16.msra.mxu0 0
    %1035 = vmatprep.subr.bf16.mxu0 0
    %1036 = vmatpush1.bf16.msra.mxu0 0
    %1037 = vmatprep.subr.bf16.mxu0 0
    %1038 = vmatpush1.bf16.msra.mxu0 0
    %1039 = vmatprep.subr.bf16.mxu0 0
    %1040 = vmatpush1.bf16.msra.mxu0 0
    %1041 = vmatprep.subr.bf16.mxu0 0
    %1042 = vmatpush1.bf16.msra.mxu0 0
    %1043 = vmatprep.subr.bf16.mxu0 0
    %1044 = vmatpush1.bf16.msra.mxu0 0
    %1045 = vmatprep.subr.bf16.mxu0 0
    %1046 = vmatpush1.bf16.msra.mxu0 0
    %1047 = vmatprep.mubr.bf16.mxu0 0
    %1048 = vmatmul.mubr.bf16.gmra.mrb[0].mxu0 %v1013
    %v1049 = vpop.f32.mrb[0].mxu0
    %v1050 = vadd.f32 0.0, %v1049
    %v1051 = vpop.f32.mrb[0].mxu0
    %v1052 = vpop.f32.mrb[0].mxu0
    %v1053 = vadd.f32 0.0, %v1052
    %v1054 = vpop.f32.mrb[0].mxu0
    %1055 = vdwg.mxu0
    %v1056 = vadd.f32 %v620, %v1050
    %v1057 = vadd.f32 %v621, %v1053
    %v1058 = vlaneseq
    %v1059 = vshrl.u32 %v1058, 7
    %v1060 = vsub.s32 4, %v1059
    %v1061 = vrot.slane %v147, %v1060
    %v1062 = vadd.f32 %v1056, %v1061
    %v1063 = vadd.f32 %v1057, %v1061
    %v1064 = vsel %vm234, %v1062, 0.0
    %1065 = vadd.xlane.f32.xlu0 %v1064
    %v1066 = vpop.xlane.xlu0 %1065
    %v1067 = vsel %vm234, %v1063, 0.0
    %1068 = vadd.xlane.f32.xlu0 %v1067
    %v1069 = vpop.xlane.xlu0 %1068
    %v1070 = vmul.f32 %v1066, %v241
    %v1071 = vmul.f32 %v1069, %v241
    %v1072 = vsub.f32 %v1062, %v1070
    %v1073 = vsub.f32 %v1063, %v1071
    %v1074 = vmul.f32 %v1072, %v1072
    %v1075 = vmul.f32 %v1073, %v1073
    %v1076 = vsel %vm234, %v1074, 0.0
    %1077 = vadd.xlane.f32.xlu0 %v1076
    %v1078 = vpop.xlane.xlu0 %1077
    %v1079 = vsel %vm234, %v1075, 0.0
    %1080 = vadd.xlane.f32.xlu0 %v1079
    %v1081 = vpop.xlane.xlu0 %1080
    %v1082 = vmul.f32 %v1078, %v241
    %v1083 = vmul.f32 %v1081, %v241
    %v1084 = vadd.f32 %v1082, 1e-05
    %v1085 = vadd.f32 %v1083, 1e-05
    %v1086 = vrsqrt.pop %v1084
    %v1087 = vrsqrt.pop %v1085
    %v1088 = vmul.f32 %v1072, %v1086
    %v1089 = vmul.f32 %v1073, %v1087
    %v1090 = vlaneseq
    %v1091 = vshrl.u32 %v1090, 7
    %v1092 = vsub.s32 2, %v1091
    %v1093 = vrot.slane %v145, %v1092
    %v1094 = vmul.f32 %v1088, %v1093
    %v1095 = vmul.f32 %v1089, %v1093
    %v1096 = vlaneseq
    %v1097 = vshrl.u32 %v1096, 7
    %v1098 = vsub.s32 0, %v1097
    %v1099 = vrot.slane %v146, %v1098
    %v1100 = vadd.f32 %v1094, %v1099
    %v1101 = vadd.f32 %v1095, %v1099
    %v1102 = vpack.c.bf16 %v1101, %v1100
    %v1103 = vlaneseq
    %v1104 = vshrl.u32 %v1103, 7
    %v1105 = vsub.s32 6, %v1104
    %v1106 = vrot.slane %v147, %v1105
    %v1111 = vunpack.c.l.b16 %v189
    %v1112 = vunpack.c.l.b16 %v190
    %v1113 = vunpack.c.l.b16 %v191
    %v1114 = vunpack.c.l.b16 %v192
    %v1115 = vpack.c.b16 %v1112, %v1111
    %v1116 = vpack.c.b16 %v1114, %v1113
    %v1120 = vsel %vm234, %v1102, 0
    %1122 = vmatprep.subr.bf16.mxu0 0
    %1123 = vmatpush1.bf16.msra.mxu0 %v1115
    %1124 = vmatprep.subr.bf16.mxu0 0
    %1125 = vmatpush1.bf16.msra.mxu0 %v1116
    %1126 = vmatprep.subr.bf16.mxu0 0
    %1127 = vmatpush1.bf16.msra.mxu0 0
    %1128 = vmatprep.subr.bf16.mxu0 0
    %1129 = vmatpush1.bf16.msra.mxu0 0
    %1130 = vmatprep.subr.bf16.mxu0 0
    %1131 = vmatpush1.bf16.msra.mxu0 0
    %1132 = vmatprep.subr.bf16.mxu0 0
    %1133 = vmatpush1.bf16.msra.mxu0 0
    %1134 = vmatprep.subr.bf16.mxu0 0
    %1135 = vmatpush1.bf16.msra.mxu0 0
    %1136 = vmatprep.subr.bf16.mxu0 0
    %1137 = vmatpush1.bf16.msra.mxu0 0
    %1138 = vmatprep.subr.bf16.mxu0 0
    %1139 = vmatpush1.bf16.msra.mxu0 0
    %1140 = vmatprep.subr.bf16.mxu0 0
    %1141 = vmatpush1.bf16.msra.mxu0 0
    %1142 = vmatprep.subr.bf16.mxu0 0
    %1143 = vmatpush1.bf16.msra.mxu0 0
    %1144 = vmatprep.subr.bf16.mxu0 0
    %1145 = vmatpush1.bf16.msra.mxu0 0
    %1146 = vmatprep.subr.bf16.mxu0 0
    %1147 = vmatpush1.bf16.msra.mxu0 0
    %1148 = vmatprep.subr.bf16.mxu0 0
    %1149 = vmatpush1.bf16.msra.mxu0 0
    %1150 = vmatprep.subr.bf16.mxu0 0
    %1151 = vmatpush1.bf16.msra.mxu0 0
    %1152 = vmatprep.subr.bf16.mxu0 0
    %1153 = vmatpush1.bf16.msra.mxu0 0
    %1154 = vmatprep.mubr.bf16.mxu0 0
    %1155 = vmatmul.mubr.bf16.gmra.mrb[0].mxu0 %v1120
    %v1156 = vpop.f32.mrb[0].mxu0
    %v1157 = vadd.f32 %v1106, %v1156
    %v1158 = vpop.f32.mrb[0].mxu0
    %v1159 = vpop.f32.mrb[0].mxu0
    %v1160 = vadd.f32 %v1106, %v1159
    %v1161 = vpop.f32.mrb[0].mxu0
    %1162 = vdwg.mxu0
    %v1163 = vmul.f32 %v1157, 0.5
    %v1164 = vmul.f32 %v1160, 0.5
    %v1165 = vmul.f32 %v1157, 0.044715
    %v1166 = vmul.f32 %v1160, 0.044715
    %v1167 = vmul.f32 %v1165, %v1157
    %v1168 = vmul.f32 %v1166, %v1160
    %v1169 = vmul.f32 %v1167, %v1157
    %v1170 = vmul.f32 %v1168, %v1160
    %v1171 = vadd.f32 %v1157, %v1169
    %v1172 = vadd.f32 %v1160, %v1170
    %v1173 = vmul.f32 %v1171, 0.7978846
    %v1174 = vmul.f32 %v1172, 0.7978846
    %v1175 = vtanh.pop %v1173
    %v1176 = vtanh.pop %v1174
    %v1177 = vadd.f32 %v1175, 1.0
    %v1178 = vadd.f32 %v1176, 1.0
    %v1179 = vmul.f32 %v1163, %v1177
    %v1180 = vmul.f32 %v1164, %v1178
    %v1181 = vpack.c.bf16 %v1180, %v1179
    %v1190 = vunpack.c.l.b16 %v197
    %v1191 = vunpack.c.l.b16 %v198
    %v1192 = vunpack.c.l.b16 %v199
    %v1193 = vunpack.c.l.b16 %v200
    %v1194 = vunpack.c.l.b16 %v201
    %v1195 = vunpack.c.l.b16 %v202
    %v1196 = vunpack.c.l.b16 %v203
    %v1197 = vunpack.c.l.b16 %v204
    %v1198 = vpack.c.b16 %v1191, %v1190
    %v1199 = vpack.c.b16 %v1193, %v1192
    %v1200 = vpack.c.b16 %v1195, %v1194
    %v1201 = vpack.c.b16 %v1197, %v1196
    %vm1206 = vcmask 523264
    %v1208 = vsel %vm1206, %v1181, 0
    %1210 = vmatprep.subr.bf16.mxu0 0
    %1211 = vmatpush1.bf16.msra.mxu0 %v1198
    %1212 = vmatprep.subr.bf16.mxu0 0
    %1213 = vmatpush1.bf16.msra.mxu0 %v1199
    %1214 = vmatprep.subr.bf16.mxu0 0
    %1215 = vmatpush1.bf16.msra.mxu0 %v1200
    %1216 = vmatprep.subr.bf16.mxu0 0
    %1217 = vmatpush1.bf16.msra.mxu0 %v1201
    %1218 = vmatprep.subr.bf16.mxu0 0
    %1219 = vmatpush1.bf16.msra.mxu0 0
    %1220 = vmatprep.subr.bf16.mxu0 0
    %1221 = vmatpush1.bf16.msra.mxu0 0
    %1222 = vmatprep.subr.bf16.mxu0 0
    %1223 = vmatpush1.bf16.msra.mxu0 0
    %1224 = vmatprep.subr.bf16.mxu0 0
    %1225 = vmatpush1.bf16.msra.mxu0 0
    %1226 = vmatprep.subr.bf16.mxu0 0
    %1227 = vmatpush1.bf16.msra.mxu0 0
    %1228 = vmatprep.subr.bf16.mxu0 0
    %1229 = vmatpush1.bf16.msra.mxu0 0
    %1230 = vmatprep.subr.bf16.mxu0 0
    %1231 = vmatpush1.bf16.msra.mxu0 0
    %1232 = vmatprep.subr.bf16.mxu0 0
    %1233 = vmatpush1.bf16.msra.mxu0 0
    %1234 = vmatprep.subr.bf16.mxu0 0
    %1235 = vmatpush1.bf16.msra.mxu0 0
    %1236 = vmatprep.subr.bf16.mxu0 0
    %1237 = vmatpush1.bf16.msra.mxu0 0
    %1238 = vmatprep.subr.bf16.mxu0 0
    %1239 = vmatpush1.bf16.msra.mxu0 0
    %1240 = vmatprep.subr.bf16.mxu0 0
    %1241 = vmatpush1.bf16.msra.mxu0 0
    %1242 = vmatprep.mubr.bf16.mxu0 0
    %1243 = vmatmul.mubr.bf16.gmra.mrb[0].mxu0 %v1208
    %v1244 = vpop.f32.mrb[0].mxu0
    %v1245 = vadd.f32 0.0, %v1244
    %v1246 = vpop.f32.mrb[0].mxu0
    %v1247 = vpop.f32.mrb[0].mxu0
    %v1248 = vadd.f32 0.0, %v1247
    %v1249 = vpop.f32.mrb[0].mxu0
    %1250 = vdwg.mxu0
    %v1251 = vadd.f32 %v1062, %v1245
    %v1252 = vadd.f32 %v1063, %v1248
    %v1253 = vlaneseq
    %v1254 = vshrl.u32 %v1253, 7
    %v1255 = vsub.s32 0, %v1254
    %v1256 = vrot.slane %v148, %v1255
    %v1257 = vadd.f32 %v1251, %v1256
    %v1258 = vadd.f32 %v1252, %v1256
    %v1259 = vsel %vm234, %v1257, 0.0
    %1260 = vadd.xlane.f32.xlu0 %v1259
    %v1261 = vpop.xlane.xlu0 %1260
    %v1262 = vsel %vm234, %v1258, 0.0
    %1263 = vadd.xlane.f32.xlu0 %v1262
    %v1264 = vpop.xlane.xlu0 %1263
    %v1265 = vmul.f32 %v1261, %v241
    %v1266 = vmul.f32 %v1264, %v241
    %v1267 = vsub.f32 %v1257, %v1265
    %v1268 = vsub.f32 %v1258, %v1266
    %v1269 = vmul.f32 %v1267, %v1267
    %v1270 = vmul.f32 %v1268, %v1268
    %v1271 = vsel %vm234, %v1269, 0.0
    %1272 = vadd.xlane.f32.xlu0 %v1271
    %v1273 = vpop.xlane.xlu0 %1272
    %v1274 = vsel %vm234, %v1270, 0.0
    %1275 = vadd.xlane.f32.xlu0 %v1274
    %v1276 = vpop.xlane.xlu0 %1275
    %v1277 = vmul.f32 %v1273, %v241
    %v1278 = vmul.f32 %v1276, %v241
    %v1279 = vadd.f32 %v1277, 1e-05
    %v1280 = vadd.f32 %v1278, 1e-05
    %v1281 = vrsqrt.pop %v1279
    %v1282 = vrsqrt.pop %v1280
    %v1283 = vmul.f32 %v1267, %v1281
    %v1284 = vmul.f32 %v1268, %v1282
    %v1285 = vlaneseq
    %v1286 = vshrl.u32 %v1285, 7
    %v1287 = vsub.s32 3, %v1286
    %v1288 = vrot.slane %v145, %v1287
    %v1289 = vmul.f32 %v1283, %v1288
    %v1290 = vmul.f32 %v1284, %v1288
    %v1291 = vlaneseq
    %v1292 = vshrl.u32 %v1291, 7
    %v1293 = vsub.s32 1, %v1292
    %v1294 = vrot.slane %v146, %v1293
    %v1295 = vadd.f32 %v1289, %v1294
    %v1296 = vadd.f32 %v1290, %v1294
    %v1297 = vpack.c.bf16 %v1296, %v1295
    %v1298 = vlaneseq
    %v1299 = vshrl.u32 %v1298, 7
    %v1300 = vsub.s32 5, %v1299
    %v1301 = vrot.slane %v146, %v1300
    %v1306 = vunpack.c.l.b16 %v153
    %v1307 = vunpack.c.l.b16 %v154
    %v1308 = vunpack.c.l.b16 %v155
    %v1309 = vunpack.c.l.b16 %v156
    %v1310 = vpack.c.b16 %v1307, %v1306
    %v1311 = vpack.c.b16 %v1309, %v1308
    %v1315 = vsel %vm234, %v1297, 0
    %1317 = vmatprep.subr.bf16.mxu0 0
    %1318 = vmatpush1.bf16.msra.mxu0 %v1310
    %1319 = vmatprep.subr.bf16.mxu0 0
    %1320 = vmatpush1.bf16.msra.mxu0 %v1311
    %1321 = vmatprep.subr.bf16.mxu0 0
    %1322 = vmatpush1.bf16.msra.mxu0 0
    %1323 = vmatprep.subr.bf16.mxu0 0
    %1324 = vmatpush1.bf16.msra.mxu0 0
    %1325 = vmatprep.subr.bf16.mxu0 0
    %1326 = vmatpush1.bf16.msra.mxu0 0
    %1327 = vmatprep.subr.bf16.mxu0 0
    %1328 = vmatpush1.bf16.msra.mxu0 0
    %1329 = vmatprep.subr.bf16.mxu0 0
    %1330 = vmatpush1.bf16.msra.mxu0 0
    %1331 = vmatprep.subr.bf16.mxu0 0
    %1332 = vmatpush1.bf16.msra.mxu0 0
    %1333 = vmatprep.subr.bf16.mxu0 0
    %1334 = vmatpush1.bf16.msra.mxu0 0
    %1335 = vmatprep.subr.bf16.mxu0 0
    %1336 = vmatpush1.bf16.msra.mxu0 0
    %1337 = vmatprep.subr.bf16.mxu0 0
    %1338 = vmatpush1.bf16.msra.mxu0 0
    %1339 = vmatprep.subr.bf16.mxu0 0
    %1340 = vmatpush1.bf16.msra.mxu0 0
    %1341 = vmatprep.subr.bf16.mxu0 0
    %1342 = vmatpush1.bf16.msra.mxu0 0
    %1343 = vmatprep.subr.bf16.mxu0 0
    %1344 = vmatpush1.bf16.msra.mxu0 0
    %1345 = vmatprep.subr.bf16.mxu0 0
    %1346 = vmatpush1.bf16.msra.mxu0 0
    %1347 = vmatprep.subr.bf16.mxu0 0
    %1348 = vmatpush1.bf16.msra.mxu0 0
    %1349 = vmatprep.mubr.bf16.mxu0 0
    %1350 = vmatmul.mubr.bf16.gmra.mrb[0].mxu0 %v1315
    %v1351 = vpop.f32.mrb[0].mxu0
    %v1352 = vadd.f32 %v1301, %v1351
    %v1353 = vpop.f32.mrb[0].mxu0
    %v1354 = vpop.f32.mrb[0].mxu0
    %v1355 = vadd.f32 %v1301, %v1354
    %v1356 = vpop.f32.mrb[0].mxu0
    %1357 = vdwg.mxu0
    %v1358 = vpack.c.bf16 %v1352, %v1352
    %v1359 = vpack.c.bf16 %v1355, %v1355
    %1361 = vrot.lane.b32.xlu0 %v1358, 96
    %v1362 = vpop.permute.xlu0 %1361
    %v1364 = vsel %vm234, %v1358, 0
    %v1367 = vsel %vm234, %v1362, 0
    %1369 = vmatprep.subr.bf16.mxu0 0
    %1370 = vmatpush1.bf16.xpose.msra.mxu0 %v1367
    %1371 = vmatprep.subr.bf16.mxu0 0
    %1372 = vmatpush1.bf16.xpose.msra.mxu0 0
    %1373 = vmatprep.subr.bf16.mxu0 0
    %1374 = vmatpush1.bf16.xpose.msra.mxu0 0
    %1375 = vmatprep.subr.bf16.mxu0 0
    %1376 = vmatpush1.bf16.xpose.msra.mxu0 0
    %1377 = vmatprep.subr.bf16.mxu0 0
    %1378 = vmatpush1.bf16.xpose.msra.mxu0 0
    %1379 = vmatprep.subr.bf16.mxu0 0
    %1380 = vmatpush1.bf16.xpose.msra.mxu0 0
    %1381 = vmatprep.subr.bf16.mxu0 0
    %1382 = vmatpush1.bf16.xpose.msra.mxu0 0
    %1383 = vmatprep.subr.bf16.mxu0 0
    %1384 = vmatpush1.bf16.xpose.msra.mxu0 0
    %1385 = vmatprep.subr.bf16.mxu0 0
    %1386 = vmatpush1.bf16.xpose.msra.mxu0 0
    %1387 = vmatprep.subr.bf16.mxu0 0
    %1388 = vmatpush1.bf16.xpose.msra.mxu0 0
    %1389 = vmatprep.subr.bf16.mxu0 0
    %1390 = vmatpush1.bf16.xpose.msra.mxu0 0
    %1391 = vmatprep.subr.bf16.mxu0 0
    %1392 = vmatpush1.bf16.xpose.msra.mxu0 0
    %1393 = vmatprep.subr.bf16.mxu0 0
    %1394 = vmatpush1.bf16.xpose.msra.mxu0 0
    %1395 = vmatprep.subr.bf16.mxu0 0
    %1396 = vmatpush1.bf16.xpose.msra.mxu0 0
    %1397 = vmatprep.subr.bf16.mxu0 0
    %1398 = vmatpush1.bf16.xpose.msra.mxu0 0
    %1399 = vmatprep.subr.bf16.mxu0 0
    %1400 = vmatpush1.bf16.xpose.msra.mxu0 0
    %1401 = vmatprep.mubr.bf16.mxu0 0
    %1402 = vmatmul.mubr.bf16.gmra.mrb[0].mxu0 %v1364
    %v1403 = vpop.f32.mrb[0].mxu0
    %v1404 = vadd.f32 0.0, %v1403
    %v1405 = vpop.f32.mrb[0].mxu0
    %v1406 = vpop.f32.mrb[0].mxu0
    %v1407 = vpop.f32.mrb[0].mxu0
    %1408 = vdwg.mxu0
    %1410 = vrot.lane.b32.xlu0 %v1359, 96
    %v1411 = vpop.permute.xlu0 %1410
    %v1413 = vsel %vm234, %v1359, 0
    %v1416 = vsel %vm234, %v1411, 0
    %1418 = vmatprep.subr.bf16.mxu0 0
    %1419 = vmatpush1.bf16.xpose.msra.mxu0 %v1416
    %1420 = vmatprep.subr.bf16.mxu0 0
    %1421 = vmatpush1.bf16.xpose.msra.mxu0 0
    %1422 = vmatprep.subr.bf16.mxu0 0
    %1423 = vmatpush1.bf16.xpose.msra.mxu0 0
    %1424 = vmatprep.subr.bf16.mxu0 0
    %1425 = vmatpush1.bf16.xpose.msra.mxu0 0
    %1426 = vmatprep.subr.bf16.mxu0 0
    %1427 = vmatpush1.bf16.xpose.msra.mxu0 0
    %1428 = vmatprep.subr.bf16.mxu0 0
    %1429 = vmatpush1.bf16.xpose.msra.mxu0 0
    %1430 = vmatprep.subr.bf16.mxu0 0
    %1431 = vmatpush1.bf16.xpose.msra.mxu0 0
    %1432 = vmatprep.subr.bf16.mxu0 0
    %1433 = vmatpush1.bf16.xpose.msra.mxu0 0
    %1434 = vmatprep.subr.bf16.mxu0 0
    %1435 = vmatpush1.bf16.xpose.msra.mxu0 0
    %1436 = vmatprep.subr.bf16.mxu0 0
    %1437 = vmatpush1.bf16.xpose.msra.mxu0 0
    %1438 = vmatprep.subr.bf16.mxu0 0
    %1439 = vmatpush1.bf16.xpose.msra.mxu0 0
    %1440 = vmatprep.subr.bf16.mxu0 0
    %1441 = vmatpush1.bf16.xpose.msra.mxu0 0
    %1442 = vmatprep.subr.bf16.mxu0 0
    %1443 = vmatpush1.bf16.xpose.msra.mxu0 0
    %1444 = vmatprep.subr.bf16.mxu0 0
    %1445 = vmatpush1.bf16.xpose.msra.mxu0 0
    %1446 = vmatprep.subr.bf16.mxu0 0
    %1447 = vmatpush1.bf16.xpose.msra.mxu0 0
    %1448 = vmatprep.subr.bf16.mxu0 0
    %1449 = vmatpush1.bf16.xpose.msra.mxu0 0
    %1450 = vmatprep.mubr.bf16.mxu0 0
    %1451 = vmatmul.mubr.bf16.gmra.mrb[0].mxu0 %v1413
    %v1452 = vpop.f32.mrb[0].mxu0
    %v1453 = vadd.f32 0.0, %v1452
    %v1454 = vpop.f32.mrb[0].mxu0
    %v1455 = vpop.f32.mrb[0].mxu0
    %v1456 = vpop.f32.mrb[0].mxu0
    %1457 = vdwg.mxu0
    %v1458 = vsel %vm435, %v1404, -inf
    %1459 = vmax.xlane.f32.xlu0 %v1458
    %v1460 = vpop.xlane.xlu0 %1459
    %v1461 = vsel %vm435, %v1453, -inf
    %1462 = vmax.xlane.f32.xlu0 %v1461
    %v1463 = vpop.xlane.xlu0 %1462
    %v1464 = vsub.f32 %v1404, %v1460
    %v1465 = vsub.f32 %v1453, %v1463
    %v1466 = vmul.f32 %v1464, 1.442695
    %v1467 = vpow.pop %v1466
    %v1468 = vmul.f32 %v1465, 1.442695
    %v1469 = vpow.pop %v1468
    %v1470 = vsel %vm435, %v1467, 0.0
    %1471 = vadd.xlane.f32.xlu0 %v1470
    %v1472 = vpop.xlane.xlu0 %1471
    %v1473 = vsel %vm435, %v1469, 0.0
    %1474 = vadd.xlane.f32.xlu0 %v1473
    %v1475 = vpop.xlane.xlu0 %1474
    %v1476 = vrcp.pop %v1472
    %v1477 = vrcp.pop %v1475
    %v1478 = vmul.f32 %v1467, %v1476
    %v1479 = vmul.f32 %v1469, %v1477
    %v1480 = vpack.c.bf16 %v1478, %v1478
    %v1481 = vpack.c.bf16 %v1479, %v1479
    %1482 = vrot.lane.b32.xlu0 %v1358, 64
    %v1483 = vpop.permute.xlu0 %1482
    %v1485 = vsel %vm435, %v1480, 0
    %v1488 = vsel %vm465, %v1483, 0
    %1490 = vmatprep.subr.bf16.mxu0 0
    %1491 = vmatpush1.bf16.msra.mxu0 %v1488
    %1492 = vmatprep.subr.bf16.mxu0 0
    %1493 = vmatpush1.bf16.msra.mxu0 0
    %1494 = vmatprep.subr.bf16.mxu0 0
    %1495 = vmatpush1.bf16.msra.mxu0 0
    %1496 = vmatprep.subr.bf16.mxu0 0
    %1497 = vmatpush1.bf16.msra.mxu0 0
    %1498 = vmatprep.subr.bf16.mxu0 0
    %1499 = vmatpush1.bf16.msra.mxu0 0
    %1500 = vmatprep.subr.bf16.mxu0 0
    %1501 = vmatpush1.bf16.msra.mxu0 0
    %1502 = vmatprep.subr.bf16.mxu0 0
    %1503 = vmatpush1.bf16.msra.mxu0 0
    %1504 = vmatprep.subr.bf16.mxu0 0
    %1505 = vmatpush1.bf16.msra.mxu0 0
    %1506 = vmatprep.subr.bf16.mxu0 0
    %1507 = vmatpush1.bf16.msra.mxu0 0
    %1508 = vmatprep.subr.bf16.mxu0 0
    %1509 = vmatpush1.bf16.msra.mxu0 0
    %1510 = vmatprep.subr.bf16.mxu0 0
    %1511 = vmatpush1.bf16.msra.mxu0 0
    %1512 = vmatprep.subr.bf16.mxu0 0
    %1513 = vmatpush1.bf16.msra.mxu0 0
    %1514 = vmatprep.subr.bf16.mxu0 0
    %1515 = vmatpush1.bf16.msra.mxu0 0
    %1516 = vmatprep.subr.bf16.mxu0 0
    %1517 = vmatpush1.bf16.msra.mxu0 0
    %1518 = vmatprep.subr.bf16.mxu0 0
    %1519 = vmatpush1.bf16.msra.mxu0 0
    %1520 = vmatprep.subr.bf16.mxu0 0
    %1521 = vmatpush1.bf16.msra.mxu0 0
    %1522 = vmatprep.mubr.bf16.mxu0 0
    %1523 = vmatmul.mubr.bf16.gmra.mrb[0].mxu0 %v1485
    %v1524 = vpop.f32.mrb[0].mxu0
    %v1525 = vadd.f32 0.0, %v1524
    %v1526 = vpop.f32.mrb[0].mxu0
    %v1527 = vpop.f32.mrb[0].mxu0
    %v1528 = vpop.f32.mrb[0].mxu0
    %1529 = vdwg.mxu0
    %1530 = vrot.lane.b32.xlu0 %v1359, 64
    %v1531 = vpop.permute.xlu0 %1530
    %v1533 = vsel %vm435, %v1481, 0
    %v1536 = vsel %vm465, %v1531, 0
    %1538 = vmatprep.subr.bf16.mxu0 0
    %1539 = vmatpush1.bf16.msra.mxu0 %v1536
    %1540 = vmatprep.subr.bf16.mxu0 0
    %1541 = vmatpush1.bf16.msra.mxu0 0
    %1542 = vmatprep.subr.bf16.mxu0 0
    %1543 = vmatpush1.bf16.msra.mxu0 0
    %1544 = vmatprep.subr.bf16.mxu0 0
    %1545 = vmatpush1.bf16.msra.mxu0 0
    %1546 = vmatprep.subr.bf16.mxu0 0
    %1547 = vmatpush1.bf16.msra.mxu0 0
    %1548 = vmatprep.subr.bf16.mxu0 0
    %1549 = vmatpush1.bf16.msra.mxu0 0
    %1550 = vmatprep.subr.bf16.mxu0 0
    %1551 = vmatpush1.bf16.msra.mxu0 0
    %1552 = vmatprep.subr.bf16.mxu0 0
    %1553 = vmatpush1.bf16.msra.mxu0 0
    %1554 = vmatprep.subr.bf16.mxu0 0
    %1555 = vmatpush1.bf16.msra.mxu0 0
    %1556 = vmatprep.subr.bf16.mxu0 0
    %1557 = vmatpush1.bf16.msra.mxu0 0
    %1558 = vmatprep.subr.bf16.mxu0 0
    %1559 = vmatpush1.bf16.msra.mxu0 0
    %1560 = vmatprep.subr.bf16.mxu0 0
    %1561 = vmatpush1.bf16.msra.mxu0 0
    %1562 = vmatprep.subr.bf16.mxu0 0
    %1563 = vmatpush1.bf16.msra.mxu0 0
    %1564 = vmatprep.subr.bf16.mxu0 0
    %1565 = vmatpush1.bf16.msra.mxu0 0
    %1566 = vmatprep.subr.bf16.mxu0 0
    %1567 = vmatpush1.bf16.msra.mxu0 0
    %1568 = vmatprep.subr.bf16.mxu0 0
    %1569 = vmatpush1.bf16.msra.mxu0 0
    %1570 = vmatprep.mubr.bf16.mxu0 0
    %1571 = vmatmul.mubr.bf16.gmra.mrb[0].mxu0 %v1533
    %v1572 = vpop.f32.mrb[0].mxu0
    %v1573 = vadd.f32 0.0, %v1572
    %v1574 = vpop.f32.mrb[0].mxu0
    %v1575 = vpop.f32.mrb[0].mxu0
    %v1576 = vpop.f32.mrb[0].mxu0
    %1577 = vdwg.mxu0
    %v1578 = vpack.c.bf16 %v1573, %v1525
    %v1583 = vunpack.c.l.b16 %v161
    %v1584 = vunpack.c.l.b16 %v162
    %v1585 = vunpack.c.l.b16 %v163
    %v1586 = vunpack.c.l.b16 %v164
    %v1587 = vpack.c.b16 %v1584, %v1583
    %v1588 = vpack.c.b16 %v1586, %v1585
    %v1592 = vsel %vm234, %v1578, 0
    %1594 = vmatprep.subr.bf16.mxu0 0
    %1595 = vmatpush1.bf16.msra.mxu0 %v1587
    %1596 = vmatprep.subr.bf16.mxu0 0
    %1597 = vmatpush1.bf16.msra.mxu0 %v1588
    %1598 = vmatprep.subr.bf16.mxu0 0
    %1599 = vmatpush1.bf16.msra.mxu0 0
    %1600 = vmatprep.subr.bf16.mxu0 0
    %1601 = vmatpush1.bf16.msra.mxu0 0
    %1602 = vmatprep.subr.bf16.mxu0 0
    %1603 = vmatpush1.bf16.msra.mxu0 0
    %1604 = vmatprep.subr.bf16.mxu0 0
    %1605 = vmatpush1.bf16.msra.mxu0 0
    %1606 = vmatprep.subr.bf16.mxu0 0
    %1607 = vmatpush1.bf16.msra.mxu0 0
    %1608 = vmatprep.subr.bf16.mxu0 0
    %1609 = vmatpush1.bf16.msra.mxu0 0
    %1610 = vmatprep.subr.bf16.mxu0 0
    %1611 = vmatpush1.bf16.msra.mxu0 0
    %1612 = vmatprep.subr.bf16.mxu0 0
    %1613 = vmatpush1.bf16.msra.mxu0 0
    %1614 = vmatprep.subr.bf16.mxu0 0
    %1615 = vmatpush1.bf16.msra.mxu0 0
    %1616 = vmatprep.subr.bf16.mxu0 0
    %1617 = vmatpush1.bf16.msra.mxu0 0
    %1618 = vmatprep.subr.bf16.mxu0 0
    %1619 = vmatpush1.bf16.msra.mxu0 0
    %1620 = vmatprep.subr.bf16.mxu0 0
    %1621 = vmatpush1.bf16.msra.mxu0 0
    %1622 = vmatprep.subr.bf16.mxu0 0
    %1623 = vmatpush1.bf16.msra.mxu0 0
    %1624 = vmatprep.subr.bf16.mxu0 0
    %1625 = vmatpush1.bf16.msra.mxu0 0
    %1626 = vmatprep.mubr.bf16.mxu0 0
    %1627 = vmatmul.mubr.bf16.gmra.mrb[0].mxu0 %v1592
    %v1628 = vpop.f32.mrb[0].mxu0
    %v1629 = vadd.f32 0.0, %v1628
    %v1630 = vpop.f32.mrb[0].mxu0
    %v1631 = vpop.f32.mrb[0].mxu0
    %v1632 = vadd.f32 0.0, %v1631
    %v1633 = vpop.f32.mrb[0].mxu0
    %1634 = vdwg.mxu0
    %v1635 = vadd.f32 %v1257, %v1629
    %v1636 = vadd.f32 %v1258, %v1632
    %v1637 = vlaneseq
    %v1638 = vshrl.u32 %v1637, 7
    %v1639 = vsub.s32 7, %v1638
    %v1640 = vrot.slane %v146, %v1639
    %v1641 = vadd.f32 %v1635, %v1640
    %v1642 = vadd.f32 %v1636, %v1640
    %v1643 = vsel %vm234, %v1641, 0.0
    %1644 = vadd.xlane.f32.xlu0 %v1643
    %v1645 = vpop.xlane.xlu0 %1644
    %v1646 = vsel %vm234, %v1642, 0.0
    %1647 = vadd.xlane.f32.xlu0 %v1646
    %v1648 = vpop.xlane.xlu0 %1647
    %v1649 = vmul.f32 %v1645, %v241
    %v1650 = vmul.f32 %v1648, %v241
    %v1651 = vsub.f32 %v1641, %v1649
    %v1652 = vsub.f32 %v1642, %v1650
    %v1653 = vmul.f32 %v1651, %v1651
    %v1654 = vmul.f32 %v1652, %v1652
    %v1655 = vsel %vm234, %v1653, 0.0
    %1656 = vadd.xlane.f32.xlu0 %v1655
    %v1657 = vpop.xlane.xlu0 %1656
    %v1658 = vsel %vm234, %v1654, 0.0
    %1659 = vadd.xlane.f32.xlu0 %v1658
    %v1660 = vpop.xlane.xlu0 %1659
    %v1661 = vmul.f32 %v1657, %v241
    %v1662 = vmul.f32 %v1660, %v241
    %v1663 = vadd.f32 %v1661, 1e-05
    %v1664 = vadd.f32 %v1662, 1e-05
    %v1665 = vrsqrt.pop %v1663
    %v1666 = vrsqrt.pop %v1664
    %v1667 = vmul.f32 %v1651, %v1665
    %v1668 = vmul.f32 %v1652, %v1666
    %v1669 = vlaneseq
    %v1670 = vshrl.u32 %v1669, 7
    %v1671 = vsub.s32 4, %v1670
    %v1672 = vrot.slane %v145, %v1671
    %v1673 = vmul.f32 %v1667, %v1672
    %v1674 = vmul.f32 %v1668, %v1672
    %v1675 = vlaneseq
    %v1676 = vshrl.u32 %v1675, 7
    %v1677 = vsub.s32 2, %v1676
    %v1678 = vrot.slane %v146, %v1677
    %v1679 = vadd.f32 %v1673, %v1678
    %v1680 = vadd.f32 %v1674, %v1678
    %v1681 = vpack.c.bf16 %v1680, %v1679
    %v1682 = vlaneseq
    %v1683 = vshrl.u32 %v1682, 7
    %v1684 = vsub.s32 1, %v1683
    %v1685 = vrot.slane %v147, %v1684
    %v1690 = vunpack.c.l.b16 %v169
    %v1691 = vunpack.c.l.b16 %v170
    %v1692 = vunpack.c.l.b16 %v171
    %v1693 = vunpack.c.l.b16 %v172
    %v1694 = vpack.c.b16 %v1691, %v1690
    %v1695 = vpack.c.b16 %v1693, %v1692
    %v1699 = vsel %vm234, %v1681, 0
    %1701 = vmatprep.subr.bf16.mxu0 0
    %1702 = vmatpush1.bf16.msra.mxu0 %v1694
    %1703 = vmatprep.subr.bf16.mxu0 0
    %1704 = vmatpush1.bf16.msra.mxu0 %v1695
    %1705 = vmatprep.subr.bf16.mxu0 0
    %1706 = vmatpush1.bf16.msra.mxu0 0
    %1707 = vmatprep.subr.bf16.mxu0 0
    %1708 = vmatpush1.bf16.msra.mxu0 0
    %1709 = vmatprep.subr.bf16.mxu0 0
    %1710 = vmatpush1.bf16.msra.mxu0 0
    %1711 = vmatprep.subr.bf16.mxu0 0
    %1712 = vmatpush1.bf16.msra.mxu0 0
    %1713 = vmatprep.subr.bf16.mxu0 0
    %1714 = vmatpush1.bf16.msra.mxu0 0
    %1715 = vmatprep.subr.bf16.mxu0 0
    %1716 = vmatpush1.bf16.msra.mxu0 0
    %1717 = vmatprep.subr.bf16.mxu0 0
    %1718 = vmatpush1.bf16.msra.mxu0 0
    %1719 = vmatprep.subr.bf16.mxu0 0
    %1720 = vmatpush1.bf16.msra.mxu0 0
    %1721 = vmatprep.subr.bf16.mxu0 0
    %1722 = vmatpush1.bf16.msra.mxu0 0
    %1723 = vmatprep.subr.bf16.mxu0 0
    %1724 = vmatpush1.bf16.msra.mxu0 0
    %1725 = vmatprep.subr.bf16.mxu0 0
    %1726 = vmatpush1.bf16.msra.mxu0 0
    %1727 = vmatprep.subr.bf16.mxu0 0
    %1728 = vmatpush1.bf16.msra.mxu0 0
    %1729 = vmatprep.subr.bf16.mxu0 0
    %1730 = vmatpush1.bf16.msra.mxu0 0
    %1731 = vmatprep.subr.bf16.mxu0 0
    %1732 = vmatpush1.bf16.msra.mxu0 0
    %1733 = vmatprep.mubr.bf16.mxu0 0
    %1734 = vmatmul.mubr.bf16.gmra.mrb[0].mxu0 %v1699
    %v1735 = vpop.f32.mrb[0].mxu0
    %v1736 = vadd.f32 %v1685, %v1735
    %v1737 = vpop.f32.mrb[0].mxu0
    %v1738 = vpop.f32.mrb[0].mxu0
    %v1739 = vadd.f32 %v1685, %v1738
    %v1740 = vpop.f32.mrb[0].mxu0
    %1741 = vdwg.mxu0
    %v1742 = vlaneseq
    %v1743 = vshrl.u32 %v1742, 7
    %v1744 = vsub.s32 3, %v1743
    %v1745 = vrot.slane %v147, %v1744
    %v1750 = vunpack.c.l.b16 %v177
    %v1751 = vunpack.c.l.b16 %v178
    %v1752 = vunpack.c.l.b16 %v179
    %v1753 = vunpack.c.l.b16 %v180
    %v1754 = vpack.c.b16 %v1751, %v1750
    %v1755 = vpack.c.b16 %v1753, %v1752
    %1758 = vmatprep.subr.bf16.mxu0 0
    %1759 = vmatpush1.bf16.msra.mxu0 %v1754
    %1760 = vmatprep.subr.bf16.mxu0 0
    %1761 = vmatpush1.bf16.msra.mxu0 %v1755
    %1762 = vmatprep.subr.bf16.mxu0 0
    %1763 = vmatpush1.bf16.msra.mxu0 0
    %1764 = vmatprep.subr.bf16.mxu0 0
    %1765 = vmatpush1.bf16.msra.mxu0 0
    %1766 = vmatprep.subr.bf16.mxu0 0
    %1767 = vmatpush1.bf16.msra.mxu0 0
    %1768 = vmatprep.subr.bf16.mxu0 0
    %1769 = vmatpush1.bf16.msra.mxu0 0
    %1770 = vmatprep.subr.bf16.mxu0 0
    %1771 = vmatpush1.bf16.msra.mxu0 0
    %1772 = vmatprep.subr.bf16.mxu0 0
    %1773 = vmatpush1.bf16.msra.mxu0 0
    %1774 = vmatprep.subr.bf16.mxu0 0
    %1775 = vmatpush1.bf16.msra.mxu0 0
    %1776 = vmatprep.subr.bf16.mxu0 0
    %1777 = vmatpush1.bf16.msra.mxu0 0
    %1778 = vmatprep.subr.bf16.mxu0 0
    %1779 = vmatpush1.bf16.msra.mxu0 0
    %1780 = vmatprep.subr.bf16.mxu0 0
    %1781 = vmatpush1.bf16.msra.mxu0 0
    %1782 = vmatprep.subr.bf16.mxu0 0
    %1783 = vmatpush1.bf16.msra.mxu0 0
    %1784 = vmatprep.subr.bf16.mxu0 0
    %1785 = vmatpush1.bf16.msra.mxu0 0
    %1786 = vmatprep.subr.bf16.mxu0 0
    %1787 = vmatpush1.bf16.msra.mxu0 0
    %1788 = vmatprep.subr.bf16.mxu0 0
    %1789 = vmatpush1.bf16.msra.mxu0 0
    %1790 = vmatprep.mubr.bf16.mxu0 0
    %1791 = vmatmul.mubr.bf16.gmra.mrb[0].mxu0 %v738
    %v1792 = vpop.f32.mrb[0].mxu0
    %v1793 = vadd.f32 %v1745, %v1792
    %v1794 = vpop.f32.mrb[0].mxu0
    %v1795 = vpop.f32.mrb[0].mxu0
    %v1796 = vadd.f32 %v1745, %v1795
    %v1797 = vpop.f32.mrb[0].mxu0
    %1798 = vdwg.mxu0
    %v1799 = vpack.c.bf16 %v1736, %v1736
    %v1800 = vpack.c.bf16 %v1739, %v1739
    %v1801 = vpack.c.bf16 %v1793, %v1793
    %v1802 = vpack.c.bf16 %v1796, %v1796
    %v1804 = vsel %vm234, %v1799, 0
    %v1807 = vsel %vm234, %v1801, 0
    %1809 = vmatprep.subr.bf16.mxu0 0
    %1810 = vmatpush1.bf16.xpose.msra.mxu0 %v1807
    %1811 = vmatprep.subr.bf16.mxu0 0
    %1812 = vmatpush1.bf16.xpose.msra.mxu0 0
    %1813 = vmatprep.subr.bf16.mxu0 0
    %1814 = vmatpush1.bf16.xpose.msra.mxu0 0
    %1815 = vmatprep.subr.bf16.mxu0 0
    %1816 = vmatpush1.bf16.xpose.msra.mxu0 0
    %1817 = vmatprep.subr.bf16.mxu0 0
    %1818 = vmatpush1.bf16.xpose.msra.mxu0 0
    %1819 = vmatprep.subr.bf16.mxu0 0
    %1820 = vmatpush1.bf16.xpose.msra.mxu0 0
    %1821 = vmatprep.subr.bf16.mxu0 0
    %1822 = vmatpush1.bf16.xpose.msra.mxu0 0
    %1823 = vmatprep.subr.bf16.mxu0 0
    %1824 = vmatpush1.bf16.xpose.msra.mxu0 0
    %1825 = vmatprep.subr.bf16.mxu0 0
    %1826 = vmatpush1.bf16.xpose.msra.mxu0 0
    %1827 = vmatprep.subr.bf16.mxu0 0
    %1828 = vmatpush1.bf16.xpose.msra.mxu0 0
    %1829 = vmatprep.subr.bf16.mxu0 0
    %1830 = vmatpush1.bf16.xpose.msra.mxu0 0
    %1831 = vmatprep.subr.bf16.mxu0 0
    %1832 = vmatpush1.bf16.xpose.msra.mxu0 0
    %1833 = vmatprep.subr.bf16.mxu0 0
    %1834 = vmatpush1.bf16.xpose.msra.mxu0 0
    %1835 = vmatprep.subr.bf16.mxu0 0
    %1836 = vmatpush1.bf16.xpose.msra.mxu0 0
    %1837 = vmatprep.subr.bf16.mxu0 0
    %1838 = vmatpush1.bf16.xpose.msra.mxu0 0
    %1839 = vmatprep.subr.bf16.mxu0 0
    %1840 = vmatpush1.bf16.xpose.msra.mxu0 0
    %1841 = vmatprep.mubr.bf16.mxu0 0
    %1842 = vmatmul.mubr.bf16.gmra.mrb[0].mxu0 %v1804
    %v1843 = vpop.f32.mrb[0].mxu0
    %v1844 = vadd.f32 0.0, %v1843
    %v1845 = vpop.f32.mrb[0].mxu0
    %v1846 = vpop.f32.mrb[0].mxu0
    %v1847 = vpop.f32.mrb[0].mxu0
    %1848 = vdwg.mxu0
    %v1850 = vsel %vm234, %v1800, 0
    %v1853 = vsel %vm234, %v1802, 0
    %1855 = vmatprep.subr.bf16.mxu0 0
    %1856 = vmatpush1.bf16.xpose.msra.mxu0 %v1853
    %1857 = vmatprep.subr.bf16.mxu0 0
    %1858 = vmatpush1.bf16.xpose.msra.mxu0 0
    %1859 = vmatprep.subr.bf16.mxu0 0
    %1860 = vmatpush1.bf16.xpose.msra.mxu0 0
    %1861 = vmatprep.subr.bf16.mxu0 0
    %1862 = vmatpush1.bf16.xpose.msra.mxu0 0
    %1863 = vmatprep.subr.bf16.mxu0 0
    %1864 = vmatpush1.bf16.xpose.msra.mxu0 0
    %1865 = vmatprep.subr.bf16.mxu0 0
    %1866 = vmatpush1.bf16.xpose.msra.mxu0 0
    %1867 = vmatprep.subr.bf16.mxu0 0
    %1868 = vmatpush1.bf16.xpose.msra.mxu0 0
    %1869 = vmatprep.subr.bf16.mxu0 0
    %1870 = vmatpush1.bf16.xpose.msra.mxu0 0
    %1871 = vmatprep.subr.bf16.mxu0 0
    %1872 = vmatpush1.bf16.xpose.msra.mxu0 0
    %1873 = vmatprep.subr.bf16.mxu0 0
    %1874 = vmatpush1.bf16.xpose.msra.mxu0 0
    %1875 = vmatprep.subr.bf16.mxu0 0
    %1876 = vmatpush1.bf16.xpose.msra.mxu0 0
    %1877 = vmatprep.subr.bf16.mxu0 0
    %1878 = vmatpush1.bf16.xpose.msra.mxu0 0
    %1879 = vmatprep.subr.bf16.mxu0 0
    %1880 = vmatpush1.bf16.xpose.msra.mxu0 0
    %1881 = vmatprep.subr.bf16.mxu0 0
    %1882 = vmatpush1.bf16.xpose.msra.mxu0 0
    %1883 = vmatprep.subr.bf16.mxu0 0
    %1884 = vmatpush1.bf16.xpose.msra.mxu0 0
    %1885 = vmatprep.subr.bf16.mxu0 0
    %1886 = vmatpush1.bf16.xpose.msra.mxu0 0
    %1887 = vmatprep.mubr.bf16.mxu0 0
    %1888 = vmatmul.mubr.bf16.gmra.mrb[0].mxu0 %v1850
    %v1889 = vpop.f32.mrb[0].mxu0
    %v1890 = vadd.f32 0.0, %v1889
    %v1891 = vpop.f32.mrb[0].mxu0
    %v1892 = vpop.f32.mrb[0].mxu0
    %v1893 = vpop.f32.mrb[0].mxu0
    %1894 = vdwg.mxu0
    %v1895 = vsel %vm435, %v1844, -inf
    %1896 = vmax.xlane.f32.xlu0 %v1895
    %v1897 = vpop.xlane.xlu0 %1896
    %v1898 = vsel %vm435, %v1890, -inf
    %1899 = vmax.xlane.f32.xlu0 %v1898
    %v1900 = vpop.xlane.xlu0 %1899
    %v1901 = vsub.f32 %v1844, %v1897
    %v1902 = vsub.f32 %v1890, %v1900
    %v1903 = vmul.f32 %v1901, 1.442695
    %v1904 = vpow.pop %v1903
    %v1905 = vmul.f32 %v1902, 1.442695
    %v1906 = vpow.pop %v1905
    %v1907 = vsel %vm435, %v1904, 0.0
    %1908 = vadd.xlane.f32.xlu0 %v1907
    %v1909 = vpop.xlane.xlu0 %1908
    %v1910 = vsel %vm435, %v1906, 0.0
    %1911 = vadd.xlane.f32.xlu0 %v1910
    %v1912 = vpop.xlane.xlu0 %1911
    %v1913 = vrcp.pop %v1909
    %v1914 = vrcp.pop %v1912
    %v1915 = vmul.f32 %v1904, %v1913
    %v1916 = vmul.f32 %v1906, %v1914
    %v1917 = vpack.c.bf16 %v1915, %v1915
    %v1918 = vpack.c.bf16 %v1916, %v1916
    %1920 = vrot.lane.b32.xlu0 %v1801, 96
    %v1921 = vpop.permute.xlu0 %1920
    %v1923 = vsel %vm435, %v1917, 0
    %v1926 = vsel %vm465, %v1921, 0
    %1928 = vmatprep.subr.bf16.mxu0 0
    %1929 = vmatpush1.bf16.msra.mxu0 %v1926
    %1930 = vmatprep.subr.bf16.mxu0 0
    %1931 = vmatpush1.bf16.msra.mxu0 0
    %1932 = vmatprep.subr.bf16.mxu0 0
    %1933 = vmatpush1.bf16.msra.mxu0 0
    %1934 = vmatprep.subr.bf16.mxu0 0
    %1935 = vmatpush1.bf16.msra.mxu0 0
    %1936 = vmatprep.subr.bf16.mxu0 0
    %1937 = vmatpush1.bf16.msra.mxu0 0
    %1938 = vmatprep.subr.bf16.mxu0 0
    %1939 = vmatpush1.bf16.msra.mxu0 0
    %1940 = vmatprep.subr.bf16.mxu0 0
    %1941 = vmatpush1.bf16.msra.mxu0 0
    %1942 = vmatprep.subr.bf16.mxu0 0
    %1943 = vmatpush1.bf16.msra.mxu0 0
    %1944 = vmatprep.subr.bf16.mxu0 0
    %1945 = vmatpush1.bf16.msra.mxu0 0
    %1946 = vmatprep.subr.bf16.mxu0 0
    %1947 = vmatpush1.bf16.msra.mxu0 0
    %1948 = vmatprep.subr.bf16.mxu0 0
    %1949 = vmatpush1.bf16.msra.mxu0 0
    %1950 = vmatprep.subr.bf16.mxu0 0
    %1951 = vmatpush1.bf16.msra.mxu0 0
    %1952 = vmatprep.subr.bf16.mxu0 0
    %1953 = vmatpush1.bf16.msra.mxu0 0
    %1954 = vmatprep.subr.bf16.mxu0 0
    %1955 = vmatpush1.bf16.msra.mxu0 0
    %1956 = vmatprep.subr.bf16.mxu0 0
    %1957 = vmatpush1.bf16.msra.mxu0 0
    %1958 = vmatprep.subr.bf16.mxu0 0
    %1959 = vmatpush1.bf16.msra.mxu0 0
    %1960 = vmatprep.mubr.bf16.mxu0 0
    %1961 = vmatmul.mubr.bf16.gmra.mrb[0].mxu0 %v1923
    %v1962 = vpop.f32.mrb[0].mxu0
    %v1963 = vadd.f32 0.0, %v1962
    %v1964 = vpop.f32.mrb[0].mxu0
    %v1965 = vpop.f32.mrb[0].mxu0
    %v1966 = vpop.f32.mrb[0].mxu0
    %1967 = vdwg.mxu0
    %1969 = vrot.lane.b32.xlu0 %v1802, 96
    %v1970 = vpop.permute.xlu0 %1969
    %v1972 = vsel %vm435, %v1918, 0
    %v1975 = vsel %vm465, %v1970, 0
    %1977 = vmatprep.subr.bf16.mxu0 0
    %1978 = vmatpush1.bf16.msra.mxu0 %v1975
    %1979 = vmatprep.subr.bf16.mxu0 0
    %1980 = vmatpush1.bf16.msra.mxu0 0
    %1981 = vmatprep.subr.bf16.mxu0 0
    %1982 = vmatpush1.bf16.msra.mxu0 0
    %1983 = vmatprep.subr.bf16.mxu0 0
    %1984 = vmatpush1.bf16.msra.mxu0 0
    %1985 = vmatprep.subr.bf16.mxu0 0
    %1986 = vmatpush1.bf16.msra.mxu0 0
    %1987 = vmatprep.subr.bf16.mxu0 0
    %1988 = vmatpush1.bf16.msra.mxu0 0
    %1989 = vmatprep.subr.bf16.mxu0 0
    %1990 = vmatpush1.bf16.msra.mxu0 0
    %1991 = vmatprep.subr.bf16.mxu0 0
    %1992 = vmatpush1.bf16.msra.mxu0 0
    %1993 = vmatprep.subr.bf16.mxu0 0
    %1994 = vmatpush1.bf16.msra.mxu0 0
    %1995 = vmatprep.subr.bf16.mxu0 0
    %1996 = vmatpush1.bf16.msra.mxu0 0
    %1997 = vmatprep.subr.bf16.mxu0 0
    %1998 = vmatpush1.bf16.msra.mxu0 0
    %1999 = vmatprep.subr.bf16.mxu0 0
    %2000 = vmatpush1.bf16.msra.mxu0 0
    %2001 = vmatprep.subr.bf16.mxu0 0
    %2002 = vmatpush1.bf16.msra.mxu0 0
    %2003 = vmatprep.subr.bf16.mxu0 0
    %2004 = vmatpush1.bf16.msra.mxu0 0
    %2005 = vmatprep.subr.bf16.mxu0 0
    %2006 = vmatpush1.bf16.msra.mxu0 0
    %2007 = vmatprep.subr.bf16.mxu0 0
    %2008 = vmatpush1.bf16.msra.mxu0 0
    %2009 = vmatprep.mubr.bf16.mxu0 0
    %2010 = vmatmul.mubr.bf16.gmra.mrb[0].mxu0 %v1972
    %v2011 = vpop.f32.mrb[0].mxu0
    %v2012 = vadd.f32 0.0, %v2011
    %v2013 = vpop.f32.mrb[0].mxu0
    %v2014 = vpop.f32.mrb[0].mxu0
    %v2015 = vpop.f32.mrb[0].mxu0
    %2016 = vdwg.mxu0
    %v2017 = vpack.c.bf16 %v2012, %v1963
    %v2022 = vunpack.c.l.b16 %v185
    %v2023 = vunpack.c.l.b16 %v186
    %v2024 = vunpack.c.l.b16 %v187
    %v2025 = vunpack.c.l.b16 %v188
    %v2026 = vpack.c.b16 %v2023, %v2022
    %v2027 = vpack.c.b16 %v2025, %v2024
    %v2031 = vsel %vm234, %v2017, 0
    %2033 = vmatprep.subr.bf16.mxu0 0
    %2034 = vmatpush1.bf16.msra.mxu0 %v2026
    %2035 = vmatprep.subr.bf16.mxu0 0
    %2036 = vmatpush1.bf16.msra.mxu0 %v2027
    %2037 = vmatprep.subr.bf16.mxu0 0
    %2038 = vmatpush1.bf16.msra.mxu0 0
    %2039 = vmatprep.subr.bf16.mxu0 0
    %2040 = vmatpush1.bf16.msra.mxu0 0
    %2041 = vmatprep.subr.bf16.mxu0 0
    %2042 = vmatpush1.bf16.msra.mxu0 0
    %2043 = vmatprep.subr.bf16.mxu0 0
    %2044 = vmatpush1.bf16.msra.mxu0 0
    %2045 = vmatprep.subr.bf16.mxu0 0
    %2046 = vmatpush1.bf16.msra.mxu0 0
    %2047 = vmatprep.subr.bf16.mxu0 0
    %2048 = vmatpush1.bf16.msra.mxu0 0
    %2049 = vmatprep.subr.bf16.mxu0 0
    %2050 = vmatpush1.bf16.msra.mxu0 0
    %2051 = vmatprep.subr.bf16.mxu0 0
    %2052 = vmatpush1.bf16.msra.mxu0 0
    %2053 = vmatprep.subr.bf16.mxu0 0
    %2054 = vmatpush1.bf16.msra.mxu0 0
    %2055 = vmatprep.subr.bf16.mxu0 0
    %2056 = vmatpush1.bf16.msra.mxu0 0
    %2057 = vmatprep.subr.bf16.mxu0 0
    %2058 = vmatpush1.bf16.msra.mxu0 0
    %2059 = vmatprep.subr.bf16.mxu0 0
    %2060 = vmatpush1.bf16.msra.mxu0 0
    %2061 = vmatprep.subr.bf16.mxu0 0
    %2062 = vmatpush1.bf16.msra.mxu0 0
    %2063 = vmatprep.subr.bf16.mxu0 0
    %2064 = vmatpush1.bf16.msra.mxu0 0
    %2065 = vmatprep.mubr.bf16.mxu0 0
    %2066 = vmatmul.mubr.bf16.gmra.mrb[0].mxu0 %v2031
    %v2067 = vpop.f32.mrb[0].mxu0
    %v2068 = vadd.f32 0.0, %v2067
    %v2069 = vpop.f32.mrb[0].mxu0
    %v2070 = vpop.f32.mrb[0].mxu0
    %v2071 = vadd.f32 0.0, %v2070
    %v2072 = vpop.f32.mrb[0].mxu0
    %2073 = vdwg.mxu0
    %v2074 = vadd.f32 %v1641, %v2068
    %v2075 = vadd.f32 %v1642, %v2071
    %v2076 = vlaneseq
    %v2077 = vshrl.u32 %v2076, 7
    %v2078 = vsub.s32 5, %v2077
    %v2079 = vrot.slane %v147, %v2078
    %v2080 = vadd.f32 %v2074, %v2079
    %v2081 = vadd.f32 %v2075, %v2079
    %v2082 = vsel %vm234, %v2080, 0.0
    %2083 = vadd.xlane.f32.xlu0 %v2082
    %v2084 = vpop.xlane.xlu0 %2083
    %v2085 = vsel %vm234, %v2081, 0.0
    %2086 = vadd.xlane.f32.xlu0 %v2085
    %v2087 = vpop.xlane.xlu0 %2086
    %v2088 = vmul.f32 %v2084, %v241
    %v2089 = vmul.f32 %v2087, %v241
    %v2090 = vsub.f32 %v2080, %v2088
    %v2091 = vsub.f32 %v2081, %v2089
    %v2092 = vmul.f32 %v2090, %v2090
    %v2093 = vmul.f32 %v2091, %v2091
    %v2094 = vsel %vm234, %v2092, 0.0
    %2095 = vadd.xlane.f32.xlu0 %v2094
    %v2096 = vpop.xlane.xlu0 %2095
    %v2097 = vsel %vm234, %v2093, 0.0
    %2098 = vadd.xlane.f32.xlu0 %v2097
    %v2099 = vpop.xlane.xlu0 %2098
    %v2100 = vmul.f32 %v2096, %v241
    %v2101 = vmul.f32 %v2099, %v241
    %v2102 = vadd.f32 %v2100, 1e-05
    %v2103 = vadd.f32 %v2101, 1e-05
    %v2104 = vrsqrt.pop %v2102
    %v2105 = vrsqrt.pop %v2103
    %v2106 = vmul.f32 %v2090, %v2104
    %v2107 = vmul.f32 %v2091, %v2105
    %v2108 = vlaneseq
    %v2109 = vshrl.u32 %v2108, 7
    %v2110 = vsub.s32 5, %v2109
    %v2111 = vrot.slane %v145, %v2110
    %v2112 = vmul.f32 %v2106, %v2111
    %v2113 = vmul.f32 %v2107, %v2111
    %v2114 = vlaneseq
    %v2115 = vshrl.u32 %v2114, 7
    %v2116 = vsub.s32 3, %v2115
    %v2117 = vrot.slane %v146, %v2116
    %v2118 = vadd.f32 %v2112, %v2117
    %v2119 = vadd.f32 %v2113, %v2117
    %v2120 = vpack.c.bf16 %v2119, %v2118
    %v2121 = vlaneseq
    %v2122 = vshrl.u32 %v2121, 7
    %v2123 = vsub.s32 7, %v2122
    %v2124 = vrot.slane %v147, %v2123
    %v2129 = vunpack.c.l.b16 %v193
    %v2130 = vunpack.c.l.b16 %v194
    %v2131 = vunpack.c.l.b16 %v195
    %v2132 = vunpack.c.l.b16 %v196
    %v2133 = vpack.c.b16 %v2130, %v2129
    %v2134 = vpack.c.b16 %v2132, %v2131
    %v2138 = vsel %vm234, %v2120, 0
    %2140 = vmatprep.subr.bf16.mxu0 0
    %2141 = vmatpush1.bf16.msra.mxu0 %v2133
    %2142 = vmatprep.subr.bf16.mxu0 0
    %2143 = vmatpush1.bf16.msra.mxu0 %v2134
    %2144 = vmatprep.subr.bf16.mxu0 0
    %2145 = vmatpush1.bf16.msra.mxu0 0
    %2146 = vmatprep.subr.bf16.mxu0 0
    %2147 = vmatpush1.bf16.msra.mxu0 0
    %2148 = vmatprep.subr.bf16.mxu0 0
    %2149 = vmatpush1.bf16.msra.mxu0 0
    %2150 = vmatprep.subr.bf16.mxu0 0
    %2151 = vmatpush1.bf16.msra.mxu0 0
    %2152 = vmatprep.subr.bf16.mxu0 0
    %2153 = vmatpush1.bf16.msra.mxu0 0
    %2154 = vmatprep.subr.bf16.mxu0 0
    %2155 = vmatpush1.bf16.msra.mxu0 0
    %2156 = vmatprep.subr.bf16.mxu0 0
    %2157 = vmatpush1.bf16.msra.mxu0 0
    %2158 = vmatprep.subr.bf16.mxu0 0
    %2159 = vmatpush1.bf16.msra.mxu0 0
    %2160 = vmatprep.subr.bf16.mxu0 0
    %2161 = vmatpush1.bf16.msra.mxu0 0
    %2162 = vmatprep.subr.bf16.mxu0 0
    %2163 = vmatpush1.bf16.msra.mxu0 0
    %2164 = vmatprep.subr.bf16.mxu0 0
    %2165 = vmatpush1.bf16.msra.mxu0 0
    %2166 = vmatprep.subr.bf16.mxu0 0
    %2167 = vmatpush1.bf16.msra.mxu0 0
    %2168 = vmatprep.subr.bf16.mxu0 0
    %2169 = vmatpush1.bf16.msra.mxu0 0
    %2170 = vmatprep.subr.bf16.mxu0 0
    %2171 = vmatpush1.bf16.msra.mxu0 0
    %2172 = vmatprep.mubr.bf16.mxu0 0
    %2173 = vmatmul.mubr.bf16.gmra.mrb[0].mxu0 %v2138
    %v2174 = vpop.f32.mrb[0].mxu0
    %v2175 = vadd.f32 %v2124, %v2174
    %v2176 = vpop.f32.mrb[0].mxu0
    %v2177 = vpop.f32.mrb[0].mxu0
    %v2178 = vadd.f32 %v2124, %v2177
    %v2179 = vpop.f32.mrb[0].mxu0
    %2180 = vdwg.mxu0
    %v2181 = vmul.f32 %v2175, 0.5
    %v2182 = vmul.f32 %v2178, 0.5
    %v2183 = vmul.f32 %v2175, 0.044715
    %v2184 = vmul.f32 %v2178, 0.044715
    %v2185 = vmul.f32 %v2183, %v2175
    %v2186 = vmul.f32 %v2184, %v2178
    %v2187 = vmul.f32 %v2185, %v2175
    %v2188 = vmul.f32 %v2186, %v2178
    %v2189 = vadd.f32 %v2175, %v2187
    %v2190 = vadd.f32 %v2178, %v2188
    %v2191 = vmul.f32 %v2189, 0.7978846
    %v2192 = vmul.f32 %v2190, 0.7978846
    %v2193 = vtanh.pop %v2191
    %v2194 = vtanh.pop %v2192
    %v2195 = vadd.f32 %v2193, 1.0
    %v2196 = vadd.f32 %v2194, 1.0
    %v2197 = vmul.f32 %v2181, %v2195
    %v2198 = vmul.f32 %v2182, %v2196
    %v2199 = vpack.c.bf16 %v2198, %v2197
    %v2208 = vunpack.c.l.b16 %v205
    %v2209 = vunpack.c.l.b16 %v206
    %v2210 = vunpack.c.l.b16 %v207
    %v2211 = vunpack.c.l.b16 %v208
    %v2212 = vunpack.c.l.b16 %v209
    %v2213 = vunpack.c.l.b16 %v210
    %v2214 = vunpack.c.l.b16 %v211
    %v2215 = vunpack.c.l.b16 %v212
    %v2216 = vpack.c.b16 %v2209, %v2208
    %v2217 = vpack.c.b16 %v2211, %v2210
    %v2218 = vpack.c.b16 %v2213, %v2212
    %v2219 = vpack.c.b16 %v2215, %v2214
    %v2225 = vsel %vm1206, %v2199, 0
    %2227 = vmatprep.subr.bf16.mxu0 0
    %2228 = vmatpush1.bf16.msra.mxu0 %v2216
    %2229 = vmatprep.subr.bf16.mxu0 0
    %2230 = vmatpush1.bf16.msra.mxu0 %v2217
    %2231 = vmatprep.subr.bf16.mxu0 0
    %2232 = vmatpush1.bf16.msra.mxu0 %v2218
    %2233 = vmatprep.subr.bf16.mxu0 0
    %2234 = vmatpush1.bf16.msra.mxu0 %v2219
    %2235 = vmatprep.subr.bf16.mxu0 0
    %2236 = vmatpush1.bf16.msra.mxu0 0
    %2237 = vmatprep.subr.bf16.mxu0 0
    %2238 = vmatpush1.bf16.msra.mxu0 0
    %2239 = vmatprep.subr.bf16.mxu0 0
    %2240 = vmatpush1.bf16.msra.mxu0 0
    %2241 = vmatprep.subr.bf16.mxu0 0
    %2242 = vmatpush1.bf16.msra.mxu0 0
    %2243 = vmatprep.subr.bf16.mxu0 0
    %2244 = vmatpush1.bf16.msra.mxu0 0
    %2245 = vmatprep.subr.bf16.mxu0 0
    %2246 = vmatpush1.bf16.msra.mxu0 0
    %2247 = vmatprep.subr.bf16.mxu0 0
    %2248 = vmatpush1.bf16.msra.mxu0 0
    %2249 = vmatprep.subr.bf16.mxu0 0
    %2250 = vmatpush1.bf16.msra.mxu0 0
    %2251 = vmatprep.subr.bf16.mxu0 0
    %2252 = vmatpush1.bf16.msra.mxu0 0
    %2253 = vmatprep.subr.bf16.mxu0 0
    %2254 = vmatpush1.bf16.msra.mxu0 0
    %2255 = vmatprep.subr.bf16.mxu0 0
    %2256 = vmatpush1.bf16.msra.mxu0 0
    %2257 = vmatprep.subr.bf16.mxu0 0
    %2258 = vmatpush1.bf16.msra.mxu0 0
    %2259 = vmatprep.mubr.bf16.mxu0 0
    %2260 = vmatmul.mubr.bf16.gmra.mrb[0].mxu0 %v2225
    %v2261 = vpop.f32.mrb[0].mxu0
    %v2262 = vadd.f32 0.0, %v2261
    %v2263 = vpop.f32.mrb[0].mxu0
    %v2264 = vpop.f32.mrb[0].mxu0
    %v2265 = vadd.f32 0.0, %v2264
    %v2266 = vpop.f32.mrb[0].mxu0
    %2267 = vdwg.mxu0
    %v2268 = vadd.f32 %v2080, %v2262
    %v2269 = vadd.f32 %v2081, %v2265
    %v2270 = vlaneseq
    %v2271 = vshrl.u32 %v2270, 7
    %v2272 = vsub.s32 1, %v2271
    %v2273 = vrot.slane %v148, %v2272
    %v2274 = vadd.f32 %v2268, %v2273
    %v2275 = vadd.f32 %v2269, %v2273
    %v2276 = vsel %vm234, %v2274, 0.0
    %2277 = vadd.xlane.f32.xlu0 %v2276
    %v2278 = vpop.xlane.xlu0 %2277
    %v2279 = vsel %vm234, %v2275, 0.0
    %2280 = vadd.xlane.f32.xlu0 %v2279
    %v2281 = vpop.xlane.xlu0 %2280
    %v2282 = vmul.f32 %v2278, %v241
    %v2283 = vmul.f32 %v2281, %v241
    %v2284 = vsub.f32 %v2274, %v2282
    %v2285 = vsub.f32 %v2275, %v2283
    %v2286 = vmul.f32 %v2284, %v2284
    %v2287 = vmul.f32 %v2285, %v2285
    %v2288 = vsel %vm234, %v2286, 0.0
    %2289 = vadd.xlane.f32.xlu0 %v2288
    %v2290 = vpop.xlane.xlu0 %2289
    %v2291 = vsel %vm234, %v2287, 0.0
    %2292 = vadd.xlane.f32.xlu0 %v2291
    %v2293 = vpop.xlane.xlu0 %2292
    %v2294 = vmul.f32 %v2290, %v241
    %v2295 = vmul.f32 %v2293, %v241
    %v2296 = vadd.f32 %v2294, 1e-05
    %v2297 = vadd.f32 %v2295, 1e-05
    %v2298 = vrsqrt.pop %v2296
    %v2299 = vrsqrt.pop %v2297
    %v2300 = vmul.f32 %v2284, %v2298
    %v2301 = vmul.f32 %v2285, %v2299
    %v2302 = vlaneseq
    %v2303 = vshrl.u32 %v2302, 7
    %v2304 = vsub.s32 2, %v2303
    %v2305 = vrot.slane %v148, %v2304
    %v2306 = vmul.f32 %v2300, %v2305
    %v2307 = vmul.f32 %v2301, %v2305
    %v2308 = vlaneseq
    %v2309 = vshrl.u32 %v2308, 7
    %v2310 = vsub.s32 3, %v2309
    %v2311 = vrot.slane %v148, %v2310
    %v2312 = vadd.f32 %v2306, %v2311
    %v2313 = vadd.f32 %v2307, %v2311
    %v2314 = vpack.c.bf16 %v2313, %v2312
    %v2315 = vlaneseq
    %v2316 = vshrl.u32 %v2315, 7
    %v2317 = vsub.s32 4, %v2316
    %v2318 = vrot.slane %v148, %v2317
    %v2323 = vunpack.c.l.b16 %v213
    %v2324 = vunpack.c.l.b16 %v214
    %v2325 = vunpack.c.l.b16 %v215
    %v2326 = vunpack.c.l.b16 %v216
    %v2327 = vpack.c.b16 %v2324, %v2323
    %v2328 = vpack.c.b16 %v2326, %v2325
    %v2332 = vsel %vm234, %v2314, 0
    %2334 = vmatprep.subr.bf16.mxu0 0
    %2335 = vmatpush1.bf16.msra.mxu0 %v2327
    %2336 = vmatprep.subr.bf16.mxu0 0
    %2337 = vmatpush1.bf16.msra.mxu0 %v2328
    %2338 = vmatprep.subr.bf16.mxu0 0
    %2339 = vmatpush1.bf16.msra.mxu0 0
    %2340 = vmatprep.subr.bf16.mxu0 0
    %2341 = vmatpush1.bf16.msra.mxu0 0
    %2342 = vmatprep.subr.bf16.mxu0 0
    %2343 = vmatpush1.bf16.msra.mxu0 0
    %2344 = vmatprep.subr.bf16.mxu0 0
    %2345 = vmatpush1.bf16.msra.mxu0 0
    %2346 = vmatprep.subr.bf16.mxu0 0
    %2347 = vmatpush1.bf16.msra.mxu0 0
    %2348 = vmatprep.subr.bf16.mxu0 0
    %2349 = vmatpush1.bf16.msra.mxu0 0
    %2350 = vmatprep.subr.bf16.mxu0 0
    %2351 = vmatpush1.bf16.msra.mxu0 0
    %2352 = vmatprep.subr.bf16.mxu0 0
    %2353 = vmatpush1.bf16.msra.mxu0 0
    %2354 = vmatprep.subr.bf16.mxu0 0
    %2355 = vmatpush1.bf16.msra.mxu0 0
    %2356 = vmatprep.subr.bf16.mxu0 0
    %2357 = vmatpush1.bf16.msra.mxu0 0
    %2358 = vmatprep.subr.bf16.mxu0 0
    %2359 = vmatpush1.bf16.msra.mxu0 0
    %2360 = vmatprep.subr.bf16.mxu0 0
    %2361 = vmatpush1.bf16.msra.mxu0 0
    %2362 = vmatprep.subr.bf16.mxu0 0
    %2363 = vmatpush1.bf16.msra.mxu0 0
    %2364 = vmatprep.subr.bf16.mxu0 0
    %2365 = vmatpush1.bf16.msra.mxu0 0
    %2366 = vmatprep.mubr.bf16.mxu0 0
    %2367 = vmatmul.mubr.bf16.gmra.mrb[0].mxu0 %v2332
    %v2368 = vpop.f32.mrb[0].mxu0
    %v2369 = vadd.f32 %v2318, %v2368
    %v2370 = vpop.f32.mrb[0].mxu0
    %v2371 = vpop.f32.mrb[0].mxu0
    %v2372 = vadd.f32 %v2318, %v2371
    %v2373 = vpop.f32.mrb[0].mxu0
    %2374 = vdwg.mxu0
    %2375 = vst [vmem:[#allocation14] sm:$0xff] %v2369
    %2376 = vst [vmem:[#allocation14 + $0x8] sm:$0xff] %v2372
    // Predicated region
    $region78: #{tpu_custom_call.1} parent=1 // pred_check
      _
    $region79: #{tpu_custom_call.1} parent=1 // pred_check_branch
      %2378 = sbr.rel (0) target = $region81
    $region80: #{tpu_custom_call.1} parent=1 // pred_region
      %s2380 = ssub.s32 256, 256
      %2381 = vsyncadd [#allocation4], %s2380
      %s2382 = sshll.u32 [#allocation14], 4
      %s2383 = int_to_ptr.vmem [resolvable:$true] %s2382
      %2388 = dma.vmem_to_hbm [thread:$0]  %s2383, 256, %s12, [#allocation4], 128, 128, 8
    $region81: #{tpu_custom_call.1} parent=1 // pred_fallthru
      _
    // Predicated region
    $region82: #{tpu_custom_call.1} parent=1 // pred_check
      _
    $region83: #{tpu_custom_call.1} parent=1 // pred_check_branch
      %2390 = sbr.rel (0) target = $region85
    $region84: #{tpu_custom_call.1} parent=1 // pred_region
      %2391 = dma.done [#allocation4], 256
    $region85: #{tpu_custom_call.1} parent=1 // pred_fallthru
      _
    %2392 = vsyncpa [#allocation3], 1
    %2393 = vsyncpa [#allocation6], 1
    %2394 = vsyncpa [#allocation9], 1
    %2395 = vsyncpa [#allocation12], 1
    %2396 = vsyncpa [#allocation4], 1

</llo_original>
